<compile_context>
chip_gen: v5e
topology: v5e:2x2
jax: 0.10.0
libtpu: 0.0.40
codegen_flags: <defaults>
</compile_context>

<pallas_src>
import math

import jax
import jax.numpy as jnp
from jax.experimental import pallas as pl
from jax.experimental.pallas import tpu as pltpu


# ----------------------------------------------------------------------------
# Weight preparation: fold the kx taps (and the width-direction zero pad) into
# three banded (W*Cin, W*Cout) matrices, one per ky tap.
#   out_row(h) = row(h-1) @ M0 + row(h) @ M1 + row(h+1) @ M2
# where row(h) is the NHWC-flattened (W*Cin,) vector of input row h.
# ----------------------------------------------------------------------------
def _banded_weights(w_pt, W):
    """PyTorch (Cout, Cin, 3, 3) conv weight -> (3, W*Cin, W*Cout) f32."""
    Cout, Cin, KH, KW = w_pt.shape
    assert KH == 3 and KW == 3, "BasicConv2d uses a 3x3 kernel"
    w_hwio = jnp.transpose(w_pt, (2, 3, 1, 0)).astype(jnp.float32)  # [ky,kx,ci,co]
    mats = []
    for ky in range(3):
        m = jnp.zeros((W, Cin, W, Cout), jnp.float32)
        for kx in range(3):
            # S[wi, wo] = 1 iff wi == wo + (kx - 1).  Clipping at the matrix
            # edge implements the width-direction zero padding.
            s = jnp.eye(W, k=-(kx - 1), dtype=jnp.float32)
            m = m + s[:, None, :, None] * w_hwio[ky, kx][None, :, None, :]
        mats.append(m.reshape(W * Cin, W * Cout))
    return jnp.stack(mats, axis=0)


# ----------------------------------------------------------------------------
# Fused kernel: (conv3x3 + LeakyReLU) x 2 (+ optional MaxPool3d over (c,h,w)).
# Operates on (Bt, H, W*C) blocks; processes Fc frames per inner chunk.
# ----------------------------------------------------------------------------
def _make_fused_kernel(H, W, C, Fc, pool_k):
    WC = W * C

    def kernel(x_ref, w_ref, o_ref):
        io_dtype = x_ref.dtype
        Bt = x_ref.shape[0]
        nchunks = Bt // Fc
        # f32 validation path: exact multi-pass MXU matmuls so it compares
        # tightly against the f32 reference; bf16 path: native single-pass MXU.
        prec = jax.lax.Precision.HIGHEST if io_dtype == jnp.float32 else None

        # Hoisted out of the chunk loop: banded weight tiles (reused by every
        # chunk and both conv passes) and the zero boundary row (JAX does not
        # CSE broadcast_in_dim).
        w0 = w_ref[0]
        w1 = w_ref[1]
        w2 = w_ref[2]
        zrow = jnp.zeros((Fc, 1, WC), dtype=io_dtype)

        def conv3x3_lrelu(xc):
            # xc: (Fc, H, WC) io dtype -> (Fc, H, WC) f32.
            # 3x3 conv (pad=1, no bias) as three lane-dense matmuls; ky handled
            # by zero-padded row shifts, kx inside the banded weight matrices.
            x_m1 = jnp.concatenate([zrow, xc[:, :H - 1, :]], axis=1)  # row h-1
            x_p1 = jnp.concatenate([xc[:, 1:, :], zrow], axis=1)      # row h+1
            acc = jnp.dot(x_m1.reshape(Fc * H, WC), w0,
                          preferred_element_type=jnp.float32, precision=prec)
            acc = acc + jnp.dot(xc.reshape(Fc * H, WC), w1,
                                preferred_element_type=jnp.float32,
                                precision=prec)
            acc = acc + jnp.dot(x_p1.reshape(Fc * H, WC), w2,
                                preferred_element_type=jnp.float32,
                                precision=prec)
            # LeakyReLU(0.01) on the f32 accumulator.
            acc = jnp.where(acc > 0, acc, 0.01 * acc)
            return acc.reshape(Fc, H, WC)

        def process_chunk(base):
            xc = x_ref[pl.ds(base, Fc)]                    # (Fc, H, WC)
            # Pass 1 of forward_block; intermediate re-quantized to the I/O
            # dtype (the PyTorch module keeps f32 here; 5e-2 tol covers it).
            y1 = conv3x3_lrelu(xc).astype(io_dtype)
            y2 = conv3x3_lrelu(y1)                         # pass 2, shared weights (f32)
            if pool_k is None:
                o_ref[pl.ds(base, Fc)] = y2.astype(o_ref.dtype)
            else:
                k = pool_k
                Ho, Wo, Co = H // k, W // k, C // k
                # MaxPool3d over (c, h, w), kernel = stride = k, fused in the
                # epilogue on the VMEM-resident f32 result.
                y = y2.reshape(Fc, Ho, k, WC).max(axis=2)          # pool height
                y = y.reshape(Fc, Ho, Wo, k, Co, k).max(axis=(3, 5))  # pool w, c
                # Lane-dense store: one flattened (Ho*Wo*Co)-wide row per frame.
                o_ref[pl.ds(base, Fc)] = y.reshape(
                    Fc, Ho * Wo * Co).astype(o_ref.dtype)

        if nchunks == 1:
            process_chunk(0)
        else:
            unroll = 1 if Fc * H >= 128 else min(nchunks, 4)

            def body(ci, carry):
                process_chunk(pl.multiple_of(ci * Fc, Fc))
                return carry

            jax.lax.fori_loop(0, nchunks, body, 0, unroll=unroll)

    return kernel


def _choose_tiles(B, frame_bytes, H, target_bytes=4 << 20):
    """Pick (Bt frames per grid block, Fc frames per inner chunk, padded B).

    Fc is sized so the matmul M dimension Fc*H targets 256 rows; Bt is a
    multiple of Fc (and of 8, so a tiled 2-D pooled output block satisfies the
    (8, 128) constraint) sized toward the VMEM budget; B is padded up to a
    multiple of Bt instead of shrinking Bt for awkward batch sizes.
    """
    fc = max(1, min(B, -(-256 // H)))
    step = fc * 8 // math.gcd(fc, 8)                  # lcm(fc, 8)
    per_block = max(1, target_bytes // max(frame_bytes, 1))
    bt = max(step, (per_block // step) * step)
    min_cover = -(-B // fc) * fc
    if bt >= min_cover:
        bt = min_cover                                # single grid step
    b_pad = -(-B // bt) * bt
    return bt, fc, b_pad


# ----------------------------------------------------------------------------
# SetBlock3d forward
# ----------------------------------------------------------------------------
def set_block_3d(x, w_pt, *, pooling=False, pool_kernel=2,
                 compute_dtype=jnp.bfloat16):
    """x: (n, s, c, h, w) float32 (PyTorch NCHW-per-frame convention).
    w_pt: PyTorch Conv2d weight (Cout, Cin, 3, 3) with Cout == Cin."""
    n, s, C, H, W = x.shape
    Cout, Cin = w_pt.shape[0], w_pt.shape[1]
    assert Cin == C and Cout == C, "forward_block is applied twice -> Cin == Cout == C"
    B = n * s
    WC = W * C

    # Module-boundary layout conversion: NCHW frames -> lane-dense (B, H, W*C).
    xb = x.reshape(B, C, H, W).transpose(0, 2, 3, 1).reshape(B, H, WC)
    xb = xb.astype(compute_dtype)
    wb = _banded_weights(w_pt, W).astype(compute_dtype)   # (3, W*C, W*C)

    if pooling:
        k = pool_kernel
        assert C % k == 0 and H % k == 0 and W % k == 0
        Ho, Wo, Co = H // k, W // k, C // k
        out_tail = (Ho * Wo * Co,)                    # lane-dense pooled frame
    else:
        k = None
        Ho, Wo, Co = H, W, C
        out_tail = (H, WC)

    frame_bytes = H * WC * jnp.dtype(compute_dtype).itemsize
    Bt, Fc, B_pad = _choose_tiles(B, frame_bytes, H)
    if B_pad != B:
        pad = jnp.zeros((B_pad - B, H, WC), xb.dtype)
        xb = jnp.concatenate([xb, pad], axis=0)

    kernel = _make_fused_kernel(H=H, W=W, C=C, Fc=Fc, pool_k=k)

    if pooling:
        out_spec = pl.BlockSpec((Bt,) + out_tail, lambda i: (i, 0))
    else:
        out_spec = pl.BlockSpec((Bt,) + out_tail, lambda i: (i, 0, 0))

    y = pl.pallas_call(
        kernel,
        out_shape=jax.ShapeDtypeStruct((B_pad,) + out_tail, compute_dtype),
        grid=(B_pad // Bt,),
        in_specs=[
            pl.BlockSpec((Bt, H, WC), lambda i: (i, 0, 0)),
            pl.BlockSpec((3, WC, WC), lambda i: (0, 0, 0)),
        ],
        out_specs=out_spec,
        compiler_params=pltpu.CompilerParams(
            dimension_semantics=("parallel",),
            vmem_limit_bytes=32 << 20),
    )(xb, wb)

    # Back to module layout.
    y = y[:B]
    if pooling:
        y = y.reshape(B, Ho, Wo, Co).transpose(0, 3, 1, 2)
    else:
        y = y.reshape(B, H, W, C).transpose(0, 3, 1, 2)
    return y.reshape(n, s, Co, Ho, Wo).astype(x.dtype)


# ----------------------------------------------------------------------------
# Pure-JAX reference (mirrors the PyTorch module) for validation
# ----------------------------------------------------------------------------
def set_block_3d_ref(x, w_pt, pooling=False, pool_kernel=2):
    n, s, c, h, w = x.shape
    xb = x.reshape(n * s, c, h, w)

    def blk(z):
        z = jax.lax.conv_general_dilated(
            z, w_pt, window_strides=(1, 1), padding="SAME",
            dimension_numbers=("NCHW", "OIHW", "NCHW"),
            precision=jax.lax.Precision.HIGHEST)
        return jnp.where(z > 0, z, 0.01 * z)

    y = blk(blk(xb))
    if pooling:
        k = pool_kernel
        y = jax.lax.reduce_window(
            y, -jnp.inf, jax.lax.max,
            window_dimensions=(1, k, k, k), window_strides=(1, k, k, k),
            padding="VALID")
    _, c2, h2, w2 = y.shape
    return y.reshape(n, s, c2, h2, w2)


if __name__ == "__main__":
    key = jax.random.PRNGKey(0)
    kx, kw = jax.random.split(key)

    n, s, c, h, w = 2, 4, 8, 16, 16
    x = jax.random.normal(kx, (n, s, c, h, w), dtype=jnp.float32)
    # Conv2d(c, c, 3, padding=1, bias=False) weight, PyTorch (O, I, Kh, Kw) layout.
    w_pt = 0.1 * jax.random.normal(kw, (c, c, 3, 3), dtype=jnp.float32)

    # bf16-rounded copies so the bf16-path reference isolates the kernel's
    # arithmetic (bf16 I/O + f32 accumulation) from input-rounding differences.
    x_bf = x.astype(jnp.bfloat16).astype(jnp.float32)
    w_bf = w_pt.astype(jnp.bfloat16).astype(jnp.float32)

    # 1) f32 I/O path, pooling=False.
    out = jax.block_until_ready(set_block_3d(x, w_pt, compute_dtype=jnp.float32))
    ref = set_block_3d_ref(x, w_pt)
    assert out.shape == (n, s, c, h, w), out.shape
    assert jnp.allclose(out, ref, rtol=2e-2, atol=2e-2), \
        float(jnp.max(jnp.abs(out - ref)))

    # 2) bf16 I/O (default production path), pooling=False.
    out = jax.block_until_ready(set_block_3d(x, w_pt))
    ref = set_block_3d_ref(x_bf, w_bf)
    assert out.shape == (n, s, c, h, w), out.shape
    assert jnp.allclose(out, ref, rtol=5e-2, atol=5e-2), \
        float(jnp.max(jnp.abs(out - ref)))

    # 3) bf16 I/O, pooling=True (MaxPool3d(kernel_size=2) over (c, h, w)), fused.
    out_p = jax.block_until_ready(set_block_3d(x, w_pt, pooling=True, pool_kernel=2))
    ref_p = set_block_3d_ref(x_bf, w_bf, pooling=True, pool_kernel=2)
    assert out_p.shape == (n, s, c // 2, h // 2, w // 2), out_p.shape
    assert jnp.allclose(out_p, ref_p, rtol=5e-2, atol=5e-2), \
        float(jnp.max(jnp.abs(out_p - ref_p)))

    print("KERNEL_OK")
</pallas_src>

<mosaic_0001>
module attributes {stable_mosaic.version = 11 : i64} {
  func.func @kernel(%arg0: i32, %arg1: memref<8x16x128xf32, #tpu.memory_space<vmem>>, %arg2: memref<3x128x128xf32, #tpu.memory_space<vmem>>, %arg3: memref<8x16x128xf32, #tpu.memory_space<vmem>>) attributes {dimension_semantics = [#tpu.dimension_semantics<parallel>], iteration_bounds = array<i64: 1>, scalar_prefetch = 0 : i64, scratch_operands = 0 : i64, tpu.core_type = #tpu.core_type<tc>, window_params = [{transform_indices = @transform_0, window_bounds = array<i64: 8, 16, 128>}, {pipeline_mode = #tpu.pipeline_mode<synchronous>, transform_indices = @transform_1, window_bounds = array<i64: 3, 128, 128>}, {transform_indices = @transform_2, window_bounds = array<i64: 8, 16, 128>}]} {
    %c0 = arith.constant 0 : index
    %c0_0 = arith.constant 0 : index
    %c0_1 = arith.constant 0 : index
    %0 = vector.load %arg2[%c0, %c0_0, %c0_1] : memref<3x128x128xf32, #tpu.memory_space<vmem>>, vector<1x128x128xf32>
    %1 = vector.shape_cast %0 : vector<1x128x128xf32> to vector<128x128xf32>
    %c1 = arith.constant 1 : index
    %c0_2 = arith.constant 0 : index
    %c0_3 = arith.constant 0 : index
    %2 = vector.load %arg2[%c1, %c0_2, %c0_3] : memref<3x128x128xf32, #tpu.memory_space<vmem>>, vector<1x128x128xf32>
    %3 = vector.shape_cast %2 : vector<1x128x128xf32> to vector<128x128xf32>
    %c2 = arith.constant 2 : index
    %c0_4 = arith.constant 0 : index
    %c0_5 = arith.constant 0 : index
    %4 = vector.load %arg2[%c2, %c0_4, %c0_5] : memref<3x128x128xf32, #tpu.memory_space<vmem>>, vector<1x128x128xf32>
    %5 = vector.shape_cast %4 : vector<1x128x128xf32> to vector<128x128xf32>
    %cst = arith.constant 0.000000e+00 : f32
    %6 = vector.broadcast %cst : f32 to vector<8x1x128xf32>
    %c0_6 = arith.constant 0 : index
    %c0_7 = arith.constant 0 : index
    %c0_8 = arith.constant 0 : index
    %7 = vector.load %arg1[%c0_6, %c0_7, %c0_8] : memref<8x16x128xf32, #tpu.memory_space<vmem>>, vector<8x16x128xf32>
    %8 = vector.extract_strided_slice %7 {offsets = [0, 0, 0], sizes = [8, 15, 128], strides = [1, 1, 1]} : vector<8x16x128xf32> to vector<8x15x128xf32>
    %9 = tpu.concatenate %6, %8 in 1 : vector<8x1x128xf32>, vector<8x15x128xf32> -> vector<8x16x128xf32>
    %10 = vector.extract_strided_slice %7 {offsets = [0, 1, 0], sizes = [8, 15, 128], strides = [1, 1, 1]} : vector<8x16x128xf32> to vector<8x15x128xf32>
    %11 = tpu.concatenate %10, %6 in 1 : vector<8x15x128xf32>, vector<8x1x128xf32> -> vector<8x16x128xf32>
    %12 = vector.shape_cast %9 : vector<8x16x128xf32> to vector<128x128xf32>
    %cst_9 = arith.constant dense<0.000000e+00> : vector<128x128xf32>
    %13 = tpu.matmul %12, %1, %cst_9 {dimension_numbers = #tpu.dot_dimension_numbers<[1], [0], [0], [1], [0, 0, 1, 1], [], []>, precision = #tpu.contract_precision<fp32>} : vector<128x128xf32>, vector<128x128xf32>, vector<128x128xf32> -> vector<128x128xf32>
    %14 = vector.shape_cast %7 : vector<8x16x128xf32> to vector<128x128xf32>
    %cst_10 = arith.constant dense<0.000000e+00> : vector<128x128xf32>
    %15 = tpu.matmul %14, %3, %cst_10 {dimension_numbers = #tpu.dot_dimension_numbers<[1], [0], [0], [1], [0, 0, 1, 1], [], []>, precision = #tpu.contract_precision<fp32>} : vector<128x128xf32>, vector<128x128xf32>, vector<128x128xf32> -> vector<128x128xf32>
    %16 = arith.addf %13, %15 : vector<128x128xf32>
    %17 = vector.shape_cast %11 : vector<8x16x128xf32> to vector<128x128xf32>
    %cst_11 = arith.constant dense<0.000000e+00> : vector<128x128xf32>
    %18 = tpu.matmul %17, %5, %cst_11 {dimension_numbers = #tpu.dot_dimension_numbers<[1], [0], [0], [1], [0, 0, 1, 1], [], []>, precision = #tpu.contract_precision<fp32>} : vector<128x128xf32>, vector<128x128xf32>, vector<128x128xf32> -> vector<128x128xf32>
    %19 = arith.addf %16, %18 : vector<128x128xf32>
    %cst_12 = arith.constant 0.000000e+00 : f32
    %20 = vector.broadcast %cst_12 : f32 to vector<128x128xf32>
    %21 = arith.cmpf ogt, %19, %20 : vector<128x128xf32>
    %cst_13 = arith.constant 0.00999999977 : f32
    %22 = vector.broadcast %cst_13 : f32 to vector<128x128xf32>
    %23 = arith.mulf %22, %19 : vector<128x128xf32>
    %24 = arith.select %21, %19, %23 : vector<128x128xi1>, vector<128x128xf32>
    %25 = vector.shape_cast %24 : vector<128x128xf32> to vector<8x16x128xf32>
    %26 = vector.extract_strided_slice %25 {offsets = [0, 0, 0], sizes = [8, 15, 128], strides = [1, 1, 1]} : vector<8x16x128xf32> to vector<8x15x128xf32>
    %27 = tpu.concatenate %6, %26 in 1 : vector<8x1x128xf32>, vector<8x15x128xf32> -> vector<8x16x128xf32>
    %28 = vector.extract_strided_slice %25 {offsets = [0, 1, 0], sizes = [8, 15, 128], strides = [1, 1, 1]} : vector<8x16x128xf32> to vector<8x15x128xf32>
    %29 = tpu.concatenate %28, %6 in 1 : vector<8x15x128xf32>, vector<8x1x128xf32> -> vector<8x16x128xf32>
    %30 = vector.shape_cast %27 : vector<8x16x128xf32> to vector<128x128xf32>
    %cst_14 = arith.constant dense<0.000000e+00> : vector<128x128xf32>
    %31 = tpu.matmul %30, %1, %cst_14 {dimension_numbers = #tpu.dot_dimension_numbers<[1], [0], [0], [1], [0, 0, 1, 1], [], []>, precision = #tpu.contract_precision<fp32>} : vector<128x128xf32>, vector<128x128xf32>, vector<128x128xf32> -> vector<128x128xf32>
    %32 = vector.shape_cast %25 : vector<8x16x128xf32> to vector<128x128xf32>
    %cst_15 = arith.constant dense<0.000000e+00> : vector<128x128xf32>
    %33 = tpu.matmul %32, %3, %cst_15 {dimension_numbers = #tpu.dot_dimension_numbers<[1], [0], [0], [1], [0, 0, 1, 1], [], []>, precision = #tpu.contract_precision<fp32>} : vector<128x128xf32>, vector<128x128xf32>, vector<128x128xf32> -> vector<128x128xf32>
    %34 = arith.addf %31, %33 : vector<128x128xf32>
    %35 = vector.shape_cast %29 : vector<8x16x128xf32> to vector<128x128xf32>
    %cst_16 = arith.constant dense<0.000000e+00> : vector<128x128xf32>
    %36 = tpu.matmul %35, %5, %cst_16 {dimension_numbers = #tpu.dot_dimension_numbers<[1], [0], [0], [1], [0, 0, 1, 1], [], []>, precision = #tpu.contract_precision<fp32>} : vector<128x128xf32>, vector<128x128xf32>, vector<128x128xf32> -> vector<128x128xf32>
    %37 = arith.addf %34, %36 : vector<128x128xf32>
    %cst_17 = arith.constant 0.000000e+00 : f32
    %38 = vector.broadcast %cst_17 : f32 to vector<128x128xf32>
    %39 = arith.cmpf ogt, %37, %38 : vector<128x128xf32>
    %cst_18 = arith.constant 0.00999999977 : f32
    %40 = vector.broadcast %cst_18 : f32 to vector<128x128xf32>
    %41 = arith.mulf %40, %37 : vector<128x128xf32>
    %42 = arith.select %39, %37, %41 : vector<128x128xi1>, vector<128x128xf32>
    %43 = vector.shape_cast %42 : vector<128x128xf32> to vector<8x16x128xf32>
    %c0_19 = arith.constant 0 : index
    %c0_20 = arith.constant 0 : index
    %c0_21 = arith.constant 0 : index
    %44 = vector.load %arg3[%c0_19, %c0_20, %c0_21] : memref<8x16x128xf32, #tpu.memory_space<vmem>>, vector<8x16x128xf32>
    tpu.vector_store %arg3[%c0_19, %c0_20, %c0_21], %43 {strides = array<i32>} : memref<8x16x128xf32, #tpu.memory_space<vmem>>, vector<8x16x128xf32>,
    return
  }
  func.func @transform_0(%arg0: i32) -> (i32, i32, i32) {
    %c0_i32 = arith.constant 0 : i32
    %c0_i32_0 = arith.constant 0 : i32
    %c0_i32_1 = arith.constant 0 : i32
    return %arg0, %c0_i32, %c0_i32_0 : i32, i32, i32
  }
  func.func @transform_1(%arg0: i32) -> (i32, i32, i32) {
    %c0_i32 = arith.constant 0 : i32
    %c0_i32_0 = arith.constant 0 : i32
    %c0_i32_1 = arith.constant 0 : i32
    %c0_i32_2 = arith.constant 0 : i32
    return %c0_i32, %c0_i32_0, %c0_i32_1 : i32, i32, i32
  }
  func.func @transform_2(%arg0: i32) -> (i32, i32, i32) {
    %c0_i32 = arith.constant 0 : i32
    %c0_i32_0 = arith.constant 0 : i32
    %c0_i32_1 = arith.constant 0 : i32
    return %arg0, %c0_i32, %c0_i32_0 : i32, i32, i32
  }
}

</mosaic_0001>

<llo_original>
// kernel: tpu_custom_call.1
$region0: #{tpu_custom_call.1}
  #allocation0 [shape = 'u32[]', space=smem, size = 0x4, offset = 0x4, fixed_abs, tag = 'smem constant byte address 0x4 - core index']
  #allocation1 [shape = 'u32[72,128]{1,0:T(1,128)}', space=vmem, size = 0x9000, scoped, tag = 'internal scratch']
  %s0 = inlined_call_operand.hbm [shape: f32[8,16,128], index: 0, kind: input, shape index: {}]
  %s1 = inlined_call_operand.hbm [shape: f32[3,128,128], index: 1, kind: input, shape index: {}]
  %s2 = inlined_call_operand.hbm [shape: f32[8,16,128], index: 2, kind: output, shape index: {}]
  %s3 = sld [smem:[#allocation0]]
  $region26: #{tpu_custom_call.1} parent=0
    _
  %s5 = ssub.s32 1, %s3
  %s6 = scalar_select 0, %s5, %s3
  $region1: #{tpu_custom_call.1} parent=0
    #allocation2 [shape = 'u8[65536]{0}', space=vmem, size = 0x10000, scoped, tag = 'input window, operand 0, single buffered']
    #allocation3 [shape = 's32[1]{0}', space=sflag, size = 0x4, scoped, tag = 'scoped memory for tpu_custom_call.1']
    #allocation4 [shape = 's32[1]{0}', space=sflag, size = 0x4, scoped, tag = 'scoped memory for tpu_custom_call.1']
    #allocation5 [shape = 'u8[196608]{0}', space=vmem, size = 0x30000, scoped, tag = 'input window, operand 1, single buffered']
    #allocation6 [shape = 's32[1]{0}', space=sflag, size = 0x4, scoped, tag = 'scoped memory for tpu_custom_call.1']
    #allocation7 [shape = 'u8[65536]{0}', space=vmem, size = 0x10000, scoped, tag = 'output window, operand 0, single buffered']
    %7 = vsyncpa [#allocation3], 0
    %8 = vsyncpa [#allocation6], 0
    %9 = vsyncpa [#allocation4], 0
    // Predicated region
    $region2: #{tpu_custom_call.1} parent=1 // pred_check
      _
    $region3: #{tpu_custom_call.1} parent=1 // pred_check_branch
      %11 = sbr.rel (0) target = $region5
    $region4: #{tpu_custom_call.1} parent=1 // pred_region
      %13 = vsyncadd [#allocation3], 0
      %s14 = sshll.u32 %s0, 4
      %s15 = int_to_ptr.hbm [resolvable:$true] %s14
      %s16 = sshll.u32 [#allocation2], 4
      %s17 = int_to_ptr.vmem [resolvable:$true] %s16
      %22 = dma.hbm_to_vmem [thread:$0]  %s15, 2048, %s17, [#allocation3], 128, 128, 8
    $region5: #{tpu_custom_call.1} parent=1 // pred_fallthru
      _
    // Predicated region
    $region6: #{tpu_custom_call.1} parent=1 // pred_check
      _
    $region7: #{tpu_custom_call.1} parent=1 // pred_check_branch
      %24 = sbr.rel (0) target = $region9
    $region8: #{tpu_custom_call.1} parent=1 // pred_region
      %26 = vsyncadd [#allocation6], 0
      %s27 = sshll.u32 %s1, 4
      %s28 = int_to_ptr.hbm [resolvable:$true] %s27
      %s29 = sshll.u32 [#allocation5], 4
      %s30 = int_to_ptr.vmem [resolvable:$true] %s29
      %35 = dma.hbm_to_vmem [thread:$0]  %s28, 6144, %s30, [#allocation6], 128, 128, 8
    $region9: #{tpu_custom_call.1} parent=1 // pred_fallthru
      _
    // Predicated region
    $region10: #{tpu_custom_call.1} parent=1 // pred_check
      _
    $region11: #{tpu_custom_call.1} parent=1 // pred_check_branch
      %37 = sbr.rel (0) target = $region13
    $region12: #{tpu_custom_call.1} parent=1 // pred_region
      %39 = dma.done [#allocation3], 2048
    $region13: #{tpu_custom_call.1} parent=1 // pred_fallthru
      _
    // Predicated region
    $region14: #{tpu_custom_call.1} parent=1 // pred_check
      _
    $region15: #{tpu_custom_call.1} parent=1 // pred_check_branch
      %41 = sbr.rel (0) target = $region17
    $region16: #{tpu_custom_call.1} parent=1 // pred_region
      %43 = dma.done [#allocation6], 6144
    $region17: #{tpu_custom_call.1} parent=1 // pred_fallthru
      _
    %v44 = vld [vmem:[#allocation5] sm:$0xff]
    %v45 = vld [vmem:[#allocation5 + $0x8] sm:$0xff]
    %v46 = vld [vmem:[#allocation5 + $0x10] sm:$0xff]
    %v47 = vld [vmem:[#allocation5 + $0x18] sm:$0xff]
    %v48 = vld [vmem:[#allocation5 + $0x20] sm:$0xff]
    %v49 = vld [vmem:[#allocation5 + $0x28] sm:$0xff]
    %v50 = vld [vmem:[#allocation5 + $0x30] sm:$0xff]
    %v51 = vld [vmem:[#allocation5 + $0x38] sm:$0xff]
    %v52 = vld [vmem:[#allocation5 + $0x40] sm:$0xff]
    %v53 = vld [vmem:[#allocation5 + $0x48] sm:$0xff]
    %v54 = vld [vmem:[#allocation5 + $0x50] sm:$0xff]
    %v55 = vld [vmem:[#allocation5 + $0x58] sm:$0xff]
    %v56 = vld [vmem:[#allocation5 + $0x60] sm:$0xff]
    %v57 = vld [vmem:[#allocation5 + $0x68] sm:$0xff]
    %v58 = vld [vmem:[#allocation5 + $0x70] sm:$0xff]
    %v59 = vld [vmem:[#allocation5 + $0x78] sm:$0xff]
    %s60 = scalar_lea.vmem [#allocation5], 128
    %v61 = vld [vmem:[%s60] sm:$0xff]
    %v62 = vld [vmem:[%s60 + $0x8] sm:$0xff]
    %v63 = vld [vmem:[%s60 + $0x10] sm:$0xff]
    %v64 = vld [vmem:[%s60 + $0x18] sm:$0xff]
    %v65 = vld [vmem:[%s60 + $0x20] sm:$0xff]
    %v66 = vld [vmem:[%s60 + $0x28] sm:$0xff]
    %v67 = vld [vmem:[%s60 + $0x30] sm:$0xff]
    %v68 = vld [vmem:[%s60 + $0x38] sm:$0xff]
    %v69 = vld [vmem:[%s60 + $0x40] sm:$0xff]
    %v70 = vld [vmem:[%s60 + $0x48] sm:$0xff]
    %v71 = vld [vmem:[%s60 + $0x50] sm:$0xff]
    %v72 = vld [vmem:[%s60 + $0x58] sm:$0xff]
    %v73 = vld [vmem:[%s60 + $0x60] sm:$0xff]
    %v74 = vld [vmem:[%s60 + $0x68] sm:$0xff]
    %v75 = vld [vmem:[%s60 + $0x70] sm:$0xff]
    %v76 = vld [vmem:[%s60 + $0x78] sm:$0xff]
    %s77 = scalar_lea.vmem [#allocation5], 256
    %v78 = vld [vmem:[%s77] sm:$0xff]
    %v79 = vld [vmem:[%s77 + $0x8] sm:$0xff]
    %v80 = vld [vmem:[%s77 + $0x10] sm:$0xff]
    %v81 = vld [vmem:[%s77 + $0x18] sm:$0xff]
    %v82 = vld [vmem:[%s77 + $0x20] sm:$0xff]
    %v83 = vld [vmem:[%s77 + $0x28] sm:$0xff]
    %v84 = vld [vmem:[%s77 + $0x30] sm:$0xff]
    %v85 = vld [vmem:[%s77 + $0x38] sm:$0xff]
    %v86 = vld [vmem:[%s77 + $0x40] sm:$0xff]
    %v87 = vld [vmem:[%s77 + $0x48] sm:$0xff]
    %v88 = vld [vmem:[%s77 + $0x50] sm:$0xff]
    %v89 = vld [vmem:[%s77 + $0x58] sm:$0xff]
    %v90 = vld [vmem:[%s77 + $0x60] sm:$0xff]
    %v91 = vld [vmem:[%s77 + $0x68] sm:$0xff]
    %v92 = vld [vmem:[%s77 + $0x70] sm:$0xff]
    %v93 = vld [vmem:[%s77 + $0x78] sm:$0xff]
    %v94 = vld [vmem:[#allocation2] sm:$0xff]
    %v95 = vld [vmem:[#allocation2 + $0x8] sm:$0xff]
    %v96 = vld [vmem:[#allocation2 + $0x10] sm:$0xff]
    %v97 = vld [vmem:[#allocation2 + $0x18] sm:$0xff]
    %v98 = vld [vmem:[#allocation2 + $0x20] sm:$0xff]
    %v99 = vld [vmem:[#allocation2 + $0x28] sm:$0xff]
    %v100 = vld [vmem:[#allocation2 + $0x30] sm:$0xff]
    %v101 = vld [vmem:[#allocation2 + $0x38] sm:$0xff]
    %v102 = vld [vmem:[#allocation2 + $0x40] sm:$0xff]
    %v103 = vld [vmem:[#allocation2 + $0x48] sm:$0xff]
    %v104 = vld [vmem:[#allocation2 + $0x50] sm:$0xff]
    %v105 = vld [vmem:[#allocation2 + $0x58] sm:$0xff]
    %v106 = vld [vmem:[#allocation2 + $0x60] sm:$0xff]
    %v107 = vld [vmem:[#allocation2 + $0x68] sm:$0xff]
    %v108 = vld [vmem:[#allocation2 + $0x70] sm:$0xff]
    %v109 = vld [vmem:[#allocation2 + $0x78] sm:$0xff]
    %vm126 = vcmask 1040384
    %v127 = vrot.slane %v94, 7
    %v128 = vrot.slane %v95, 7
    %v129 = vsel %vm126, %v127, %v128
    %v130 = vrot.slane %v96, 7
    %v131 = vrot.slane %v97, 7
    %v132 = vsel %vm126, %v130, %v131
    %v133 = vrot.slane %v98, 7
    %v134 = vrot.slane %v99, 7
    %v135 = vsel %vm126, %v133, %v134
    %v136 = vrot.slane %v100, 7
    %v137 = vrot.slane %v101, 7
    %v138 = vsel %vm126, %v136, %v137
    %v139 = vrot.slane %v102, 7
    %v140 = vrot.slane %v103, 7
    %v141 = vsel %vm126, %v139, %v140
    %v142 = vrot.slane %v104, 7
    %v143 = vrot.slane %v105, 7
    %v144 = vsel %vm126, %v142, %v143
    %v145 = vrot.slane %v106, 7
    %v146 = vrot.slane %v107, 7
    %v147 = vsel %vm126, %v145, %v146
    %v148 = vrot.slane %v108, 7
    %v149 = vrot.slane %v109, 7
    %v150 = vsel %vm126, %v148, %v149
    %v167 = vsel %vm126, 0.0, %v127
    %v168 = vsel %vm126, 0.0, %v130
    %v169 = vsel %vm126, 0.0, %v133
    %v170 = vsel %vm126, 0.0, %v136
    %v171 = vsel %vm126, 0.0, %v139
    %v172 = vsel %vm126, 0.0, %v142
    %v173 = vsel %vm126, 0.0, %v145
    %v174 = vsel %vm126, 0.0, %v148
    %vm175 = vcmask 1046528
    %v176 = vrot.slane %v94, 1
    %v177 = vrot.slane %v95, 1
    %v178 = vsel %vm175, %v176, %v177
    %v179 = vrot.slane %v96, 1
    %v180 = vrot.slane %v97, 1
    %v181 = vsel %vm175, %v179, %v180
    %v182 = vrot.slane %v98, 1
    %v183 = vrot.slane %v99, 1
    %v184 = vsel %vm175, %v182, %v183
    %v185 = vrot.slane %v100, 1
    %v186 = vrot.slane %v101, 1
    %v187 = vsel %vm175, %v185, %v186
    %v188 = vrot.slane %v102, 1
    %v189 = vrot.slane %v103, 1
    %v190 = vsel %vm175, %v188, %v189
    %v191 = vrot.slane %v104, 1
    %v192 = vrot.slane %v105, 1
    %v193 = vsel %vm175, %v191, %v192
    %v194 = vrot.slane %v106, 1
    %v195 = vrot.slane %v107, 1
    %v196 = vsel %vm175, %v194, %v195
    %v197 = vrot.slane %v108, 1
    %v198 = vrot.slane %v109, 1
    %v199 = vsel %vm175, %v197, %v198
    %v216 = vsel %vm175, %v177, 0.0
    %v217 = vsel %vm175, %v180, 0.0
    %v218 = vsel %vm175, %v183, 0.0
    %v219 = vsel %vm175, %v186, 0.0
    %v220 = vsel %vm175, %v189, 0.0
    %v221 = vsel %vm175, %v192, 0.0
    %v222 = vsel %vm175, %v195, 0.0
    %v223 = vsel %vm175, %v198, 0.0
    %v224 = vand.u32 %v76, 4294901760
    %225 = vmatpush.msra.mxu0 %v224
    %v226 = vand.u32 %v75, 4294901760
    %227 = vmatpush.msra.mxu0 %v226
    %v228 = vand.u32 %v74, 4294901760
    %229 = vmatpush.msra.mxu0 %v228
    %v230 = vand.u32 %v73, 4294901760
    %231 = vmatpush.msra.mxu0 %v230
    %v232 = vand.u32 %v72, 4294901760
    %233 = vmatpush.msra.mxu0 %v232
    %v234 = vand.u32 %v71, 4294901760
    %235 = vmatpush.msra.mxu0 %v234
    %v236 = vand.u32 %v70, 4294901760
    %237 = vmatpush.msra.mxu0 %v236
    %v238 = vand.u32 %v69, 4294901760
    %239 = vmatpush.msra.mxu0 %v238
    %v240 = vand.u32 %v68, 4294901760
    %241 = vmatpush.msra.mxu0 %v240
    %v242 = vand.u32 %v67, 4294901760
    %243 = vmatpush.msra.mxu0 %v242
    %v244 = vand.u32 %v66, 4294901760
    %245 = vmatpush.msra.mxu0 %v244
    %v246 = vand.u32 %v65, 4294901760
    %247 = vmatpush.msra.mxu0 %v246
    %v248 = vand.u32 %v64, 4294901760
    %249 = vmatpush.msra.mxu0 %v248
    %v250 = vand.u32 %v63, 4294901760
    %251 = vmatpush.msra.mxu0 %v250
    %v252 = vand.u32 %v62, 4294901760
    %253 = vmatpush.msra.mxu0 %v252
    %v254 = vand.u32 %v61, 4294901760
    %255 = vmatpush.msra.mxu0 %v254
    %v256 = vand.u32 %v94, 4294901760
    %v257 = vsub.f32 %v94, %v256
    %v258 = vand.u32 %v257, 4294901760
    %v259 = vsub.f32 %v257, %v258
    %v260 = vand.u32 %v259, 4294901760
    %261 = vmatmul.f32.gmra.mxu0 %v260
    %v262 = vpop.f32.mrf.mxu0
    %v263 = vadd.f32 0.0, %v262
    %v264 = vand.u32 %v95, 4294901760
    %v265 = vsub.f32 %v95, %v264
    %v266 = vand.u32 %v265, 4294901760
    %v267 = vsub.f32 %v265, %v266
    %v268 = vand.u32 %v267, 4294901760
    %269 = vmatmul.f32.gmra.mxu0 %v268
    %v270 = vpop.f32.mrf.mxu0
    %v271 = vadd.f32 0.0, %v270
    %v272 = vand.u32 %v96, 4294901760
    %v273 = vsub.f32 %v96, %v272
    %v274 = vand.u32 %v273, 4294901760
    %v275 = vsub.f32 %v273, %v274
    %v276 = vand.u32 %v275, 4294901760
    %277 = vmatmul.f32.gmra.mxu0 %v276
    %v278 = vpop.f32.mrf.mxu0
    %v279 = vadd.f32 0.0, %v278
    %v280 = vand.u32 %v97, 4294901760
    %v281 = vsub.f32 %v97, %v280
    %v282 = vand.u32 %v281, 4294901760
    %v283 = vsub.f32 %v281, %v282
    %v284 = vand.u32 %v283, 4294901760
    %285 = vmatmul.f32.gmra.mxu0 %v284
    %v286 = vpop.f32.mrf.mxu0
    %v287 = vadd.f32 0.0, %v286
    %v288 = vand.u32 %v98, 4294901760
    %v289 = vsub.f32 %v98, %v288
    %v290 = vand.u32 %v289, 4294901760
    %v291 = vsub.f32 %v289, %v290
    %v292 = vand.u32 %v291, 4294901760
    %293 = vmatmul.f32.gmra.mxu0 %v292
    %v294 = vpop.f32.mrf.mxu0
    %v295 = vadd.f32 0.0, %v294
    %v296 = vand.u32 %v99, 4294901760
    %v297 = vsub.f32 %v99, %v296
    %v298 = vand.u32 %v297, 4294901760
    %v299 = vsub.f32 %v297, %v298
    %v300 = vand.u32 %v299, 4294901760
    %301 = vmatmul.f32.gmra.mxu0 %v300
    %v302 = vpop.f32.mrf.mxu0
    %v303 = vadd.f32 0.0, %v302
    %v304 = vand.u32 %v100, 4294901760
    %v305 = vsub.f32 %v100, %v304
    %v306 = vand.u32 %v305, 4294901760
    %v307 = vsub.f32 %v305, %v306
    %v308 = vand.u32 %v307, 4294901760
    %309 = vmatmul.f32.gmra.mxu0 %v308
    %v310 = vpop.f32.mrf.mxu0
    %v311 = vadd.f32 0.0, %v310
    %v312 = vand.u32 %v101, 4294901760
    %v313 = vsub.f32 %v101, %v312
    %v314 = vand.u32 %v313, 4294901760
    %v315 = vsub.f32 %v313, %v314
    %v316 = vand.u32 %v315, 4294901760
    %317 = vmatmul.f32.gmra.mxu0 %v316
    %v318 = vpop.f32.mrf.mxu0
    %v319 = vadd.f32 0.0, %v318
    %v320 = vand.u32 %v102, 4294901760
    %v321 = vsub.f32 %v102, %v320
    %v322 = vand.u32 %v321, 4294901760
    %v323 = vsub.f32 %v321, %v322
    %v324 = vand.u32 %v323, 4294901760
    %325 = vmatmul.f32.gmra.mxu0 %v324
    %v326 = vpop.f32.mrf.mxu0
    %v327 = vadd.f32 0.0, %v326
    %v328 = vand.u32 %v103, 4294901760
    %v329 = vsub.f32 %v103, %v328
    %v330 = vand.u32 %v329, 4294901760
    %v331 = vsub.f32 %v329, %v330
    %v332 = vand.u32 %v331, 4294901760
    %333 = vmatmul.f32.gmra.mxu0 %v332
    %v334 = vpop.f32.mrf.mxu0
    %v335 = vadd.f32 0.0, %v334
    %v336 = vand.u32 %v104, 4294901760
    %v337 = vsub.f32 %v104, %v336
    %v338 = vand.u32 %v337, 4294901760
    %v339 = vsub.f32 %v337, %v338
    %v340 = vand.u32 %v339, 4294901760
    %341 = vmatmul.f32.gmra.mxu0 %v340
    %v342 = vpop.f32.mrf.mxu0
    %v343 = vadd.f32 0.0, %v342
    %v344 = vand.u32 %v105, 4294901760
    %v345 = vsub.f32 %v105, %v344
    %v346 = vand.u32 %v345, 4294901760
    %v347 = vsub.f32 %v345, %v346
    %v348 = vand.u32 %v347, 4294901760
    %349 = vmatmul.f32.gmra.mxu0 %v348
    %v350 = vpop.f32.mrf.mxu0
    %v351 = vadd.f32 0.0, %v350
    %v352 = vand.u32 %v106, 4294901760
    %v353 = vsub.f32 %v106, %v352
    %v354 = vand.u32 %v353, 4294901760
    %v355 = vsub.f32 %v353, %v354
    %v356 = vand.u32 %v355, 4294901760
    %357 = vmatmul.f32.gmra.mxu0 %v356
    %v358 = vpop.f32.mrf.mxu0
    %v359 = vadd.f32 0.0, %v358
    %v360 = vand.u32 %v107, 4294901760
    %v361 = vsub.f32 %v107, %v360
    %v362 = vand.u32 %v361, 4294901760
    %v363 = vsub.f32 %v361, %v362
    %v364 = vand.u32 %v363, 4294901760
    %365 = vmatmul.f32.gmra.mxu0 %v364
    %v366 = vpop.f32.mrf.mxu0
    %v367 = vadd.f32 0.0, %v366
    %v368 = vand.u32 %v108, 4294901760
    %v369 = vsub.f32 %v108, %v368
    %v370 = vand.u32 %v369, 4294901760
    %v371 = vsub.f32 %v369, %v370
    %v372 = vand.u32 %v371, 4294901760
    %373 = vmatmul.f32.gmra.mxu0 %v372
    %v374 = vpop.f32.mrf.mxu0
    %v375 = vadd.f32 0.0, %v374
    %v376 = vand.u32 %v109, 4294901760
    %v377 = vsub.f32 %v109, %v376
    %v378 = vand.u32 %v377, 4294901760
    %v379 = vsub.f32 %v377, %v378
    %v380 = vand.u32 %v379, 4294901760
    %381 = vmatmul.f32.gmra.mxu0 %v380
    %v382 = vpop.f32.mrf.mxu0
    %v383 = vadd.f32 0.0, %v382
    %384 = vdwg.mxu0
    %v385 = vand.u32 %v76, 4294901760
    %v386 = vsub.f32 %v76, %v385
    %v387 = vand.u32 %v386, 4294901760
    %v388 = vsub.f32 %v386, %v387
    %v389 = vand.u32 %v388, 4294901760
    %390 = vmatpush.msra.mxu0 %v389
    %v391 = vand.u32 %v75, 4294901760
    %v392 = vsub.f32 %v75, %v391
    %v393 = vand.u32 %v392, 4294901760
    %v394 = vsub.f32 %v392, %v393
    %v395 = vand.u32 %v394, 4294901760
    %396 = vmatpush.msra.mxu0 %v395
    %v397 = vand.u32 %v74, 4294901760
    %v398 = vsub.f32 %v74, %v397
    %v399 = vand.u32 %v398, 4294901760
    %v400 = vsub.f32 %v398, %v399
    %v401 = vand.u32 %v400, 4294901760
    %402 = vmatpush.msra.mxu0 %v401
    %v403 = vand.u32 %v73, 4294901760
    %v404 = vsub.f32 %v73, %v403
    %v405 = vand.u32 %v404, 4294901760
    %v406 = vsub.f32 %v404, %v405
    %v407 = vand.u32 %v406, 4294901760
    %408 = vmatpush.msra.mxu0 %v407
    %v409 = vand.u32 %v72, 4294901760
    %v410 = vsub.f32 %v72, %v409
    %v411 = vand.u32 %v410, 4294901760
    %v412 = vsub.f32 %v410, %v411
    %v413 = vand.u32 %v412, 4294901760
    %414 = vmatpush.msra.mxu0 %v413
    %v415 = vand.u32 %v71, 4294901760
    %v416 = vsub.f32 %v71, %v415
    %v417 = vand.u32 %v416, 4294901760
    %v418 = vsub.f32 %v416, %v417
    %v419 = vand.u32 %v418, 4294901760
    %420 = vmatpush.msra.mxu0 %v419
    %v421 = vand.u32 %v70, 4294901760
    %v422 = vsub.f32 %v70, %v421
    %v423 = vand.u32 %v422, 4294901760
    %v424 = vsub.f32 %v422, %v423
    %v425 = vand.u32 %v424, 4294901760
    %426 = vmatpush.msra.mxu0 %v425
    %v427 = vand.u32 %v69, 4294901760
    %v428 = vsub.f32 %v69, %v427
    %v429 = vand.u32 %v428, 4294901760
    %v430 = vsub.f32 %v428, %v429
    %v431 = vand.u32 %v430, 4294901760
    %432 = vmatpush.msra.mxu0 %v431
    %v433 = vand.u32 %v68, 4294901760
    %v434 = vsub.f32 %v68, %v433
    %v435 = vand.u32 %v434, 4294901760
    %v436 = vsub.f32 %v434, %v435
    %v437 = vand.u32 %v436, 4294901760
    %438 = vmatpush.msra.mxu0 %v437
    %v439 = vand.u32 %v67, 4294901760
    %v440 = vsub.f32 %v67, %v439
    %v441 = vand.u32 %v440, 4294901760
    %v442 = vsub.f32 %v440, %v441
    %v443 = vand.u32 %v442, 4294901760
    %444 = vmatpush.msra.mxu0 %v443
    %v445 = vand.u32 %v66, 4294901760
    %v446 = vsub.f32 %v66, %v445
    %v447 = vand.u32 %v446, 4294901760
    %v448 = vsub.f32 %v446, %v447
    %v449 = vand.u32 %v448, 4294901760
    %450 = vmatpush.msra.mxu0 %v449
    %v451 = vand.u32 %v65, 4294901760
    %v452 = vsub.f32 %v65, %v451
    %v453 = vand.u32 %v452, 4294901760
    %v454 = vsub.f32 %v452, %v453
    %v455 = vand.u32 %v454, 4294901760
    %456 = vmatpush.msra.mxu0 %v455
    %v457 = vand.u32 %v64, 4294901760
    %v458 = vsub.f32 %v64, %v457
    %v459 = vand.u32 %v458, 4294901760
    %v460 = vsub.f32 %v458, %v459
    %v461 = vand.u32 %v460, 4294901760
    %462 = vmatpush.msra.mxu0 %v461
    %v463 = vand.u32 %v63, 4294901760
    %v464 = vsub.f32 %v63, %v463
    %v465 = vand.u32 %v464, 4294901760
    %v466 = vsub.f32 %v464, %v465
    %v467 = vand.u32 %v466, 4294901760
    %468 = vmatpush.msra.mxu0 %v467
    %v469 = vand.u32 %v62, 4294901760
    %v470 = vsub.f32 %v62, %v469
    %v471 = vand.u32 %v470, 4294901760
    %v472 = vsub.f32 %v470, %v471
    %v473 = vand.u32 %v472, 4294901760
    %474 = vmatpush.msra.mxu0 %v473
    %v475 = vand.u32 %v61, 4294901760
    %v476 = vsub.f32 %v61, %v475
    %v477 = vand.u32 %v476, 4294901760
    %v478 = vsub.f32 %v476, %v477
    %v479 = vand.u32 %v478, 4294901760
    %480 = vmatpush.msra.mxu0 %v479
    %v481 = vand.u32 %v94, 4294901760
    %482 = vmatmul.f32.gmra.mxu0 %v481
    %v483 = vpop.f32.mrf.mxu0
    %v484 = vadd.f32 %v263, %v483
    %v485 = vand.u32 %v95, 4294901760
    %486 = vmatmul.f32.gmra.mxu0 %v485
    %v487 = vpop.f32.mrf.mxu0
    %v488 = vadd.f32 %v271, %v487
    %v489 = vand.u32 %v96, 4294901760
    %490 = vmatmul.f32.gmra.mxu0 %v489
    %v491 = vpop.f32.mrf.mxu0
    %v492 = vadd.f32 %v279, %v491
    %v493 = vand.u32 %v97, 4294901760
    %494 = vmatmul.f32.gmra.mxu0 %v493
    %v495 = vpop.f32.mrf.mxu0
    %v496 = vadd.f32 %v287, %v495
    %v497 = vand.u32 %v98, 4294901760
    %498 = vmatmul.f32.gmra.mxu0 %v497
    %v499 = vpop.f32.mrf.mxu0
    %v500 = vadd.f32 %v295, %v499
    %v501 = vand.u32 %v99, 4294901760
    %502 = vmatmul.f32.gmra.mxu0 %v501
    %v503 = vpop.f32.mrf.mxu0
    %v504 = vadd.f32 %v303, %v503
    %v505 = vand.u32 %v100, 4294901760
    %506 = vmatmul.f32.gmra.mxu0 %v505
    %v507 = vpop.f32.mrf.mxu0
    %v508 = vadd.f32 %v311, %v507
    %v509 = vand.u32 %v101, 4294901760
    %510 = vmatmul.f32.gmra.mxu0 %v509
    %v511 = vpop.f32.mrf.mxu0
    %v512 = vadd.f32 %v319, %v511
    %v513 = vand.u32 %v102, 4294901760
    %514 = vmatmul.f32.gmra.mxu0 %v513
    %v515 = vpop.f32.mrf.mxu0
    %v516 = vadd.f32 %v327, %v515
    %v517 = vand.u32 %v103, 4294901760
    %518 = vmatmul.f32.gmra.mxu0 %v517
    %v519 = vpop.f32.mrf.mxu0
    %v520 = vadd.f32 %v335, %v519
    %v521 = vand.u32 %v104, 4294901760
    %522 = vmatmul.f32.gmra.mxu0 %v521
    %v523 = vpop.f32.mrf.mxu0
    %v524 = vadd.f32 %v343, %v523
    %v525 = vand.u32 %v105, 4294901760
    %526 = vmatmul.f32.gmra.mxu0 %v525
    %v527 = vpop.f32.mrf.mxu0
    %v528 = vadd.f32 %v351, %v527
    %v529 = vand.u32 %v106, 4294901760
    %530 = vmatmul.f32.gmra.mxu0 %v529
    %v531 = vpop.f32.mrf.mxu0
    %v532 = vadd.f32 %v359, %v531
    %v533 = vand.u32 %v107, 4294901760
    %534 = vmatmul.f32.gmra.mxu0 %v533
    %v535 = vpop.f32.mrf.mxu0
    %v536 = vadd.f32 %v367, %v535
    %v537 = vand.u32 %v108, 4294901760
    %538 = vmatmul.f32.gmra.mxu0 %v537
    %v539 = vpop.f32.mrf.mxu0
    %v540 = vadd.f32 %v375, %v539
    %v541 = vand.u32 %v109, 4294901760
    %542 = vmatmul.f32.gmra.mxu0 %v541
    %v543 = vpop.f32.mrf.mxu0
    %v544 = vadd.f32 %v383, %v543
    %545 = vdwg.mxu0
    %v546 = vand.u32 %v76, 4294901760
    %v547 = vsub.f32 %v76, %v546
    %548 = vmatpush.msra.mxu0 %v547
    %v549 = vand.u32 %v75, 4294901760
    %v550 = vsub.f32 %v75, %v549
    %551 = vmatpush.msra.mxu0 %v550
    %v552 = vand.u32 %v74, 4294901760
    %v553 = vsub.f32 %v74, %v552
    %554 = vmatpush.msra.mxu0 %v553
    %v555 = vand.u32 %v73, 4294901760
    %v556 = vsub.f32 %v73, %v555
    %557 = vmatpush.msra.mxu0 %v556
    %v558 = vand.u32 %v72, 4294901760
    %v559 = vsub.f32 %v72, %v558
    %560 = vmatpush.msra.mxu0 %v559
    %v561 = vand.u32 %v71, 4294901760
    %v562 = vsub.f32 %v71, %v561
    %563 = vmatpush.msra.mxu0 %v562
    %v564 = vand.u32 %v70, 4294901760
    %v565 = vsub.f32 %v70, %v564
    %566 = vmatpush.msra.mxu0 %v565
    %v567 = vand.u32 %v69, 4294901760
    %v568 = vsub.f32 %v69, %v567
    %569 = vmatpush.msra.mxu0 %v568
    %v570 = vand.u32 %v68, 4294901760
    %v571 = vsub.f32 %v68, %v570
    %572 = vmatpush.msra.mxu0 %v571
    %v573 = vand.u32 %v67, 4294901760
    %v574 = vsub.f32 %v67, %v573
    %575 = vmatpush.msra.mxu0 %v574
    %v576 = vand.u32 %v66, 4294901760
    %v577 = vsub.f32 %v66, %v576
    %578 = vmatpush.msra.mxu0 %v577
    %v579 = vand.u32 %v65, 4294901760
    %v580 = vsub.f32 %v65, %v579
    %581 = vmatpush.msra.mxu0 %v580
    %v582 = vand.u32 %v64, 4294901760
    %v583 = vsub.f32 %v64, %v582
    %584 = vmatpush.msra.mxu0 %v583
    %v585 = vand.u32 %v63, 4294901760
    %v586 = vsub.f32 %v63, %v585
    %587 = vmatpush.msra.mxu0 %v586
    %v588 = vand.u32 %v62, 4294901760
    %v589 = vsub.f32 %v62, %v588
    %590 = vmatpush.msra.mxu0 %v589
    %v591 = vand.u32 %v61, 4294901760
    %v592 = vsub.f32 %v61, %v591
    %593 = vmatpush.msra.mxu0 %v592
    %v594 = vand.u32 %v94, 4294901760
    %v595 = vsub.f32 %v94, %v594
    %596 = vmatmul.f32.gmra.mxu0 %v595
    %v597 = vpop.f32.mrf.mxu0
    %v598 = vadd.f32 %v484, %v597
    %v599 = vand.u32 %v95, 4294901760
    %v600 = vsub.f32 %v95, %v599
    %601 = vmatmul.f32.gmra.mxu0 %v600
    %v602 = vpop.f32.mrf.mxu0
    %v603 = vadd.f32 %v488, %v602
    %v604 = vand.u32 %v96, 4294901760
    %v605 = vsub.f32 %v96, %v604
    %606 = vmatmul.f32.gmra.mxu0 %v605
    %v607 = vpop.f32.mrf.mxu0
    %v608 = vadd.f32 %v492, %v607
    %v609 = vand.u32 %v97, 4294901760
    %v610 = vsub.f32 %v97, %v609
    %611 = vmatmul.f32.gmra.mxu0 %v610
    %v612 = vpop.f32.mrf.mxu0
    %v613 = vadd.f32 %v496, %v612
    %v614 = vand.u32 %v98, 4294901760
    %v615 = vsub.f32 %v98, %v614
    %616 = vmatmul.f32.gmra.mxu0 %v615
    %v617 = vpop.f32.mrf.mxu0
    %v618 = vadd.f32 %v500, %v617
    %v619 = vand.u32 %v99, 4294901760
    %v620 = vsub.f32 %v99, %v619
    %621 = vmatmul.f32.gmra.mxu0 %v620
    %v622 = vpop.f32.mrf.mxu0
    %v623 = vadd.f32 %v504, %v622
    %v624 = vand.u32 %v100, 4294901760
    %v625 = vsub.f32 %v100, %v624
    %626 = vmatmul.f32.gmra.mxu0 %v625
    %v627 = vpop.f32.mrf.mxu0
    %v628 = vadd.f32 %v508, %v627
    %v629 = vand.u32 %v101, 4294901760
    %v630 = vsub.f32 %v101, %v629
    %631 = vmatmul.f32.gmra.mxu0 %v630
    %v632 = vpop.f32.mrf.mxu0
    %v633 = vadd.f32 %v512, %v632
    %v634 = vand.u32 %v102, 4294901760
    %v635 = vsub.f32 %v102, %v634
    %636 = vmatmul.f32.gmra.mxu0 %v635
    %v637 = vpop.f32.mrf.mxu0
    %v638 = vadd.f32 %v516, %v637
    %v639 = vand.u32 %v103, 4294901760
    %v640 = vsub.f32 %v103, %v639
    %641 = vmatmul.f32.gmra.mxu0 %v640
    %v642 = vpop.f32.mrf.mxu0
    %v643 = vadd.f32 %v520, %v642
    %v644 = vand.u32 %v104, 4294901760
    %v645 = vsub.f32 %v104, %v644
    %646 = vmatmul.f32.gmra.mxu0 %v645
    %v647 = vpop.f32.mrf.mxu0
    %v648 = vadd.f32 %v524, %v647
    %v649 = vand.u32 %v105, 4294901760
    %v650 = vsub.f32 %v105, %v649
    %651 = vmatmul.f32.gmra.mxu0 %v650
    %v652 = vpop.f32.mrf.mxu0
    %v653 = vadd.f32 %v528, %v652
    %v654 = vand.u32 %v106, 4294901760
    %v655 = vsub.f32 %v106, %v654
    %656 = vmatmul.f32.gmra.mxu0 %v655
    %v657 = vpop.f32.mrf.mxu0
    %v658 = vadd.f32 %v532, %v657
    %v659 = vand.u32 %v107, 4294901760
    %v660 = vsub.f32 %v107, %v659
    %661 = vmatmul.f32.gmra.mxu0 %v660
    %v662 = vpop.f32.mrf.mxu0
    %v663 = vadd.f32 %v536, %v662
    %v664 = vand.u32 %v108, 4294901760
    %v665 = vsub.f32 %v108, %v664
    %666 = vmatmul.f32.gmra.mxu0 %v665
    %v667 = vpop.f32.mrf.mxu0
    %v668 = vadd.f32 %v540, %v667
    %v669 = vand.u32 %v109, 4294901760
    %v670 = vsub.f32 %v109, %v669
    %671 = vmatmul.f32.gmra.mxu0 %v670
    %v672 = vpop.f32.mrf.mxu0
    %v673 = vadd.f32 %v544, %v672
    %674 = vdwg.mxu0
    %v675 = vand.u32 %v76, 4294901760
    %676 = vmatpush.msra.mxu0 %v675
    %v677 = vand.u32 %v75, 4294901760
    %678 = vmatpush.msra.mxu0 %v677
    %v679 = vand.u32 %v74, 4294901760
    %680 = vmatpush.msra.mxu0 %v679
    %v681 = vand.u32 %v73, 4294901760
    %682 = vmatpush.msra.mxu0 %v681
    %v683 = vand.u32 %v72, 4294901760
    %684 = vmatpush.msra.mxu0 %v683
    %v685 = vand.u32 %v71, 4294901760
    %686 = vmatpush.msra.mxu0 %v685
    %v687 = vand.u32 %v70, 4294901760
    %688 = vmatpush.msra.mxu0 %v687
    %v689 = vand.u32 %v69, 4294901760
    %690 = vmatpush.msra.mxu0 %v689
    %v691 = vand.u32 %v68, 4294901760
    %692 = vmatpush.msra.mxu0 %v691
    %v693 = vand.u32 %v67, 4294901760
    %694 = vmatpush.msra.mxu0 %v693
    %v695 = vand.u32 %v66, 4294901760
    %696 = vmatpush.msra.mxu0 %v695
    %v697 = vand.u32 %v65, 4294901760
    %698 = vmatpush.msra.mxu0 %v697
    %v699 = vand.u32 %v64, 4294901760
    %700 = vmatpush.msra.mxu0 %v699
    %v701 = vand.u32 %v63, 4294901760
    %702 = vmatpush.msra.mxu0 %v701
    %v703 = vand.u32 %v62, 4294901760
    %704 = vmatpush.msra.mxu0 %v703
    %v705 = vand.u32 %v61, 4294901760
    %706 = vmatpush.msra.mxu0 %v705
    %v707 = vand.u32 %v94, 4294901760
    %v708 = vsub.f32 %v94, %v707
    %v709 = vand.u32 %v708, 4294901760
    %710 = vmatmul.f32.gmra.mxu0 %v709
    %v711 = vpop.f32.mrf.mxu0
    %v712 = vadd.f32 %v598, %v711
    %v713 = vand.u32 %v95, 4294901760
    %v714 = vsub.f32 %v95, %v713
    %v715 = vand.u32 %v714, 4294901760
    %716 = vmatmul.f32.gmra.mxu0 %v715
    %v717 = vpop.f32.mrf.mxu0
    %v718 = vadd.f32 %v603, %v717
    %v719 = vand.u32 %v96, 4294901760
    %v720 = vsub.f32 %v96, %v719
    %v721 = vand.u32 %v720, 4294901760
    %722 = vmatmul.f32.gmra.mxu0 %v721
    %v723 = vpop.f32.mrf.mxu0
    %v724 = vadd.f32 %v608, %v723
    %v725 = vand.u32 %v97, 4294901760
    %v726 = vsub.f32 %v97, %v725
    %v727 = vand.u32 %v726, 4294901760
    %728 = vmatmul.f32.gmra.mxu0 %v727
    %v729 = vpop.f32.mrf.mxu0
    %v730 = vadd.f32 %v613, %v729
    %v731 = vand.u32 %v98, 4294901760
    %v732 = vsub.f32 %v98, %v731
    %v733 = vand.u32 %v732, 4294901760
    %734 = vmatmul.f32.gmra.mxu0 %v733
    %v735 = vpop.f32.mrf.mxu0
    %v736 = vadd.f32 %v618, %v735
    %v737 = vand.u32 %v99, 4294901760
    %v738 = vsub.f32 %v99, %v737
    %v739 = vand.u32 %v738, 4294901760
    %740 = vmatmul.f32.gmra.mxu0 %v739
    %v741 = vpop.f32.mrf.mxu0
    %v742 = vadd.f32 %v623, %v741
    %v743 = vand.u32 %v100, 4294901760
    %v744 = vsub.f32 %v100, %v743
    %v745 = vand.u32 %v744, 4294901760
    %746 = vmatmul.f32.gmra.mxu0 %v745
    %v747 = vpop.f32.mrf.mxu0
    %v748 = vadd.f32 %v628, %v747
    %v749 = vand.u32 %v101, 4294901760
    %v750 = vsub.f32 %v101, %v749
    %v751 = vand.u32 %v750, 4294901760
    %752 = vmatmul.f32.gmra.mxu0 %v751
    %v753 = vpop.f32.mrf.mxu0
    %v754 = vadd.f32 %v633, %v753
    %v755 = vand.u32 %v102, 4294901760
    %v756 = vsub.f32 %v102, %v755
    %v757 = vand.u32 %v756, 4294901760
    %758 = vmatmul.f32.gmra.mxu0 %v757
    %v759 = vpop.f32.mrf.mxu0
    %v760 = vadd.f32 %v638, %v759
    %v761 = vand.u32 %v103, 4294901760
    %v762 = vsub.f32 %v103, %v761
    %v763 = vand.u32 %v762, 4294901760
    %764 = vmatmul.f32.gmra.mxu0 %v763
    %v765 = vpop.f32.mrf.mxu0
    %v766 = vadd.f32 %v643, %v765
    %v767 = vand.u32 %v104, 4294901760
    %v768 = vsub.f32 %v104, %v767
    %v769 = vand.u32 %v768, 4294901760
    %770 = vmatmul.f32.gmra.mxu0 %v769
    %v771 = vpop.f32.mrf.mxu0
    %v772 = vadd.f32 %v648, %v771
    %v773 = vand.u32 %v105, 4294901760
    %v774 = vsub.f32 %v105, %v773
    %v775 = vand.u32 %v774, 4294901760
    %776 = vmatmul.f32.gmra.mxu0 %v775
    %v777 = vpop.f32.mrf.mxu0
    %v778 = vadd.f32 %v653, %v777
    %v779 = vand.u32 %v106, 4294901760
    %v780 = vsub.f32 %v106, %v779
    %v781 = vand.u32 %v780, 4294901760
    %782 = vmatmul.f32.gmra.mxu0 %v781
    %v783 = vpop.f32.mrf.mxu0
    %v784 = vadd.f32 %v658, %v783
    %v785 = vand.u32 %v107, 4294901760
    %v786 = vsub.f32 %v107, %v785
    %v787 = vand.u32 %v786, 4294901760
    %788 = vmatmul.f32.gmra.mxu0 %v787
    %v789 = vpop.f32.mrf.mxu0
    %v790 = vadd.f32 %v663, %v789
    %v791 = vand.u32 %v108, 4294901760
    %v792 = vsub.f32 %v108, %v791
    %v793 = vand.u32 %v792, 4294901760
    %794 = vmatmul.f32.gmra.mxu0 %v793
    %v795 = vpop.f32.mrf.mxu0
    %v796 = vadd.f32 %v668, %v795
    %v797 = vand.u32 %v109, 4294901760
    %v798 = vsub.f32 %v109, %v797
    %v799 = vand.u32 %v798, 4294901760
    %800 = vmatmul.f32.gmra.mxu0 %v799
    %v801 = vpop.f32.mrf.mxu0
    %v802 = vadd.f32 %v673, %v801
    %803 = vdwg.mxu0
    %v804 = vand.u32 %v76, 4294901760
    %v805 = vsub.f32 %v76, %v804
    %v806 = vand.u32 %v805, 4294901760
    %807 = vmatpush.msra.mxu0 %v806
    %v808 = vand.u32 %v75, 4294901760
    %v809 = vsub.f32 %v75, %v808
    %v810 = vand.u32 %v809, 4294901760
    %811 = vmatpush.msra.mxu0 %v810
    %v812 = vand.u32 %v74, 4294901760
    %v813 = vsub.f32 %v74, %v812
    %v814 = vand.u32 %v813, 4294901760
    %815 = vmatpush.msra.mxu0 %v814
    %v816 = vand.u32 %v73, 4294901760
    %v817 = vsub.f32 %v73, %v816
    %v818 = vand.u32 %v817, 4294901760
    %819 = vmatpush.msra.mxu0 %v818
    %v820 = vand.u32 %v72, 4294901760
    %v821 = vsub.f32 %v72, %v820
    %v822 = vand.u32 %v821, 4294901760
    %823 = vmatpush.msra.mxu0 %v822
    %v824 = vand.u32 %v71, 4294901760
    %v825 = vsub.f32 %v71, %v824
    %v826 = vand.u32 %v825, 4294901760
    %827 = vmatpush.msra.mxu0 %v826
    %v828 = vand.u32 %v70, 4294901760
    %v829 = vsub.f32 %v70, %v828
    %v830 = vand.u32 %v829, 4294901760
    %831 = vmatpush.msra.mxu0 %v830
    %v832 = vand.u32 %v69, 4294901760
    %v833 = vsub.f32 %v69, %v832
    %v834 = vand.u32 %v833, 4294901760
    %835 = vmatpush.msra.mxu0 %v834
    %v836 = vand.u32 %v68, 4294901760
    %v837 = vsub.f32 %v68, %v836
    %v838 = vand.u32 %v837, 4294901760
    %839 = vmatpush.msra.mxu0 %v838
    %v840 = vand.u32 %v67, 4294901760
    %v841 = vsub.f32 %v67, %v840
    %v842 = vand.u32 %v841, 4294901760
    %843 = vmatpush.msra.mxu0 %v842
    %v844 = vand.u32 %v66, 4294901760
    %v845 = vsub.f32 %v66, %v844
    %v846 = vand.u32 %v845, 4294901760
    %847 = vmatpush.msra.mxu0 %v846
    %v848 = vand.u32 %v65, 4294901760
    %v849 = vsub.f32 %v65, %v848
    %v850 = vand.u32 %v849, 4294901760
    %851 = vmatpush.msra.mxu0 %v850
    %v852 = vand.u32 %v64, 4294901760
    %v853 = vsub.f32 %v64, %v852
    %v854 = vand.u32 %v853, 4294901760
    %855 = vmatpush.msra.mxu0 %v854
    %v856 = vand.u32 %v63, 4294901760
    %v857 = vsub.f32 %v63, %v856
    %v858 = vand.u32 %v857, 4294901760
    %859 = vmatpush.msra.mxu0 %v858
    %v860 = vand.u32 %v62, 4294901760
    %v861 = vsub.f32 %v62, %v860
    %v862 = vand.u32 %v861, 4294901760
    %863 = vmatpush.msra.mxu0 %v862
    %v864 = vand.u32 %v61, 4294901760
    %v865 = vsub.f32 %v61, %v864
    %v866 = vand.u32 %v865, 4294901760
    %867 = vmatpush.msra.mxu0 %v866
    %v868 = vand.u32 %v94, 4294901760
    %869 = vmatmul.f32.gmra.mxu0 %v868
    %v870 = vpop.f32.mrf.mxu0
    %v871 = vadd.f32 %v712, %v870
    %v872 = vand.u32 %v95, 4294901760
    %873 = vmatmul.f32.gmra.mxu0 %v872
    %v874 = vpop.f32.mrf.mxu0
    %v875 = vadd.f32 %v718, %v874
    %v876 = vand.u32 %v96, 4294901760
    %877 = vmatmul.f32.gmra.mxu0 %v876
    %v878 = vpop.f32.mrf.mxu0
    %v879 = vadd.f32 %v724, %v878
    %v880 = vand.u32 %v97, 4294901760
    %881 = vmatmul.f32.gmra.mxu0 %v880
    %v882 = vpop.f32.mrf.mxu0
    %v883 = vadd.f32 %v730, %v882
    %v884 = vand.u32 %v98, 4294901760
    %885 = vmatmul.f32.gmra.mxu0 %v884
    %v886 = vpop.f32.mrf.mxu0
    %v887 = vadd.f32 %v736, %v886
    %v888 = vand.u32 %v99, 4294901760
    %889 = vmatmul.f32.gmra.mxu0 %v888
    %v890 = vpop.f32.mrf.mxu0
    %v891 = vadd.f32 %v742, %v890
    %v892 = vand.u32 %v100, 4294901760
    %893 = vmatmul.f32.gmra.mxu0 %v892
    %v894 = vpop.f32.mrf.mxu0
    %v895 = vadd.f32 %v748, %v894
    %v896 = vand.u32 %v101, 4294901760
    %897 = vmatmul.f32.gmra.mxu0 %v896
    %v898 = vpop.f32.mrf.mxu0
    %v899 = vadd.f32 %v754, %v898
    %v900 = vand.u32 %v102, 4294901760
    %901 = vmatmul.f32.gmra.mxu0 %v900
    %v902 = vpop.f32.mrf.mxu0
    %v903 = vadd.f32 %v760, %v902
    %v904 = vand.u32 %v103, 4294901760
    %905 = vmatmul.f32.gmra.mxu0 %v904
    %v906 = vpop.f32.mrf.mxu0
    %v907 = vadd.f32 %v766, %v906
    %v908 = vand.u32 %v104, 4294901760
    %909 = vmatmul.f32.gmra.mxu0 %v908
    %v910 = vpop.f32.mrf.mxu0
    %v911 = vadd.f32 %v772, %v910
    %v912 = vand.u32 %v105, 4294901760
    %913 = vmatmul.f32.gmra.mxu0 %v912
    %v914 = vpop.f32.mrf.mxu0
    %v915 = vadd.f32 %v778, %v914
    %v916 = vand.u32 %v106, 4294901760
    %917 = vmatmul.f32.gmra.mxu0 %v916
    %v918 = vpop.f32.mrf.mxu0
    %v919 = vadd.f32 %v784, %v918
    %v920 = vand.u32 %v107, 4294901760
    %921 = vmatmul.f32.gmra.mxu0 %v920
    %v922 = vpop.f32.mrf.mxu0
    %v923 = vadd.f32 %v790, %v922
    %v924 = vand.u32 %v108, 4294901760
    %925 = vmatmul.f32.gmra.mxu0 %v924
    %v926 = vpop.f32.mrf.mxu0
    %v927 = vadd.f32 %v796, %v926
    %v928 = vand.u32 %v109, 4294901760
    %929 = vmatmul.f32.gmra.mxu0 %v928
    %v930 = vpop.f32.mrf.mxu0
    %v931 = vadd.f32 %v802, %v930
    %932 = vdwg.mxu0
    %v933 = vand.u32 %v76, 4294901760
    %934 = vmatpush.msra.mxu0 %v933
    %v935 = vand.u32 %v75, 4294901760
    %936 = vmatpush.msra.mxu0 %v935
    %v937 = vand.u32 %v74, 4294901760
    %938 = vmatpush.msra.mxu0 %v937
    %v939 = vand.u32 %v73, 4294901760
    %940 = vmatpush.msra.mxu0 %v939
    %v941 = vand.u32 %v72, 4294901760
    %942 = vmatpush.msra.mxu0 %v941
    %v943 = vand.u32 %v71, 4294901760
    %944 = vmatpush.msra.mxu0 %v943
    %v945 = vand.u32 %v70, 4294901760
    %946 = vmatpush.msra.mxu0 %v945
    %v947 = vand.u32 %v69, 4294901760
    %948 = vmatpush.msra.mxu0 %v947
    %v949 = vand.u32 %v68, 4294901760
    %950 = vmatpush.msra.mxu0 %v949
    %v951 = vand.u32 %v67, 4294901760
    %952 = vmatpush.msra.mxu0 %v951
    %v953 = vand.u32 %v66, 4294901760
    %954 = vmatpush.msra.mxu0 %v953
    %v955 = vand.u32 %v65, 4294901760
    %956 = vmatpush.msra.mxu0 %v955
    %v957 = vand.u32 %v64, 4294901760
    %958 = vmatpush.msra.mxu0 %v957
    %v959 = vand.u32 %v63, 4294901760
    %960 = vmatpush.msra.mxu0 %v959
    %v961 = vand.u32 %v62, 4294901760
    %962 = vmatpush.msra.mxu0 %v961
    %v963 = vand.u32 %v61, 4294901760
    %964 = vmatpush.msra.mxu0 %v963
    %v965 = vand.u32 %v94, 4294901760
    %966 = vmatmul.f32.gmra.mxu0 %v965
    %v967 = vpop.f32.mrf.mxu0
    %v968 = vadd.f32 %v871, %v967
    %v969 = vand.u32 %v95, 4294901760
    %970 = vmatmul.f32.gmra.mxu0 %v969
    %v971 = vpop.f32.mrf.mxu0
    %v972 = vadd.f32 %v875, %v971
    %v973 = vand.u32 %v96, 4294901760
    %974 = vmatmul.f32.gmra.mxu0 %v973
    %v975 = vpop.f32.mrf.mxu0
    %v976 = vadd.f32 %v879, %v975
    %v977 = vand.u32 %v97, 4294901760
    %978 = vmatmul.f32.gmra.mxu0 %v977
    %v979 = vpop.f32.mrf.mxu0
    %v980 = vadd.f32 %v883, %v979
    %v981 = vand.u32 %v98, 4294901760
    %982 = vmatmul.f32.gmra.mxu0 %v981
    %v983 = vpop.f32.mrf.mxu0
    %v984 = vadd.f32 %v887, %v983
    %v985 = vand.u32 %v99, 4294901760
    %986 = vmatmul.f32.gmra.mxu0 %v985
    %v987 = vpop.f32.mrf.mxu0
    %v988 = vadd.f32 %v891, %v987
    %v989 = vand.u32 %v100, 4294901760
    %990 = vmatmul.f32.gmra.mxu0 %v989
    %v991 = vpop.f32.mrf.mxu0
    %v992 = vadd.f32 %v895, %v991
    %v993 = vand.u32 %v101, 4294901760
    %994 = vmatmul.f32.gmra.mxu0 %v993
    %v995 = vpop.f32.mrf.mxu0
    %v996 = vadd.f32 %v899, %v995
    %v997 = vand.u32 %v102, 4294901760
    %998 = vmatmul.f32.gmra.mxu0 %v997
    %v999 = vpop.f32.mrf.mxu0
    %v1000 = vadd.f32 %v903, %v999
    %v1001 = vand.u32 %v103, 4294901760
    %1002 = vmatmul.f32.gmra.mxu0 %v1001
    %v1003 = vpop.f32.mrf.mxu0
    %v1004 = vadd.f32 %v907, %v1003
    %v1005 = vand.u32 %v104, 4294901760
    %1006 = vmatmul.f32.gmra.mxu0 %v1005
    %v1007 = vpop.f32.mrf.mxu0
    %v1008 = vadd.f32 %v911, %v1007
    %v1009 = vand.u32 %v105, 4294901760
    %1010 = vmatmul.f32.gmra.mxu0 %v1009
    %v1011 = vpop.f32.mrf.mxu0
    %v1012 = vadd.f32 %v915, %v1011
    %v1013 = vand.u32 %v106, 4294901760
    %1014 = vmatmul.f32.gmra.mxu0 %v1013
    %v1015 = vpop.f32.mrf.mxu0
    %v1016 = vadd.f32 %v919, %v1015
    %v1017 = vand.u32 %v107, 4294901760
    %1018 = vmatmul.f32.gmra.mxu0 %v1017
    %v1019 = vpop.f32.mrf.mxu0
    %v1020 = vadd.f32 %v923, %v1019
    %v1021 = vand.u32 %v108, 4294901760
    %1022 = vmatmul.f32.gmra.mxu0 %v1021
    %v1023 = vpop.f32.mrf.mxu0
    %v1024 = vadd.f32 %v927, %v1023
    %v1025 = vand.u32 %v109, 4294901760
    %1026 = vmatmul.f32.gmra.mxu0 %v1025
    %v1027 = vpop.f32.mrf.mxu0
    %v1028 = vadd.f32 %v931, %v1027
    %1029 = vdwg.mxu0
    %v1030 = vand.u32 %v59, 4294901760
    %1031 = vmatpush.msra.mxu0 %v1030
    %v1032 = vand.u32 %v58, 4294901760
    %1033 = vmatpush.msra.mxu0 %v1032
    %v1034 = vand.u32 %v57, 4294901760
    %1035 = vmatpush.msra.mxu0 %v1034
    %v1036 = vand.u32 %v56, 4294901760
    %1037 = vmatpush.msra.mxu0 %v1036
    %v1038 = vand.u32 %v55, 4294901760
    %1039 = vmatpush.msra.mxu0 %v1038
    %v1040 = vand.u32 %v54, 4294901760
    %1041 = vmatpush.msra.mxu0 %v1040
    %v1042 = vand.u32 %v53, 4294901760
    %1043 = vmatpush.msra.mxu0 %v1042
    %v1044 = vand.u32 %v52, 4294901760
    %1045 = vmatpush.msra.mxu0 %v1044
    %v1046 = vand.u32 %v51, 4294901760
    %1047 = vmatpush.msra.mxu0 %v1046
    %v1048 = vand.u32 %v50, 4294901760
    %1049 = vmatpush.msra.mxu0 %v1048
    %v1050 = vand.u32 %v49, 4294901760
    %1051 = vmatpush.msra.mxu0 %v1050
    %v1052 = vand.u32 %v48, 4294901760
    %1053 = vmatpush.msra.mxu0 %v1052
    %v1054 = vand.u32 %v47, 4294901760
    %1055 = vmatpush.msra.mxu0 %v1054
    %v1056 = vand.u32 %v46, 4294901760
    %1057 = vmatpush.msra.mxu0 %v1056
    %v1058 = vand.u32 %v45, 4294901760
    %1059 = vmatpush.msra.mxu0 %v1058
    %v1060 = vand.u32 %v44, 4294901760
    %1061 = vmatpush.msra.mxu0 %v1060
    %v1062 = vand.u32 %v167, 4294901760
    %v1063 = vsub.f32 %v167, %v1062
    %v1064 = vand.u32 %v1063, 4294901760
    %v1065 = vsub.f32 %v1063, %v1064
    %v1066 = vand.u32 %v1065, 4294901760
    %1067 = vmatmul.f32.gmra.mxu0 %v1066
    %v1068 = vpop.f32.mrf.mxu0
    %v1069 = vadd.f32 %v968, %v1068
    %v1070 = vand.u32 %v129, 4294901760
    %v1071 = vsub.f32 %v129, %v1070
    %v1072 = vand.u32 %v1071, 4294901760
    %v1073 = vsub.f32 %v1071, %v1072
    %v1074 = vand.u32 %v1073, 4294901760
    %1075 = vmatmul.f32.gmra.mxu0 %v1074
    %v1076 = vpop.f32.mrf.mxu0
    %v1077 = vadd.f32 %v972, %v1076
    %v1078 = vand.u32 %v168, 4294901760
    %v1079 = vsub.f32 %v168, %v1078
    %v1080 = vand.u32 %v1079, 4294901760
    %v1081 = vsub.f32 %v1079, %v1080
    %v1082 = vand.u32 %v1081, 4294901760
    %1083 = vmatmul.f32.gmra.mxu0 %v1082
    %v1084 = vpop.f32.mrf.mxu0
    %v1085 = vadd.f32 %v976, %v1084
    %v1086 = vand.u32 %v132, 4294901760
    %v1087 = vsub.f32 %v132, %v1086
    %v1088 = vand.u32 %v1087, 4294901760
    %v1089 = vsub.f32 %v1087, %v1088
    %v1090 = vand.u32 %v1089, 4294901760
    %1091 = vmatmul.f32.gmra.mxu0 %v1090
    %v1092 = vpop.f32.mrf.mxu0
    %v1093 = vadd.f32 %v980, %v1092
    %v1094 = vand.u32 %v169, 4294901760
    %v1095 = vsub.f32 %v169, %v1094
    %v1096 = vand.u32 %v1095, 4294901760
    %v1097 = vsub.f32 %v1095, %v1096
    %v1098 = vand.u32 %v1097, 4294901760
    %1099 = vmatmul.f32.gmra.mxu0 %v1098
    %v1100 = vpop.f32.mrf.mxu0
    %v1101 = vadd.f32 %v984, %v1100
    %v1102 = vand.u32 %v135, 4294901760
    %v1103 = vsub.f32 %v135, %v1102
    %v1104 = vand.u32 %v1103, 4294901760
    %v1105 = vsub.f32 %v1103, %v1104
    %v1106 = vand.u32 %v1105, 4294901760
    %1107 = vmatmul.f32.gmra.mxu0 %v1106
    %v1108 = vpop.f32.mrf.mxu0
    %v1109 = vadd.f32 %v988, %v1108
    %v1110 = vand.u32 %v170, 4294901760
    %v1111 = vsub.f32 %v170, %v1110
    %v1112 = vand.u32 %v1111, 4294901760
    %v1113 = vsub.f32 %v1111, %v1112
    %v1114 = vand.u32 %v1113, 4294901760
    %1115 = vmatmul.f32.gmra.mxu0 %v1114
    %v1116 = vpop.f32.mrf.mxu0
    %v1117 = vadd.f32 %v992, %v1116
    %v1118 = vand.u32 %v138, 4294901760
    %v1119 = vsub.f32 %v138, %v1118
    %v1120 = vand.u32 %v1119, 4294901760
    %v1121 = vsub.f32 %v1119, %v1120
    %v1122 = vand.u32 %v1121, 4294901760
    %1123 = vmatmul.f32.gmra.mxu0 %v1122
    %v1124 = vpop.f32.mrf.mxu0
    %v1125 = vadd.f32 %v996, %v1124
    %v1126 = vand.u32 %v171, 4294901760
    %v1127 = vsub.f32 %v171, %v1126
    %v1128 = vand.u32 %v1127, 4294901760
    %v1129 = vsub.f32 %v1127, %v1128
    %v1130 = vand.u32 %v1129, 4294901760
    %1131 = vmatmul.f32.gmra.mxu0 %v1130
    %v1132 = vpop.f32.mrf.mxu0
    %v1133 = vadd.f32 %v1000, %v1132
    %v1134 = vand.u32 %v141, 4294901760
    %v1135 = vsub.f32 %v141, %v1134
    %v1136 = vand.u32 %v1135, 4294901760
    %v1137 = vsub.f32 %v1135, %v1136
    %v1138 = vand.u32 %v1137, 4294901760
    %1139 = vmatmul.f32.gmra.mxu0 %v1138
    %v1140 = vpop.f32.mrf.mxu0
    %v1141 = vadd.f32 %v1004, %v1140
    %v1142 = vand.u32 %v172, 4294901760
    %v1143 = vsub.f32 %v172, %v1142
    %v1144 = vand.u32 %v1143, 4294901760
    %v1145 = vsub.f32 %v1143, %v1144
    %v1146 = vand.u32 %v1145, 4294901760
    %1147 = vmatmul.f32.gmra.mxu0 %v1146
    %v1148 = vpop.f32.mrf.mxu0
    %v1149 = vadd.f32 %v1008, %v1148
    %v1150 = vand.u32 %v144, 4294901760
    %v1151 = vsub.f32 %v144, %v1150
    %v1152 = vand.u32 %v1151, 4294901760
    %v1153 = vsub.f32 %v1151, %v1152
    %v1154 = vand.u32 %v1153, 4294901760
    %1155 = vmatmul.f32.gmra.mxu0 %v1154
    %v1156 = vpop.f32.mrf.mxu0
    %v1157 = vadd.f32 %v1012, %v1156
    %v1158 = vand.u32 %v173, 4294901760
    %v1159 = vsub.f32 %v173, %v1158
    %v1160 = vand.u32 %v1159, 4294901760
    %v1161 = vsub.f32 %v1159, %v1160
    %v1162 = vand.u32 %v1161, 4294901760
    %1163 = vmatmul.f32.gmra.mxu0 %v1162
    %v1164 = vpop.f32.mrf.mxu0
    %v1165 = vadd.f32 %v1016, %v1164
    %v1166 = vand.u32 %v147, 4294901760
    %v1167 = vsub.f32 %v147, %v1166
    %v1168 = vand.u32 %v1167, 4294901760
    %v1169 = vsub.f32 %v1167, %v1168
    %v1170 = vand.u32 %v1169, 4294901760
    %1171 = vmatmul.f32.gmra.mxu0 %v1170
    %v1172 = vpop.f32.mrf.mxu0
    %v1173 = vadd.f32 %v1020, %v1172
    %v1174 = vand.u32 %v174, 4294901760
    %v1175 = vsub.f32 %v174, %v1174
    %v1176 = vand.u32 %v1175, 4294901760
    %v1177 = vsub.f32 %v1175, %v1176
    %v1178 = vand.u32 %v1177, 4294901760
    %1179 = vmatmul.f32.gmra.mxu0 %v1178
    %v1180 = vpop.f32.mrf.mxu0
    %v1181 = vadd.f32 %v1024, %v1180
    %v1182 = vand.u32 %v150, 4294901760
    %v1183 = vsub.f32 %v150, %v1182
    %v1184 = vand.u32 %v1183, 4294901760
    %v1185 = vsub.f32 %v1183, %v1184
    %v1186 = vand.u32 %v1185, 4294901760
    %1187 = vmatmul.f32.gmra.mxu0 %v1186
    %v1188 = vpop.f32.mrf.mxu0
    %v1189 = vadd.f32 %v1028, %v1188
    %1190 = vdwg.mxu0
    %v1191 = vand.u32 %v59, 4294901760
    %v1192 = vsub.f32 %v59, %v1191
    %v1193 = vand.u32 %v1192, 4294901760
    %v1194 = vsub.f32 %v1192, %v1193
    %v1195 = vand.u32 %v1194, 4294901760
    %1196 = vmatpush.msra.mxu0 %v1195
    %v1197 = vand.u32 %v58, 4294901760
    %v1198 = vsub.f32 %v58, %v1197
    %v1199 = vand.u32 %v1198, 4294901760
    %v1200 = vsub.f32 %v1198, %v1199
    %v1201 = vand.u32 %v1200, 4294901760
    %1202 = vmatpush.msra.mxu0 %v1201
    %v1203 = vand.u32 %v57, 4294901760
    %v1204 = vsub.f32 %v57, %v1203
    %v1205 = vand.u32 %v1204, 4294901760
    %v1206 = vsub.f32 %v1204, %v1205
    %v1207 = vand.u32 %v1206, 4294901760
    %1208 = vmatpush.msra.mxu0 %v1207
    %v1209 = vand.u32 %v56, 4294901760
    %v1210 = vsub.f32 %v56, %v1209
    %v1211 = vand.u32 %v1210, 4294901760
    %v1212 = vsub.f32 %v1210, %v1211
    %v1213 = vand.u32 %v1212, 4294901760
    %1214 = vmatpush.msra.mxu0 %v1213
    %v1215 = vand.u32 %v55, 4294901760
    %v1216 = vsub.f32 %v55, %v1215
    %v1217 = vand.u32 %v1216, 4294901760
    %v1218 = vsub.f32 %v1216, %v1217
    %v1219 = vand.u32 %v1218, 4294901760
    %1220 = vmatpush.msra.mxu0 %v1219
    %v1221 = vand.u32 %v54, 4294901760
    %v1222 = vsub.f32 %v54, %v1221
    %v1223 = vand.u32 %v1222, 4294901760
    %v1224 = vsub.f32 %v1222, %v1223
    %v1225 = vand.u32 %v1224, 4294901760
    %1226 = vmatpush.msra.mxu0 %v1225
    %v1227 = vand.u32 %v53, 4294901760
    %v1228 = vsub.f32 %v53, %v1227
    %v1229 = vand.u32 %v1228, 4294901760
    %v1230 = vsub.f32 %v1228, %v1229
    %v1231 = vand.u32 %v1230, 4294901760
    %1232 = vmatpush.msra.mxu0 %v1231
    %v1233 = vand.u32 %v52, 4294901760
    %v1234 = vsub.f32 %v52, %v1233
    %v1235 = vand.u32 %v1234, 4294901760
    %v1236 = vsub.f32 %v1234, %v1235
    %v1237 = vand.u32 %v1236, 4294901760
    %1238 = vmatpush.msra.mxu0 %v1237
    %v1239 = vand.u32 %v51, 4294901760
    %v1240 = vsub.f32 %v51, %v1239
    %v1241 = vand.u32 %v1240, 4294901760
    %v1242 = vsub.f32 %v1240, %v1241
    %v1243 = vand.u32 %v1242, 4294901760
    %1244 = vmatpush.msra.mxu0 %v1243
    %v1245 = vand.u32 %v50, 4294901760
    %v1246 = vsub.f32 %v50, %v1245
    %v1247 = vand.u32 %v1246, 4294901760
    %v1248 = vsub.f32 %v1246, %v1247
    %v1249 = vand.u32 %v1248, 4294901760
    %1250 = vmatpush.msra.mxu0 %v1249
    %v1251 = vand.u32 %v49, 4294901760
    %v1252 = vsub.f32 %v49, %v1251
    %v1253 = vand.u32 %v1252, 4294901760
    %v1254 = vsub.f32 %v1252, %v1253
    %v1255 = vand.u32 %v1254, 4294901760
    %1256 = vmatpush.msra.mxu0 %v1255
    %v1257 = vand.u32 %v48, 4294901760
    %v1258 = vsub.f32 %v48, %v1257
    %v1259 = vand.u32 %v1258, 4294901760
    %v1260 = vsub.f32 %v1258, %v1259
    %v1261 = vand.u32 %v1260, 4294901760
    %1262 = vmatpush.msra.mxu0 %v1261
    %v1263 = vand.u32 %v47, 4294901760
    %v1264 = vsub.f32 %v47, %v1263
    %v1265 = vand.u32 %v1264, 4294901760
    %v1266 = vsub.f32 %v1264, %v1265
    %v1267 = vand.u32 %v1266, 4294901760
    %1268 = vmatpush.msra.mxu0 %v1267
    %v1269 = vand.u32 %v46, 4294901760
    %v1270 = vsub.f32 %v46, %v1269
    %v1271 = vand.u32 %v1270, 4294901760
    %v1272 = vsub.f32 %v1270, %v1271
    %v1273 = vand.u32 %v1272, 4294901760
    %1274 = vmatpush.msra.mxu0 %v1273
    %v1275 = vand.u32 %v45, 4294901760
    %v1276 = vsub.f32 %v45, %v1275
    %v1277 = vand.u32 %v1276, 4294901760
    %v1278 = vsub.f32 %v1276, %v1277
    %v1279 = vand.u32 %v1278, 4294901760
    %1280 = vmatpush.msra.mxu0 %v1279
    %v1281 = vand.u32 %v44, 4294901760
    %v1282 = vsub.f32 %v44, %v1281
    %v1283 = vand.u32 %v1282, 4294901760
    %v1284 = vsub.f32 %v1282, %v1283
    %v1285 = vand.u32 %v1284, 4294901760
    %1286 = vmatpush.msra.mxu0 %v1285
    %v1287 = vand.u32 %v167, 4294901760
    %1288 = vmatmul.f32.gmra.mxu0 %v1287
    %v1289 = vpop.f32.mrf.mxu0
    %v1290 = vadd.f32 %v1069, %v1289
    %v1291 = vand.u32 %v129, 4294901760
    %1292 = vmatmul.f32.gmra.mxu0 %v1291
    %v1293 = vpop.f32.mrf.mxu0
    %v1294 = vadd.f32 %v1077, %v1293
    %v1295 = vand.u32 %v168, 4294901760
    %1296 = vmatmul.f32.gmra.mxu0 %v1295
    %v1297 = vpop.f32.mrf.mxu0
    %v1298 = vadd.f32 %v1085, %v1297
    %v1299 = vand.u32 %v132, 4294901760
    %1300 = vmatmul.f32.gmra.mxu0 %v1299
    %v1301 = vpop.f32.mrf.mxu0
    %v1302 = vadd.f32 %v1093, %v1301
    %v1303 = vand.u32 %v169, 4294901760
    %1304 = vmatmul.f32.gmra.mxu0 %v1303
    %v1305 = vpop.f32.mrf.mxu0
    %v1306 = vadd.f32 %v1101, %v1305
    %v1307 = vand.u32 %v135, 4294901760
    %1308 = vmatmul.f32.gmra.mxu0 %v1307
    %v1309 = vpop.f32.mrf.mxu0
    %v1310 = vadd.f32 %v1109, %v1309
    %v1311 = vand.u32 %v170, 4294901760
    %1312 = vmatmul.f32.gmra.mxu0 %v1311
    %v1313 = vpop.f32.mrf.mxu0
    %v1314 = vadd.f32 %v1117, %v1313
    %v1315 = vand.u32 %v138, 4294901760
    %1316 = vmatmul.f32.gmra.mxu0 %v1315
    %v1317 = vpop.f32.mrf.mxu0
    %v1318 = vadd.f32 %v1125, %v1317
    %v1319 = vand.u32 %v171, 4294901760
    %1320 = vmatmul.f32.gmra.mxu0 %v1319
    %v1321 = vpop.f32.mrf.mxu0
    %v1322 = vadd.f32 %v1133, %v1321
    %v1323 = vand.u32 %v141, 4294901760
    %1324 = vmatmul.f32.gmra.mxu0 %v1323
    %v1325 = vpop.f32.mrf.mxu0
    %v1326 = vadd.f32 %v1141, %v1325
    %v1327 = vand.u32 %v172, 4294901760
    %1328 = vmatmul.f32.gmra.mxu0 %v1327
    %v1329 = vpop.f32.mrf.mxu0
    %v1330 = vadd.f32 %v1149, %v1329
    %v1331 = vand.u32 %v144, 4294901760
    %1332 = vmatmul.f32.gmra.mxu0 %v1331
    %v1333 = vpop.f32.mrf.mxu0
    %v1334 = vadd.f32 %v1157, %v1333
    %v1335 = vand.u32 %v173, 4294901760
    %1336 = vmatmul.f32.gmra.mxu0 %v1335
    %v1337 = vpop.f32.mrf.mxu0
    %v1338 = vadd.f32 %v1165, %v1337
    %v1339 = vand.u32 %v147, 4294901760
    %1340 = vmatmul.f32.gmra.mxu0 %v1339
    %v1341 = vpop.f32.mrf.mxu0
    %v1342 = vadd.f32 %v1173, %v1341
    %v1343 = vand.u32 %v174, 4294901760
    %1344 = vmatmul.f32.gmra.mxu0 %v1343
    %v1345 = vpop.f32.mrf.mxu0
    %v1346 = vadd.f32 %v1181, %v1345
    %v1347 = vand.u32 %v150, 4294901760
    %1348 = vmatmul.f32.gmra.mxu0 %v1347
    %v1349 = vpop.f32.mrf.mxu0
    %v1350 = vadd.f32 %v1189, %v1349
    %1351 = vdwg.mxu0
    %v1352 = vand.u32 %v59, 4294901760
    %v1353 = vsub.f32 %v59, %v1352
    %1354 = vmatpush.msra.mxu0 %v1353
    %v1355 = vand.u32 %v58, 4294901760
    %v1356 = vsub.f32 %v58, %v1355
    %1357 = vmatpush.msra.mxu0 %v1356
    %v1358 = vand.u32 %v57, 4294901760
    %v1359 = vsub.f32 %v57, %v1358
    %1360 = vmatpush.msra.mxu0 %v1359
    %v1361 = vand.u32 %v56, 4294901760
    %v1362 = vsub.f32 %v56, %v1361
    %1363 = vmatpush.msra.mxu0 %v1362
    %v1364 = vand.u32 %v55, 4294901760
    %v1365 = vsub.f32 %v55, %v1364
    %1366 = vmatpush.msra.mxu0 %v1365
    %v1367 = vand.u32 %v54, 4294901760
    %v1368 = vsub.f32 %v54, %v1367
    %1369 = vmatpush.msra.mxu0 %v1368
    %v1370 = vand.u32 %v53, 4294901760
    %v1371 = vsub.f32 %v53, %v1370
    %1372 = vmatpush.msra.mxu0 %v1371
    %v1373 = vand.u32 %v52, 4294901760
    %v1374 = vsub.f32 %v52, %v1373
    %1375 = vmatpush.msra.mxu0 %v1374
    %v1376 = vand.u32 %v51, 4294901760
    %v1377 = vsub.f32 %v51, %v1376
    %1378 = vmatpush.msra.mxu0 %v1377
    %v1379 = vand.u32 %v50, 4294901760
    %v1380 = vsub.f32 %v50, %v1379
    %1381 = vmatpush.msra.mxu0 %v1380
    %v1382 = vand.u32 %v49, 4294901760
    %v1383 = vsub.f32 %v49, %v1382
    %1384 = vmatpush.msra.mxu0 %v1383
    %v1385 = vand.u32 %v48, 4294901760
    %v1386 = vsub.f32 %v48, %v1385
    %1387 = vmatpush.msra.mxu0 %v1386
    %v1388 = vand.u32 %v47, 4294901760
    %v1389 = vsub.f32 %v47, %v1388
    %1390 = vmatpush.msra.mxu0 %v1389
    %v1391 = vand.u32 %v46, 4294901760
    %v1392 = vsub.f32 %v46, %v1391
    %1393 = vmatpush.msra.mxu0 %v1392
    %v1394 = vand.u32 %v45, 4294901760
    %v1395 = vsub.f32 %v45, %v1394
    %1396 = vmatpush.msra.mxu0 %v1395
    %v1397 = vand.u32 %v44, 4294901760
    %v1398 = vsub.f32 %v44, %v1397
    %1399 = vmatpush.msra.mxu0 %v1398
    %v1400 = vand.u32 %v167, 4294901760
    %v1401 = vsub.f32 %v167, %v1400
    %1402 = vmatmul.f32.gmra.mxu0 %v1401
    %v1403 = vpop.f32.mrf.mxu0
    %v1404 = vadd.f32 %v1290, %v1403
    %v1405 = vand.u32 %v129, 4294901760
    %v1406 = vsub.f32 %v129, %v1405
    %1407 = vmatmul.f32.gmra.mxu0 %v1406
    %v1408 = vpop.f32.mrf.mxu0
    %v1409 = vadd.f32 %v1294, %v1408
    %v1410 = vand.u32 %v168, 4294901760
    %v1411 = vsub.f32 %v168, %v1410
    %1412 = vmatmul.f32.gmra.mxu0 %v1411
    %v1413 = vpop.f32.mrf.mxu0
    %v1414 = vadd.f32 %v1298, %v1413
    %v1415 = vand.u32 %v132, 4294901760
    %v1416 = vsub.f32 %v132, %v1415
    %1417 = vmatmul.f32.gmra.mxu0 %v1416
    %v1418 = vpop.f32.mrf.mxu0
    %v1419 = vadd.f32 %v1302, %v1418
    %v1420 = vand.u32 %v169, 4294901760
    %v1421 = vsub.f32 %v169, %v1420
    %1422 = vmatmul.f32.gmra.mxu0 %v1421
    %v1423 = vpop.f32.mrf.mxu0
    %v1424 = vadd.f32 %v1306, %v1423
    %v1425 = vand.u32 %v135, 4294901760
    %v1426 = vsub.f32 %v135, %v1425
    %1427 = vmatmul.f32.gmra.mxu0 %v1426
    %v1428 = vpop.f32.mrf.mxu0
    %v1429 = vadd.f32 %v1310, %v1428
    %v1430 = vand.u32 %v170, 4294901760
    %v1431 = vsub.f32 %v170, %v1430
    %1432 = vmatmul.f32.gmra.mxu0 %v1431
    %v1433 = vpop.f32.mrf.mxu0
    %v1434 = vadd.f32 %v1314, %v1433
    %v1435 = vand.u32 %v138, 4294901760
    %v1436 = vsub.f32 %v138, %v1435
    %1437 = vmatmul.f32.gmra.mxu0 %v1436
    %v1438 = vpop.f32.mrf.mxu0
    %v1439 = vadd.f32 %v1318, %v1438
    %v1440 = vand.u32 %v171, 4294901760
    %v1441 = vsub.f32 %v171, %v1440
    %1442 = vmatmul.f32.gmra.mxu0 %v1441
    %v1443 = vpop.f32.mrf.mxu0
    %v1444 = vadd.f32 %v1322, %v1443
    %v1445 = vand.u32 %v141, 4294901760
    %v1446 = vsub.f32 %v141, %v1445
    %1447 = vmatmul.f32.gmra.mxu0 %v1446
    %v1448 = vpop.f32.mrf.mxu0
    %v1449 = vadd.f32 %v1326, %v1448
    %v1450 = vand.u32 %v172, 4294901760
    %v1451 = vsub.f32 %v172, %v1450
    %1452 = vmatmul.f32.gmra.mxu0 %v1451
    %v1453 = vpop.f32.mrf.mxu0
    %v1454 = vadd.f32 %v1330, %v1453
    %v1455 = vand.u32 %v144, 4294901760
    %v1456 = vsub.f32 %v144, %v1455
    %1457 = vmatmul.f32.gmra.mxu0 %v1456
    %v1458 = vpop.f32.mrf.mxu0
    %v1459 = vadd.f32 %v1334, %v1458
    %v1460 = vand.u32 %v173, 4294901760
    %v1461 = vsub.f32 %v173, %v1460
    %1462 = vmatmul.f32.gmra.mxu0 %v1461
    %v1463 = vpop.f32.mrf.mxu0
    %v1464 = vadd.f32 %v1338, %v1463
    %v1465 = vand.u32 %v147, 4294901760
    %v1466 = vsub.f32 %v147, %v1465
    %1467 = vmatmul.f32.gmra.mxu0 %v1466
    %v1468 = vpop.f32.mrf.mxu0
    %v1469 = vadd.f32 %v1342, %v1468
    %v1470 = vand.u32 %v174, 4294901760
    %v1471 = vsub.f32 %v174, %v1470
    %1472 = vmatmul.f32.gmra.mxu0 %v1471
    %v1473 = vpop.f32.mrf.mxu0
    %v1474 = vadd.f32 %v1346, %v1473
    %v1475 = vand.u32 %v150, 4294901760
    %v1476 = vsub.f32 %v150, %v1475
    %1477 = vmatmul.f32.gmra.mxu0 %v1476
    %v1478 = vpop.f32.mrf.mxu0
    %v1479 = vadd.f32 %v1350, %v1478
    %1480 = vdwg.mxu0
    %v1481 = vand.u32 %v59, 4294901760
    %1482 = vmatpush.msra.mxu0 %v1481
    %v1483 = vand.u32 %v58, 4294901760
    %1484 = vmatpush.msra.mxu0 %v1483
    %v1485 = vand.u32 %v57, 4294901760
    %1486 = vmatpush.msra.mxu0 %v1485
    %v1487 = vand.u32 %v56, 4294901760
    %1488 = vmatpush.msra.mxu0 %v1487
    %v1489 = vand.u32 %v55, 4294901760
    %1490 = vmatpush.msra.mxu0 %v1489
    %v1491 = vand.u32 %v54, 4294901760
    %1492 = vmatpush.msra.mxu0 %v1491
    %v1493 = vand.u32 %v53, 4294901760
    %1494 = vmatpush.msra.mxu0 %v1493
    %v1495 = vand.u32 %v52, 4294901760
    %1496 = vmatpush.msra.mxu0 %v1495
    %v1497 = vand.u32 %v51, 4294901760
    %1498 = vmatpush.msra.mxu0 %v1497
    %v1499 = vand.u32 %v50, 4294901760
    %1500 = vmatpush.msra.mxu0 %v1499
    %v1501 = vand.u32 %v49, 4294901760
    %1502 = vmatpush.msra.mxu0 %v1501
    %v1503 = vand.u32 %v48, 4294901760
    %1504 = vmatpush.msra.mxu0 %v1503
    %v1505 = vand.u32 %v47, 4294901760
    %1506 = vmatpush.msra.mxu0 %v1505
    %v1507 = vand.u32 %v46, 4294901760
    %1508 = vmatpush.msra.mxu0 %v1507
    %v1509 = vand.u32 %v45, 4294901760
    %1510 = vmatpush.msra.mxu0 %v1509
    %v1511 = vand.u32 %v44, 4294901760
    %1512 = vmatpush.msra.mxu0 %v1511
    %v1513 = vand.u32 %v167, 4294901760
    %v1514 = vsub.f32 %v167, %v1513
    %v1515 = vand.u32 %v1514, 4294901760
    %1516 = vmatmul.f32.gmra.mxu0 %v1515
    %v1517 = vpop.f32.mrf.mxu0
    %v1518 = vadd.f32 %v1404, %v1517
    %v1519 = vand.u32 %v129, 4294901760
    %v1520 = vsub.f32 %v129, %v1519
    %v1521 = vand.u32 %v1520, 4294901760
    %1522 = vmatmul.f32.gmra.mxu0 %v1521
    %v1523 = vpop.f32.mrf.mxu0
    %v1524 = vadd.f32 %v1409, %v1523
    %v1525 = vand.u32 %v168, 4294901760
    %v1526 = vsub.f32 %v168, %v1525
    %v1527 = vand.u32 %v1526, 4294901760
    %1528 = vmatmul.f32.gmra.mxu0 %v1527
    %v1529 = vpop.f32.mrf.mxu0
    %v1530 = vadd.f32 %v1414, %v1529
    %v1531 = vand.u32 %v132, 4294901760
    %v1532 = vsub.f32 %v132, %v1531
    %v1533 = vand.u32 %v1532, 4294901760
    %1534 = vmatmul.f32.gmra.mxu0 %v1533
    %v1535 = vpop.f32.mrf.mxu0
    %v1536 = vadd.f32 %v1419, %v1535
    %v1537 = vand.u32 %v169, 4294901760
    %v1538 = vsub.f32 %v169, %v1537
    %v1539 = vand.u32 %v1538, 4294901760
    %1540 = vmatmul.f32.gmra.mxu0 %v1539
    %v1541 = vpop.f32.mrf.mxu0
    %v1542 = vadd.f32 %v1424, %v1541
    %v1543 = vand.u32 %v135, 4294901760
    %v1544 = vsub.f32 %v135, %v1543
    %v1545 = vand.u32 %v1544, 4294901760
    %1546 = vmatmul.f32.gmra.mxu0 %v1545
    %v1547 = vpop.f32.mrf.mxu0
    %v1548 = vadd.f32 %v1429, %v1547
    %v1549 = vand.u32 %v170, 4294901760
    %v1550 = vsub.f32 %v170, %v1549
    %v1551 = vand.u32 %v1550, 4294901760
    %1552 = vmatmul.f32.gmra.mxu0 %v1551
    %v1553 = vpop.f32.mrf.mxu0
    %v1554 = vadd.f32 %v1434, %v1553
    %v1555 = vand.u32 %v138, 4294901760
    %v1556 = vsub.f32 %v138, %v1555
    %v1557 = vand.u32 %v1556, 4294901760
    %1558 = vmatmul.f32.gmra.mxu0 %v1557
    %v1559 = vpop.f32.mrf.mxu0
    %v1560 = vadd.f32 %v1439, %v1559
    %v1561 = vand.u32 %v171, 4294901760
    %v1562 = vsub.f32 %v171, %v1561
    %v1563 = vand.u32 %v1562, 4294901760
    %1564 = vmatmul.f32.gmra.mxu0 %v1563
    %v1565 = vpop.f32.mrf.mxu0
    %v1566 = vadd.f32 %v1444, %v1565
    %v1567 = vand.u32 %v141, 4294901760
    %v1568 = vsub.f32 %v141, %v1567
    %v1569 = vand.u32 %v1568, 4294901760
    %1570 = vmatmul.f32.gmra.mxu0 %v1569
    %v1571 = vpop.f32.mrf.mxu0
    %v1572 = vadd.f32 %v1449, %v1571
    %v1573 = vand.u32 %v172, 4294901760
    %v1574 = vsub.f32 %v172, %v1573
    %v1575 = vand.u32 %v1574, 4294901760
    %1576 = vmatmul.f32.gmra.mxu0 %v1575
    %v1577 = vpop.f32.mrf.mxu0
    %v1578 = vadd.f32 %v1454, %v1577
    %v1579 = vand.u32 %v144, 4294901760
    %v1580 = vsub.f32 %v144, %v1579
    %v1581 = vand.u32 %v1580, 4294901760
    %1582 = vmatmul.f32.gmra.mxu0 %v1581
    %v1583 = vpop.f32.mrf.mxu0
    %v1584 = vadd.f32 %v1459, %v1583
    %v1585 = vand.u32 %v173, 4294901760
    %v1586 = vsub.f32 %v173, %v1585
    %v1587 = vand.u32 %v1586, 4294901760
    %1588 = vmatmul.f32.gmra.mxu0 %v1587
    %v1589 = vpop.f32.mrf.mxu0
    %v1590 = vadd.f32 %v1464, %v1589
    %v1591 = vand.u32 %v147, 4294901760
    %v1592 = vsub.f32 %v147, %v1591
    %v1593 = vand.u32 %v1592, 4294901760
    %1594 = vmatmul.f32.gmra.mxu0 %v1593
    %v1595 = vpop.f32.mrf.mxu0
    %v1596 = vadd.f32 %v1469, %v1595
    %v1597 = vand.u32 %v174, 4294901760
    %v1598 = vsub.f32 %v174, %v1597
    %v1599 = vand.u32 %v1598, 4294901760
    %1600 = vmatmul.f32.gmra.mxu0 %v1599
    %v1601 = vpop.f32.mrf.mxu0
    %v1602 = vadd.f32 %v1474, %v1601
    %v1603 = vand.u32 %v150, 4294901760
    %v1604 = vsub.f32 %v150, %v1603
    %v1605 = vand.u32 %v1604, 4294901760
    %1606 = vmatmul.f32.gmra.mxu0 %v1605
    %v1607 = vpop.f32.mrf.mxu0
    %v1608 = vadd.f32 %v1479, %v1607
    %1609 = vdwg.mxu0
    %v1610 = vand.u32 %v59, 4294901760
    %v1611 = vsub.f32 %v59, %v1610
    %v1612 = vand.u32 %v1611, 4294901760
    %1613 = vmatpush.msra.mxu0 %v1612
    %v1614 = vand.u32 %v58, 4294901760
    %v1615 = vsub.f32 %v58, %v1614
    %v1616 = vand.u32 %v1615, 4294901760
    %1617 = vmatpush.msra.mxu0 %v1616
    %v1618 = vand.u32 %v57, 4294901760
    %v1619 = vsub.f32 %v57, %v1618
    %v1620 = vand.u32 %v1619, 4294901760
    %1621 = vmatpush.msra.mxu0 %v1620
    %v1622 = vand.u32 %v56, 4294901760
    %v1623 = vsub.f32 %v56, %v1622
    %v1624 = vand.u32 %v1623, 4294901760
    %1625 = vmatpush.msra.mxu0 %v1624
    %v1626 = vand.u32 %v55, 4294901760
    %v1627 = vsub.f32 %v55, %v1626
    %v1628 = vand.u32 %v1627, 4294901760
    %1629 = vmatpush.msra.mxu0 %v1628
    %v1630 = vand.u32 %v54, 4294901760
    %v1631 = vsub.f32 %v54, %v1630
    %v1632 = vand.u32 %v1631, 4294901760
    %1633 = vmatpush.msra.mxu0 %v1632
    %v1634 = vand.u32 %v53, 4294901760
    %v1635 = vsub.f32 %v53, %v1634
    %v1636 = vand.u32 %v1635, 4294901760
    %1637 = vmatpush.msra.mxu0 %v1636
    %v1638 = vand.u32 %v52, 4294901760
    %v1639 = vsub.f32 %v52, %v1638
    %v1640 = vand.u32 %v1639, 4294901760
    %1641 = vmatpush.msra.mxu0 %v1640
    %v1642 = vand.u32 %v51, 4294901760
    %v1643 = vsub.f32 %v51, %v1642
    %v1644 = vand.u32 %v1643, 4294901760
    %1645 = vmatpush.msra.mxu0 %v1644
    %v1646 = vand.u32 %v50, 4294901760
    %v1647 = vsub.f32 %v50, %v1646
    %v1648 = vand.u32 %v1647, 4294901760
    %1649 = vmatpush.msra.mxu0 %v1648
    %v1650 = vand.u32 %v49, 4294901760
    %v1651 = vsub.f32 %v49, %v1650
    %v1652 = vand.u32 %v1651, 4294901760
    %1653 = vmatpush.msra.mxu0 %v1652
    %v1654 = vand.u32 %v48, 4294901760
    %v1655 = vsub.f32 %v48, %v1654
    %v1656 = vand.u32 %v1655, 4294901760
    %1657 = vmatpush.msra.mxu0 %v1656
    %v1658 = vand.u32 %v47, 4294901760
    %v1659 = vsub.f32 %v47, %v1658
    %v1660 = vand.u32 %v1659, 4294901760
    %1661 = vmatpush.msra.mxu0 %v1660
    %v1662 = vand.u32 %v46, 4294901760
    %v1663 = vsub.f32 %v46, %v1662
    %v1664 = vand.u32 %v1663, 4294901760
    %1665 = vmatpush.msra.mxu0 %v1664
    %v1666 = vand.u32 %v45, 4294901760
    %v1667 = vsub.f32 %v45, %v1666
    %v1668 = vand.u32 %v1667, 4294901760
    %1669 = vmatpush.msra.mxu0 %v1668
    %v1670 = vand.u32 %v44, 4294901760
    %v1671 = vsub.f32 %v44, %v1670
    %v1672 = vand.u32 %v1671, 4294901760
    %1673 = vmatpush.msra.mxu0 %v1672
    %v1674 = vand.u32 %v167, 4294901760
    %1675 = vmatmul.f32.gmra.mxu0 %v1674
    %v1676 = vpop.f32.mrf.mxu0
    %v1677 = vadd.f32 %v1518, %v1676
    %v1678 = vand.u32 %v129, 4294901760
    %1679 = vmatmul.f32.gmra.mxu0 %v1678
    %v1680 = vpop.f32.mrf.mxu0
    %v1681 = vadd.f32 %v1524, %v1680
    %v1682 = vand.u32 %v168, 4294901760
    %1683 = vmatmul.f32.gmra.mxu0 %v1682
    %v1684 = vpop.f32.mrf.mxu0
    %v1685 = vadd.f32 %v1530, %v1684
    %v1686 = vand.u32 %v132, 4294901760
    %1687 = vmatmul.f32.gmra.mxu0 %v1686
    %v1688 = vpop.f32.mrf.mxu0
    %v1689 = vadd.f32 %v1536, %v1688
    %v1690 = vand.u32 %v169, 4294901760
    %1691 = vmatmul.f32.gmra.mxu0 %v1690
    %v1692 = vpop.f32.mrf.mxu0
    %v1693 = vadd.f32 %v1542, %v1692
    %v1694 = vand.u32 %v135, 4294901760
    %1695 = vmatmul.f32.gmra.mxu0 %v1694
    %v1696 = vpop.f32.mrf.mxu0
    %v1697 = vadd.f32 %v1548, %v1696
    %v1698 = vand.u32 %v170, 4294901760
    %1699 = vmatmul.f32.gmra.mxu0 %v1698
    %v1700 = vpop.f32.mrf.mxu0
    %v1701 = vadd.f32 %v1554, %v1700
    %v1702 = vand.u32 %v138, 4294901760
    %1703 = vmatmul.f32.gmra.mxu0 %v1702
    %v1704 = vpop.f32.mrf.mxu0
    %v1705 = vadd.f32 %v1560, %v1704
    %v1706 = vand.u32 %v171, 4294901760
    %1707 = vmatmul.f32.gmra.mxu0 %v1706
    %v1708 = vpop.f32.mrf.mxu0
    %v1709 = vadd.f32 %v1566, %v1708
    %v1710 = vand.u32 %v141, 4294901760
    %1711 = vmatmul.f32.gmra.mxu0 %v1710
    %v1712 = vpop.f32.mrf.mxu0
    %v1713 = vadd.f32 %v1572, %v1712
    %v1714 = vand.u32 %v172, 4294901760
    %1715 = vmatmul.f32.gmra.mxu0 %v1714
    %v1716 = vpop.f32.mrf.mxu0
    %v1717 = vadd.f32 %v1578, %v1716
    %v1718 = vand.u32 %v144, 4294901760
    %1719 = vmatmul.f32.gmra.mxu0 %v1718
    %v1720 = vpop.f32.mrf.mxu0
    %v1721 = vadd.f32 %v1584, %v1720
    %v1722 = vand.u32 %v173, 4294901760
    %1723 = vmatmul.f32.gmra.mxu0 %v1722
    %v1724 = vpop.f32.mrf.mxu0
    %v1725 = vadd.f32 %v1590, %v1724
    %v1726 = vand.u32 %v147, 4294901760
    %1727 = vmatmul.f32.gmra.mxu0 %v1726
    %v1728 = vpop.f32.mrf.mxu0
    %v1729 = vadd.f32 %v1596, %v1728
    %v1730 = vand.u32 %v174, 4294901760
    %1731 = vmatmul.f32.gmra.mxu0 %v1730
    %v1732 = vpop.f32.mrf.mxu0
    %v1733 = vadd.f32 %v1602, %v1732
    %v1734 = vand.u32 %v150, 4294901760
    %1735 = vmatmul.f32.gmra.mxu0 %v1734
    %v1736 = vpop.f32.mrf.mxu0
    %v1737 = vadd.f32 %v1608, %v1736
    %1738 = vdwg.mxu0
    %v1739 = vand.u32 %v59, 4294901760
    %1740 = vmatpush.msra.mxu0 %v1739
    %v1741 = vand.u32 %v58, 4294901760
    %1742 = vmatpush.msra.mxu0 %v1741
    %v1743 = vand.u32 %v57, 4294901760
    %1744 = vmatpush.msra.mxu0 %v1743
    %v1745 = vand.u32 %v56, 4294901760
    %1746 = vmatpush.msra.mxu0 %v1745
    %v1747 = vand.u32 %v55, 4294901760
    %1748 = vmatpush.msra.mxu0 %v1747
    %v1749 = vand.u32 %v54, 4294901760
    %1750 = vmatpush.msra.mxu0 %v1749
    %v1751 = vand.u32 %v53, 4294901760
    %1752 = vmatpush.msra.mxu0 %v1751
    %v1753 = vand.u32 %v52, 4294901760
    %1754 = vmatpush.msra.mxu0 %v1753
    %v1755 = vand.u32 %v51, 4294901760
    %1756 = vmatpush.msra.mxu0 %v1755
    %v1757 = vand.u32 %v50, 4294901760
    %1758 = vmatpush.msra.mxu0 %v1757
    %v1759 = vand.u32 %v49, 4294901760
    %1760 = vmatpush.msra.mxu0 %v1759
    %v1761 = vand.u32 %v48, 4294901760
    %1762 = vmatpush.msra.mxu0 %v1761
    %v1763 = vand.u32 %v47, 4294901760
    %1764 = vmatpush.msra.mxu0 %v1763
    %v1765 = vand.u32 %v46, 4294901760
    %1766 = vmatpush.msra.mxu0 %v1765
    %v1767 = vand.u32 %v45, 4294901760
    %1768 = vmatpush.msra.mxu0 %v1767
    %v1769 = vand.u32 %v44, 4294901760
    %1770 = vmatpush.msra.mxu0 %v1769
    %v1771 = vand.u32 %v167, 4294901760
    %1772 = vmatmul.f32.gmra.mxu0 %v1771
    %v1773 = vpop.f32.mrf.mxu0
    %v1774 = vadd.f32 %v1677, %v1773
    %v1775 = vand.u32 %v129, 4294901760
    %1776 = vmatmul.f32.gmra.mxu0 %v1775
    %v1777 = vpop.f32.mrf.mxu0
    %v1778 = vadd.f32 %v1681, %v1777
    %v1779 = vand.u32 %v168, 4294901760
    %1780 = vmatmul.f32.gmra.mxu0 %v1779
    %v1781 = vpop.f32.mrf.mxu0
    %v1782 = vadd.f32 %v1685, %v1781
    %v1783 = vand.u32 %v132, 4294901760
    %1784 = vmatmul.f32.gmra.mxu0 %v1783
    %v1785 = vpop.f32.mrf.mxu0
    %v1786 = vadd.f32 %v1689, %v1785
    %v1787 = vand.u32 %v169, 4294901760
    %1788 = vmatmul.f32.gmra.mxu0 %v1787
    %v1789 = vpop.f32.mrf.mxu0
    %v1790 = vadd.f32 %v1693, %v1789
    %v1791 = vand.u32 %v135, 4294901760
    %1792 = vmatmul.f32.gmra.mxu0 %v1791
    %v1793 = vpop.f32.mrf.mxu0
    %v1794 = vadd.f32 %v1697, %v1793
    %v1795 = vand.u32 %v170, 4294901760
    %1796 = vmatmul.f32.gmra.mxu0 %v1795
    %v1797 = vpop.f32.mrf.mxu0
    %v1798 = vadd.f32 %v1701, %v1797
    %v1799 = vand.u32 %v138, 4294901760
    %1800 = vmatmul.f32.gmra.mxu0 %v1799
    %v1801 = vpop.f32.mrf.mxu0
    %v1802 = vadd.f32 %v1705, %v1801
    %v1803 = vand.u32 %v171, 4294901760
    %1804 = vmatmul.f32.gmra.mxu0 %v1803
    %v1805 = vpop.f32.mrf.mxu0
    %v1806 = vadd.f32 %v1709, %v1805
    %v1807 = vand.u32 %v141, 4294901760
    %1808 = vmatmul.f32.gmra.mxu0 %v1807
    %v1809 = vpop.f32.mrf.mxu0
    %v1810 = vadd.f32 %v1713, %v1809
    %v1811 = vand.u32 %v172, 4294901760
    %1812 = vmatmul.f32.gmra.mxu0 %v1811
    %v1813 = vpop.f32.mrf.mxu0
    %v1814 = vadd.f32 %v1717, %v1813
    %v1815 = vand.u32 %v144, 4294901760
    %1816 = vmatmul.f32.gmra.mxu0 %v1815
    %v1817 = vpop.f32.mrf.mxu0
    %v1818 = vadd.f32 %v1721, %v1817
    %v1819 = vand.u32 %v173, 4294901760
    %1820 = vmatmul.f32.gmra.mxu0 %v1819
    %v1821 = vpop.f32.mrf.mxu0
    %v1822 = vadd.f32 %v1725, %v1821
    %v1823 = vand.u32 %v147, 4294901760
    %1824 = vmatmul.f32.gmra.mxu0 %v1823
    %v1825 = vpop.f32.mrf.mxu0
    %v1826 = vadd.f32 %v1729, %v1825
    %v1827 = vand.u32 %v174, 4294901760
    %1828 = vmatmul.f32.gmra.mxu0 %v1827
    %v1829 = vpop.f32.mrf.mxu0
    %v1830 = vadd.f32 %v1733, %v1829
    %v1831 = vand.u32 %v150, 4294901760
    %1832 = vmatmul.f32.gmra.mxu0 %v1831
    %v1833 = vpop.f32.mrf.mxu0
    %v1834 = vadd.f32 %v1737, %v1833
    %1835 = vdwg.mxu0
    %v1836 = vand.u32 %v93, 4294901760
    %1837 = vmatpush.msra.mxu0 %v1836
    %v1838 = vand.u32 %v92, 4294901760
    %1839 = vmatpush.msra.mxu0 %v1838
    %v1840 = vand.u32 %v91, 4294901760
    %1841 = vmatpush.msra.mxu0 %v1840
    %v1842 = vand.u32 %v90, 4294901760
    %1843 = vmatpush.msra.mxu0 %v1842
    %v1844 = vand.u32 %v89, 4294901760
    %1845 = vmatpush.msra.mxu0 %v1844
    %v1846 = vand.u32 %v88, 4294901760
    %1847 = vmatpush.msra.mxu0 %v1846
    %v1848 = vand.u32 %v87, 4294901760
    %1849 = vmatpush.msra.mxu0 %v1848
    %v1850 = vand.u32 %v86, 4294901760
    %1851 = vmatpush.msra.mxu0 %v1850
    %v1852 = vand.u32 %v85, 4294901760
    %1853 = vmatpush.msra.mxu0 %v1852
    %v1854 = vand.u32 %v84, 4294901760
    %1855 = vmatpush.msra.mxu0 %v1854
    %v1856 = vand.u32 %v83, 4294901760
    %1857 = vmatpush.msra.mxu0 %v1856
    %v1858 = vand.u32 %v82, 4294901760
    %1859 = vmatpush.msra.mxu0 %v1858
    %v1860 = vand.u32 %v81, 4294901760
    %1861 = vmatpush.msra.mxu0 %v1860
    %v1862 = vand.u32 %v80, 4294901760
    %1863 = vmatpush.msra.mxu0 %v1862
    %v1864 = vand.u32 %v79, 4294901760
    %1865 = vmatpush.msra.mxu0 %v1864
    %v1866 = vand.u32 %v78, 4294901760
    %1867 = vmatpush.msra.mxu0 %v1866
    %v1868 = vand.u32 %v178, 4294901760
    %v1869 = vsub.f32 %v178, %v1868
    %v1870 = vand.u32 %v1869, 4294901760
    %v1871 = vsub.f32 %v1869, %v1870
    %v1872 = vand.u32 %v1871, 4294901760
    %1873 = vmatmul.f32.gmra.mxu0 %v1872
    %v1874 = vpop.f32.mrf.mxu0
    %v1875 = vadd.f32 0.0, %v1874
    %v1876 = vand.u32 %v216, 4294901760
    %v1877 = vsub.f32 %v216, %v1876
    %v1878 = vand.u32 %v1877, 4294901760
    %v1879 = vsub.f32 %v1877, %v1878
    %v1880 = vand.u32 %v1879, 4294901760
    %1881 = vmatmul.f32.gmra.mxu0 %v1880
    %v1882 = vpop.f32.mrf.mxu0
    %v1883 = vadd.f32 0.0, %v1882
    %v1884 = vand.u32 %v181, 4294901760
    %v1885 = vsub.f32 %v181, %v1884
    %v1886 = vand.u32 %v1885, 4294901760
    %v1887 = vsub.f32 %v1885, %v1886
    %v1888 = vand.u32 %v1887, 4294901760
    %1889 = vmatmul.f32.gmra.mxu0 %v1888
    %v1890 = vpop.f32.mrf.mxu0
    %v1891 = vadd.f32 0.0, %v1890
    %v1892 = vand.u32 %v217, 4294901760
    %v1893 = vsub.f32 %v217, %v1892
    %v1894 = vand.u32 %v1893, 4294901760
    %v1895 = vsub.f32 %v1893, %v1894
    %v1896 = vand.u32 %v1895, 4294901760
    %1897 = vmatmul.f32.gmra.mxu0 %v1896
    %v1898 = vpop.f32.mrf.mxu0
    %v1899 = vadd.f32 0.0, %v1898
    %v1900 = vand.u32 %v184, 4294901760
    %v1901 = vsub.f32 %v184, %v1900
    %v1902 = vand.u32 %v1901, 4294901760
    %v1903 = vsub.f32 %v1901, %v1902
    %v1904 = vand.u32 %v1903, 4294901760
    %1905 = vmatmul.f32.gmra.mxu0 %v1904
    %v1906 = vpop.f32.mrf.mxu0
    %v1907 = vadd.f32 0.0, %v1906
    %v1908 = vand.u32 %v218, 4294901760
    %v1909 = vsub.f32 %v218, %v1908
    %v1910 = vand.u32 %v1909, 4294901760
    %v1911 = vsub.f32 %v1909, %v1910
    %v1912 = vand.u32 %v1911, 4294901760
    %1913 = vmatmul.f32.gmra.mxu0 %v1912
    %v1914 = vpop.f32.mrf.mxu0
    %v1915 = vadd.f32 0.0, %v1914
    %v1916 = vand.u32 %v187, 4294901760
    %v1917 = vsub.f32 %v187, %v1916
    %v1918 = vand.u32 %v1917, 4294901760
    %v1919 = vsub.f32 %v1917, %v1918
    %v1920 = vand.u32 %v1919, 4294901760
    %1921 = vmatmul.f32.gmra.mxu0 %v1920
    %v1922 = vpop.f32.mrf.mxu0
    %v1923 = vadd.f32 0.0, %v1922
    %v1924 = vand.u32 %v219, 4294901760
    %v1925 = vsub.f32 %v219, %v1924
    %v1926 = vand.u32 %v1925, 4294901760
    %v1927 = vsub.f32 %v1925, %v1926
    %v1928 = vand.u32 %v1927, 4294901760
    %1929 = vmatmul.f32.gmra.mxu0 %v1928
    %v1930 = vpop.f32.mrf.mxu0
    %v1931 = vadd.f32 0.0, %v1930
    %v1932 = vand.u32 %v190, 4294901760
    %v1933 = vsub.f32 %v190, %v1932
    %v1934 = vand.u32 %v1933, 4294901760
    %v1935 = vsub.f32 %v1933, %v1934
    %v1936 = vand.u32 %v1935, 4294901760
    %1937 = vmatmul.f32.gmra.mxu0 %v1936
    %v1938 = vpop.f32.mrf.mxu0
    %v1939 = vadd.f32 0.0, %v1938
    %v1940 = vand.u32 %v220, 4294901760
    %v1941 = vsub.f32 %v220, %v1940
    %v1942 = vand.u32 %v1941, 4294901760
    %v1943 = vsub.f32 %v1941, %v1942
    %v1944 = vand.u32 %v1943, 4294901760
    %1945 = vmatmul.f32.gmra.mxu0 %v1944
    %v1946 = vpop.f32.mrf.mxu0
    %v1947 = vadd.f32 0.0, %v1946
    %v1948 = vand.u32 %v193, 4294901760
    %v1949 = vsub.f32 %v193, %v1948
    %v1950 = vand.u32 %v1949, 4294901760
    %v1951 = vsub.f32 %v1949, %v1950
    %v1952 = vand.u32 %v1951, 4294901760
    %1953 = vmatmul.f32.gmra.mxu0 %v1952
    %v1954 = vpop.f32.mrf.mxu0
    %v1955 = vadd.f32 0.0, %v1954
    %v1956 = vand.u32 %v221, 4294901760
    %v1957 = vsub.f32 %v221, %v1956
    %v1958 = vand.u32 %v1957, 4294901760
    %v1959 = vsub.f32 %v1957, %v1958
    %v1960 = vand.u32 %v1959, 4294901760
    %1961 = vmatmul.f32.gmra.mxu0 %v1960
    %v1962 = vpop.f32.mrf.mxu0
    %v1963 = vadd.f32 0.0, %v1962
    %v1964 = vand.u32 %v196, 4294901760
    %v1965 = vsub.f32 %v196, %v1964
    %v1966 = vand.u32 %v1965, 4294901760
    %v1967 = vsub.f32 %v1965, %v1966
    %v1968 = vand.u32 %v1967, 4294901760
    %1969 = vmatmul.f32.gmra.mxu0 %v1968
    %v1970 = vpop.f32.mrf.mxu0
    %v1971 = vadd.f32 0.0, %v1970
    %v1972 = vand.u32 %v222, 4294901760
    %v1973 = vsub.f32 %v222, %v1972
    %v1974 = vand.u32 %v1973, 4294901760
    %v1975 = vsub.f32 %v1973, %v1974
    %v1976 = vand.u32 %v1975, 4294901760
    %1977 = vmatmul.f32.gmra.mxu0 %v1976
    %v1978 = vpop.f32.mrf.mxu0
    %v1979 = vadd.f32 0.0, %v1978
    %v1980 = vand.u32 %v199, 4294901760
    %v1981 = vsub.f32 %v199, %v1980
    %v1982 = vand.u32 %v1981, 4294901760
    %v1983 = vsub.f32 %v1981, %v1982
    %v1984 = vand.u32 %v1983, 4294901760
    %1985 = vmatmul.f32.gmra.mxu0 %v1984
    %v1986 = vpop.f32.mrf.mxu0
    %v1987 = vadd.f32 0.0, %v1986
    %v1988 = vand.u32 %v223, 4294901760
    %v1989 = vsub.f32 %v223, %v1988
    %v1990 = vand.u32 %v1989, 4294901760
    %v1991 = vsub.f32 %v1989, %v1990
    %v1992 = vand.u32 %v1991, 4294901760
    %1993 = vmatmul.f32.gmra.mxu0 %v1992
    %v1994 = vpop.f32.mrf.mxu0
    %v1995 = vadd.f32 0.0, %v1994
    %1996 = vdwg.mxu0
    %v1997 = vand.u32 %v93, 4294901760
    %v1998 = vsub.f32 %v93, %v1997
    %v1999 = vand.u32 %v1998, 4294901760
    %v2000 = vsub.f32 %v1998, %v1999
    %v2001 = vand.u32 %v2000, 4294901760
    %2002 = vmatpush.msra.mxu0 %v2001
    %v2003 = vand.u32 %v92, 4294901760
    %v2004 = vsub.f32 %v92, %v2003
    %v2005 = vand.u32 %v2004, 4294901760
    %v2006 = vsub.f32 %v2004, %v2005
    %v2007 = vand.u32 %v2006, 4294901760
    %2008 = vmatpush.msra.mxu0 %v2007
    %v2009 = vand.u32 %v91, 4294901760
    %v2010 = vsub.f32 %v91, %v2009
    %v2011 = vand.u32 %v2010, 4294901760
    %v2012 = vsub.f32 %v2010, %v2011
    %v2013 = vand.u32 %v2012, 4294901760
    %2014 = vmatpush.msra.mxu0 %v2013
    %v2015 = vand.u32 %v90, 4294901760
    %v2016 = vsub.f32 %v90, %v2015
    %v2017 = vand.u32 %v2016, 4294901760
    %v2018 = vsub.f32 %v2016, %v2017
    %v2019 = vand.u32 %v2018, 4294901760
    %2020 = vmatpush.msra.mxu0 %v2019
    %v2021 = vand.u32 %v89, 4294901760
    %v2022 = vsub.f32 %v89, %v2021
    %v2023 = vand.u32 %v2022, 4294901760
    %v2024 = vsub.f32 %v2022, %v2023
    %v2025 = vand.u32 %v2024, 4294901760
    %2026 = vmatpush.msra.mxu0 %v2025
    %v2027 = vand.u32 %v88, 4294901760
    %v2028 = vsub.f32 %v88, %v2027
    %v2029 = vand.u32 %v2028, 4294901760
    %v2030 = vsub.f32 %v2028, %v2029
    %v2031 = vand.u32 %v2030, 4294901760
    %2032 = vmatpush.msra.mxu0 %v2031
    %v2033 = vand.u32 %v87, 4294901760
    %v2034 = vsub.f32 %v87, %v2033
    %v2035 = vand.u32 %v2034, 4294901760
    %v2036 = vsub.f32 %v2034, %v2035
    %v2037 = vand.u32 %v2036, 4294901760
    %2038 = vmatpush.msra.mxu0 %v2037
    %v2039 = vand.u32 %v86, 4294901760
    %v2040 = vsub.f32 %v86, %v2039
    %v2041 = vand.u32 %v2040, 4294901760
    %v2042 = vsub.f32 %v2040, %v2041
    %v2043 = vand.u32 %v2042, 4294901760
    %2044 = vmatpush.msra.mxu0 %v2043
    %v2045 = vand.u32 %v85, 4294901760
    %v2046 = vsub.f32 %v85, %v2045
    %v2047 = vand.u32 %v2046, 4294901760
    %v2048 = vsub.f32 %v2046, %v2047
    %v2049 = vand.u32 %v2048, 4294901760
    %2050 = vmatpush.msra.mxu0 %v2049
    %v2051 = vand.u32 %v84, 4294901760
    %v2052 = vsub.f32 %v84, %v2051
    %v2053 = vand.u32 %v2052, 4294901760
    %v2054 = vsub.f32 %v2052, %v2053
    %v2055 = vand.u32 %v2054, 4294901760
    %2056 = vmatpush.msra.mxu0 %v2055
    %v2057 = vand.u32 %v83, 4294901760
    %v2058 = vsub.f32 %v83, %v2057
    %v2059 = vand.u32 %v2058, 4294901760
    %v2060 = vsub.f32 %v2058, %v2059
    %v2061 = vand.u32 %v2060, 4294901760
    %2062 = vmatpush.msra.mxu0 %v2061
    %v2063 = vand.u32 %v82, 4294901760
    %v2064 = vsub.f32 %v82, %v2063
    %v2065 = vand.u32 %v2064, 4294901760
    %v2066 = vsub.f32 %v2064, %v2065
    %v2067 = vand.u32 %v2066, 4294901760
    %2068 = vmatpush.msra.mxu0 %v2067
    %v2069 = vand.u32 %v81, 4294901760
    %v2070 = vsub.f32 %v81, %v2069
    %v2071 = vand.u32 %v2070, 4294901760
    %v2072 = vsub.f32 %v2070, %v2071
    %v2073 = vand.u32 %v2072, 4294901760
    %2074 = vmatpush.msra.mxu0 %v2073
    %v2075 = vand.u32 %v80, 4294901760
    %v2076 = vsub.f32 %v80, %v2075
    %v2077 = vand.u32 %v2076, 4294901760
    %v2078 = vsub.f32 %v2076, %v2077
    %v2079 = vand.u32 %v2078, 4294901760
    %2080 = vmatpush.msra.mxu0 %v2079
    %v2081 = vand.u32 %v79, 4294901760
    %v2082 = vsub.f32 %v79, %v2081
    %v2083 = vand.u32 %v2082, 4294901760
    %v2084 = vsub.f32 %v2082, %v2083
    %v2085 = vand.u32 %v2084, 4294901760
    %2086 = vmatpush.msra.mxu0 %v2085
    %v2087 = vand.u32 %v78, 4294901760
    %v2088 = vsub.f32 %v78, %v2087
    %v2089 = vand.u32 %v2088, 4294901760
    %v2090 = vsub.f32 %v2088, %v2089
    %v2091 = vand.u32 %v2090, 4294901760
    %2092 = vmatpush.msra.mxu0 %v2091
    %v2093 = vand.u32 %v178, 4294901760
    %2094 = vmatmul.f32.gmra.mxu0 %v2093
    %v2095 = vpop.f32.mrf.mxu0
    %v2096 = vadd.f32 %v1875, %v2095
    %v2097 = vand.u32 %v216, 4294901760
    %2098 = vmatmul.f32.gmra.mxu0 %v2097
    %v2099 = vpop.f32.mrf.mxu0
    %v2100 = vadd.f32 %v1883, %v2099
    %v2101 = vand.u32 %v181, 4294901760
    %2102 = vmatmul.f32.gmra.mxu0 %v2101
    %v2103 = vpop.f32.mrf.mxu0
    %v2104 = vadd.f32 %v1891, %v2103
    %v2105 = vand.u32 %v217, 4294901760
    %2106 = vmatmul.f32.gmra.mxu0 %v2105
    %v2107 = vpop.f32.mrf.mxu0
    %v2108 = vadd.f32 %v1899, %v2107
    %v2109 = vand.u32 %v184, 4294901760
    %2110 = vmatmul.f32.gmra.mxu0 %v2109
    %v2111 = vpop.f32.mrf.mxu0
    %v2112 = vadd.f32 %v1907, %v2111
    %v2113 = vand.u32 %v218, 4294901760
    %2114 = vmatmul.f32.gmra.mxu0 %v2113
    %v2115 = vpop.f32.mrf.mxu0
    %v2116 = vadd.f32 %v1915, %v2115
    %v2117 = vand.u32 %v187, 4294901760
    %2118 = vmatmul.f32.gmra.mxu0 %v2117
    %v2119 = vpop.f32.mrf.mxu0
    %v2120 = vadd.f32 %v1923, %v2119
    %v2121 = vand.u32 %v219, 4294901760
    %2122 = vmatmul.f32.gmra.mxu0 %v2121
    %v2123 = vpop.f32.mrf.mxu0
    %v2124 = vadd.f32 %v1931, %v2123
    %v2125 = vand.u32 %v190, 4294901760
    %2126 = vmatmul.f32.gmra.mxu0 %v2125
    %v2127 = vpop.f32.mrf.mxu0
    %v2128 = vadd.f32 %v1939, %v2127
    %v2129 = vand.u32 %v220, 4294901760
    %2130 = vmatmul.f32.gmra.mxu0 %v2129
    %v2131 = vpop.f32.mrf.mxu0
    %v2132 = vadd.f32 %v1947, %v2131
    %v2133 = vand.u32 %v193, 4294901760
    %2134 = vmatmul.f32.gmra.mxu0 %v2133
    %v2135 = vpop.f32.mrf.mxu0
    %v2136 = vadd.f32 %v1955, %v2135
    %v2137 = vand.u32 %v221, 4294901760
    %2138 = vmatmul.f32.gmra.mxu0 %v2137
    %v2139 = vpop.f32.mrf.mxu0
    %v2140 = vadd.f32 %v1963, %v2139
    %v2141 = vand.u32 %v196, 4294901760
    %2142 = vmatmul.f32.gmra.mxu0 %v2141
    %v2143 = vpop.f32.mrf.mxu0
    %v2144 = vadd.f32 %v1971, %v2143
    %v2145 = vand.u32 %v222, 4294901760
    %2146 = vmatmul.f32.gmra.mxu0 %v2145
    %v2147 = vpop.f32.mrf.mxu0
    %v2148 = vadd.f32 %v1979, %v2147
    %v2149 = vand.u32 %v199, 4294901760
    %2150 = vmatmul.f32.gmra.mxu0 %v2149
    %v2151 = vpop.f32.mrf.mxu0
    %v2152 = vadd.f32 %v1987, %v2151
    %v2153 = vand.u32 %v223, 4294901760
    %2154 = vmatmul.f32.gmra.mxu0 %v2153
    %v2155 = vpop.f32.mrf.mxu0
    %v2156 = vadd.f32 %v1995, %v2155
    %2157 = vdwg.mxu0
    %v2158 = vand.u32 %v93, 4294901760
    %v2159 = vsub.f32 %v93, %v2158
    %2160 = vmatpush.msra.mxu0 %v2159
    %v2161 = vand.u32 %v92, 4294901760
    %v2162 = vsub.f32 %v92, %v2161
    %2163 = vmatpush.msra.mxu0 %v2162
    %v2164 = vand.u32 %v91, 4294901760
    %v2165 = vsub.f32 %v91, %v2164
    %2166 = vmatpush.msra.mxu0 %v2165
    %v2167 = vand.u32 %v90, 4294901760
    %v2168 = vsub.f32 %v90, %v2167
    %2169 = vmatpush.msra.mxu0 %v2168
    %v2170 = vand.u32 %v89, 4294901760
    %v2171 = vsub.f32 %v89, %v2170
    %2172 = vmatpush.msra.mxu0 %v2171
    %v2173 = vand.u32 %v88, 4294901760
    %v2174 = vsub.f32 %v88, %v2173
    %2175 = vmatpush.msra.mxu0 %v2174
    %v2176 = vand.u32 %v87, 4294901760
    %v2177 = vsub.f32 %v87, %v2176
    %2178 = vmatpush.msra.mxu0 %v2177
    %v2179 = vand.u32 %v86, 4294901760
    %v2180 = vsub.f32 %v86, %v2179
    %2181 = vmatpush.msra.mxu0 %v2180
    %v2182 = vand.u32 %v85, 4294901760
    %v2183 = vsub.f32 %v85, %v2182
    %2184 = vmatpush.msra.mxu0 %v2183
    %v2185 = vand.u32 %v84, 4294901760
    %v2186 = vsub.f32 %v84, %v2185
    %2187 = vmatpush.msra.mxu0 %v2186
    %v2188 = vand.u32 %v83, 4294901760
    %v2189 = vsub.f32 %v83, %v2188
    %2190 = vmatpush.msra.mxu0 %v2189
    %v2191 = vand.u32 %v82, 4294901760
    %v2192 = vsub.f32 %v82, %v2191
    %2193 = vmatpush.msra.mxu0 %v2192
    %v2194 = vand.u32 %v81, 4294901760
    %v2195 = vsub.f32 %v81, %v2194
    %2196 = vmatpush.msra.mxu0 %v2195
    %v2197 = vand.u32 %v80, 4294901760
    %v2198 = vsub.f32 %v80, %v2197
    %2199 = vmatpush.msra.mxu0 %v2198
    %v2200 = vand.u32 %v79, 4294901760
    %v2201 = vsub.f32 %v79, %v2200
    %2202 = vmatpush.msra.mxu0 %v2201
    %v2203 = vand.u32 %v78, 4294901760
    %v2204 = vsub.f32 %v78, %v2203
    %2205 = vmatpush.msra.mxu0 %v2204
    %v2206 = vand.u32 %v178, 4294901760
    %v2207 = vsub.f32 %v178, %v2206
    %2208 = vmatmul.f32.gmra.mxu0 %v2207
    %v2209 = vpop.f32.mrf.mxu0
    %v2210 = vadd.f32 %v2096, %v2209
    %v2211 = vand.u32 %v216, 4294901760
    %v2212 = vsub.f32 %v216, %v2211
    %2213 = vmatmul.f32.gmra.mxu0 %v2212
    %v2214 = vpop.f32.mrf.mxu0
    %v2215 = vadd.f32 %v2100, %v2214
    %v2216 = vand.u32 %v181, 4294901760
    %v2217 = vsub.f32 %v181, %v2216
    %2218 = vmatmul.f32.gmra.mxu0 %v2217
    %v2219 = vpop.f32.mrf.mxu0
    %v2220 = vadd.f32 %v2104, %v2219
    %v2221 = vand.u32 %v217, 4294901760
    %v2222 = vsub.f32 %v217, %v2221
    %2223 = vmatmul.f32.gmra.mxu0 %v2222
    %v2224 = vpop.f32.mrf.mxu0
    %v2225 = vadd.f32 %v2108, %v2224
    %v2226 = vand.u32 %v184, 4294901760
    %v2227 = vsub.f32 %v184, %v2226
    %2228 = vmatmul.f32.gmra.mxu0 %v2227
    %v2229 = vpop.f32.mrf.mxu0
    %v2230 = vadd.f32 %v2112, %v2229
    %v2231 = vand.u32 %v218, 4294901760
    %v2232 = vsub.f32 %v218, %v2231
    %2233 = vmatmul.f32.gmra.mxu0 %v2232
    %v2234 = vpop.f32.mrf.mxu0
    %v2235 = vadd.f32 %v2116, %v2234
    %v2236 = vand.u32 %v187, 4294901760
    %v2237 = vsub.f32 %v187, %v2236
    %2238 = vmatmul.f32.gmra.mxu0 %v2237
    %v2239 = vpop.f32.mrf.mxu0
    %v2240 = vadd.f32 %v2120, %v2239
    %v2241 = vand.u32 %v219, 4294901760
    %v2242 = vsub.f32 %v219, %v2241
    %2243 = vmatmul.f32.gmra.mxu0 %v2242
    %v2244 = vpop.f32.mrf.mxu0
    %v2245 = vadd.f32 %v2124, %v2244
    %v2246 = vand.u32 %v190, 4294901760
    %v2247 = vsub.f32 %v190, %v2246
    %2248 = vmatmul.f32.gmra.mxu0 %v2247
    %v2249 = vpop.f32.mrf.mxu0
    %v2250 = vadd.f32 %v2128, %v2249
    %v2251 = vand.u32 %v220, 4294901760
    %v2252 = vsub.f32 %v220, %v2251
    %2253 = vmatmul.f32.gmra.mxu0 %v2252
    %v2254 = vpop.f32.mrf.mxu0
    %v2255 = vadd.f32 %v2132, %v2254
    %v2256 = vand.u32 %v193, 4294901760
    %v2257 = vsub.f32 %v193, %v2256
    %2258 = vmatmul.f32.gmra.mxu0 %v2257
    %v2259 = vpop.f32.mrf.mxu0
    %v2260 = vadd.f32 %v2136, %v2259
    %v2261 = vand.u32 %v221, 4294901760
    %v2262 = vsub.f32 %v221, %v2261
    %2263 = vmatmul.f32.gmra.mxu0 %v2262
    %v2264 = vpop.f32.mrf.mxu0
    %v2265 = vadd.f32 %v2140, %v2264
    %v2266 = vand.u32 %v196, 4294901760
    %v2267 = vsub.f32 %v196, %v2266
    %2268 = vmatmul.f32.gmra.mxu0 %v2267
    %v2269 = vpop.f32.mrf.mxu0
    %v2270 = vadd.f32 %v2144, %v2269
    %v2271 = vand.u32 %v222, 4294901760
    %v2272 = vsub.f32 %v222, %v2271
    %2273 = vmatmul.f32.gmra.mxu0 %v2272
    %v2274 = vpop.f32.mrf.mxu0
    %v2275 = vadd.f32 %v2148, %v2274
    %v2276 = vand.u32 %v199, 4294901760
    %v2277 = vsub.f32 %v199, %v2276
    %2278 = vmatmul.f32.gmra.mxu0 %v2277
    %v2279 = vpop.f32.mrf.mxu0
    %v2280 = vadd.f32 %v2152, %v2279
    %v2281 = vand.u32 %v223, 4294901760
    %v2282 = vsub.f32 %v223, %v2281
    %2283 = vmatmul.f32.gmra.mxu0 %v2282
    %v2284 = vpop.f32.mrf.mxu0
    %v2285 = vadd.f32 %v2156, %v2284
    %2286 = vdwg.mxu0
    %v2287 = vand.u32 %v93, 4294901760
    %2288 = vmatpush.msra.mxu0 %v2287
    %v2289 = vand.u32 %v92, 4294901760
    %2290 = vmatpush.msra.mxu0 %v2289
    %v2291 = vand.u32 %v91, 4294901760
    %2292 = vmatpush.msra.mxu0 %v2291
    %v2293 = vand.u32 %v90, 4294901760
    %2294 = vmatpush.msra.mxu0 %v2293
    %v2295 = vand.u32 %v89, 4294901760
    %2296 = vmatpush.msra.mxu0 %v2295
    %v2297 = vand.u32 %v88, 4294901760
    %2298 = vmatpush.msra.mxu0 %v2297
    %v2299 = vand.u32 %v87, 4294901760
    %2300 = vmatpush.msra.mxu0 %v2299
    %v2301 = vand.u32 %v86, 4294901760
    %2302 = vmatpush.msra.mxu0 %v2301
    %v2303 = vand.u32 %v85, 4294901760
    %2304 = vmatpush.msra.mxu0 %v2303
    %v2305 = vand.u32 %v84, 4294901760
    %2306 = vmatpush.msra.mxu0 %v2305
    %v2307 = vand.u32 %v83, 4294901760
    %2308 = vmatpush.msra.mxu0 %v2307
    %v2309 = vand.u32 %v82, 4294901760
    %2310 = vmatpush.msra.mxu0 %v2309
    %v2311 = vand.u32 %v81, 4294901760
    %2312 = vmatpush.msra.mxu0 %v2311
    %v2313 = vand.u32 %v80, 4294901760
    %2314 = vmatpush.msra.mxu0 %v2313
    %v2315 = vand.u32 %v79, 4294901760
    %2316 = vmatpush.msra.mxu0 %v2315
    %v2317 = vand.u32 %v78, 4294901760
    %2318 = vmatpush.msra.mxu0 %v2317
    %v2319 = vand.u32 %v178, 4294901760
    %v2320 = vsub.f32 %v178, %v2319
    %v2321 = vand.u32 %v2320, 4294901760
    %2322 = vmatmul.f32.gmra.mxu0 %v2321
    %v2323 = vpop.f32.mrf.mxu0
    %v2324 = vadd.f32 %v2210, %v2323
    %v2325 = vand.u32 %v216, 4294901760
    %v2326 = vsub.f32 %v216, %v2325
    %v2327 = vand.u32 %v2326, 4294901760
    %2328 = vmatmul.f32.gmra.mxu0 %v2327
    %v2329 = vpop.f32.mrf.mxu0
    %v2330 = vadd.f32 %v2215, %v2329
    %v2331 = vand.u32 %v181, 4294901760
    %v2332 = vsub.f32 %v181, %v2331
    %v2333 = vand.u32 %v2332, 4294901760
    %2334 = vmatmul.f32.gmra.mxu0 %v2333
    %v2335 = vpop.f32.mrf.mxu0
    %v2336 = vadd.f32 %v2220, %v2335
    %v2337 = vand.u32 %v217, 4294901760
    %v2338 = vsub.f32 %v217, %v2337
    %v2339 = vand.u32 %v2338, 4294901760
    %2340 = vmatmul.f32.gmra.mxu0 %v2339
    %v2341 = vpop.f32.mrf.mxu0
    %v2342 = vadd.f32 %v2225, %v2341
    %v2343 = vand.u32 %v184, 4294901760
    %v2344 = vsub.f32 %v184, %v2343
    %v2345 = vand.u32 %v2344, 4294901760
    %2346 = vmatmul.f32.gmra.mxu0 %v2345
    %v2347 = vpop.f32.mrf.mxu0
    %v2348 = vadd.f32 %v2230, %v2347
    %v2349 = vand.u32 %v218, 4294901760
    %v2350 = vsub.f32 %v218, %v2349
    %v2351 = vand.u32 %v2350, 4294901760
    %2352 = vmatmul.f32.gmra.mxu0 %v2351
    %v2353 = vpop.f32.mrf.mxu0
    %v2354 = vadd.f32 %v2235, %v2353
    %v2355 = vand.u32 %v187, 4294901760
    %v2356 = vsub.f32 %v187, %v2355
    %v2357 = vand.u32 %v2356, 4294901760
    %2358 = vmatmul.f32.gmra.mxu0 %v2357
    %v2359 = vpop.f32.mrf.mxu0
    %v2360 = vadd.f32 %v2240, %v2359
    %v2361 = vand.u32 %v219, 4294901760
    %v2362 = vsub.f32 %v219, %v2361
    %v2363 = vand.u32 %v2362, 4294901760
    %2364 = vmatmul.f32.gmra.mxu0 %v2363
    %v2365 = vpop.f32.mrf.mxu0
    %v2366 = vadd.f32 %v2245, %v2365
    %v2367 = vand.u32 %v190, 4294901760
    %v2368 = vsub.f32 %v190, %v2367
    %v2369 = vand.u32 %v2368, 4294901760
    %2370 = vmatmul.f32.gmra.mxu0 %v2369
    %v2371 = vpop.f32.mrf.mxu0
    %v2372 = vadd.f32 %v2250, %v2371
    %v2373 = vand.u32 %v220, 4294901760
    %v2374 = vsub.f32 %v220, %v2373
    %v2375 = vand.u32 %v2374, 4294901760
    %2376 = vmatmul.f32.gmra.mxu0 %v2375
    %v2377 = vpop.f32.mrf.mxu0
    %v2378 = vadd.f32 %v2255, %v2377
    %v2379 = vand.u32 %v193, 4294901760
    %v2380 = vsub.f32 %v193, %v2379
    %v2381 = vand.u32 %v2380, 4294901760
    %2382 = vmatmul.f32.gmra.mxu0 %v2381
    %v2383 = vpop.f32.mrf.mxu0
    %v2384 = vadd.f32 %v2260, %v2383
    %v2385 = vand.u32 %v221, 4294901760
    %v2386 = vsub.f32 %v221, %v2385
    %v2387 = vand.u32 %v2386, 4294901760
    %2388 = vmatmul.f32.gmra.mxu0 %v2387
    %v2389 = vpop.f32.mrf.mxu0
    %v2390 = vadd.f32 %v2265, %v2389
    %v2391 = vand.u32 %v196, 4294901760
    %v2392 = vsub.f32 %v196, %v2391
    %v2393 = vand.u32 %v2392, 4294901760
    %2394 = vmatmul.f32.gmra.mxu0 %v2393
    %v2395 = vpop.f32.mrf.mxu0
    %v2396 = vadd.f32 %v2270, %v2395
    %v2397 = vand.u32 %v222, 4294901760
    %v2398 = vsub.f32 %v222, %v2397
    %v2399 = vand.u32 %v2398, 4294901760
    %2400 = vmatmul.f32.gmra.mxu0 %v2399
    %v2401 = vpop.f32.mrf.mxu0
    %v2402 = vadd.f32 %v2275, %v2401
    %v2403 = vand.u32 %v199, 4294901760
    %v2404 = vsub.f32 %v199, %v2403
    %v2405 = vand.u32 %v2404, 4294901760
    %2406 = vmatmul.f32.gmra.mxu0 %v2405
    %v2407 = vpop.f32.mrf.mxu0
    %v2408 = vadd.f32 %v2280, %v2407
    %v2409 = vand.u32 %v223, 4294901760
    %v2410 = vsub.f32 %v223, %v2409
    %v2411 = vand.u32 %v2410, 4294901760
    %2412 = vmatmul.f32.gmra.mxu0 %v2411
    %v2413 = vpop.f32.mrf.mxu0
    %v2414 = vadd.f32 %v2285, %v2413
    %2415 = vdwg.mxu0
    %v2416 = vand.u32 %v93, 4294901760
    %v2417 = vsub.f32 %v93, %v2416
    %v2418 = vand.u32 %v2417, 4294901760
    %2419 = vmatpush.msra.mxu0 %v2418
    %v2420 = vand.u32 %v92, 4294901760
    %v2421 = vsub.f32 %v92, %v2420
    %v2422 = vand.u32 %v2421, 4294901760
    %2423 = vmatpush.msra.mxu0 %v2422
    %v2424 = vand.u32 %v91, 4294901760
    %v2425 = vsub.f32 %v91, %v2424
    %v2426 = vand.u32 %v2425, 4294901760
    %2427 = vmatpush.msra.mxu0 %v2426
    %v2428 = vand.u32 %v90, 4294901760
    %v2429 = vsub.f32 %v90, %v2428
    %v2430 = vand.u32 %v2429, 4294901760
    %2431 = vmatpush.msra.mxu0 %v2430
    %v2432 = vand.u32 %v89, 4294901760
    %v2433 = vsub.f32 %v89, %v2432
    %v2434 = vand.u32 %v2433, 4294901760
    %2435 = vmatpush.msra.mxu0 %v2434
    %v2436 = vand.u32 %v88, 4294901760
    %v2437 = vsub.f32 %v88, %v2436
    %v2438 = vand.u32 %v2437, 4294901760
    %2439 = vmatpush.msra.mxu0 %v2438
    %v2440 = vand.u32 %v87, 4294901760
    %v2441 = vsub.f32 %v87, %v2440
    %v2442 = vand.u32 %v2441, 4294901760
    %2443 = vmatpush.msra.mxu0 %v2442
    %v2444 = vand.u32 %v86, 4294901760
    %v2445 = vsub.f32 %v86, %v2444
    %v2446 = vand.u32 %v2445, 4294901760
    %2447 = vmatpush.msra.mxu0 %v2446
    %v2448 = vand.u32 %v85, 4294901760
    %v2449 = vsub.f32 %v85, %v2448
    %v2450 = vand.u32 %v2449, 4294901760
    %2451 = vmatpush.msra.mxu0 %v2450
    %v2452 = vand.u32 %v84, 4294901760
    %v2453 = vsub.f32 %v84, %v2452
    %v2454 = vand.u32 %v2453, 4294901760
    %2455 = vmatpush.msra.mxu0 %v2454
    %v2456 = vand.u32 %v83, 4294901760
    %v2457 = vsub.f32 %v83, %v2456
    %v2458 = vand.u32 %v2457, 4294901760
    %2459 = vmatpush.msra.mxu0 %v2458
    %v2460 = vand.u32 %v82, 4294901760
    %v2461 = vsub.f32 %v82, %v2460
    %v2462 = vand.u32 %v2461, 4294901760
    %2463 = vmatpush.msra.mxu0 %v2462
    %v2464 = vand.u32 %v81, 4294901760
    %v2465 = vsub.f32 %v81, %v2464
    %v2466 = vand.u32 %v2465, 4294901760
    %2467 = vmatpush.msra.mxu0 %v2466
    %v2468 = vand.u32 %v80, 4294901760
    %v2469 = vsub.f32 %v80, %v2468
    %v2470 = vand.u32 %v2469, 4294901760
    %2471 = vmatpush.msra.mxu0 %v2470
    %v2472 = vand.u32 %v79, 4294901760
    %v2473 = vsub.f32 %v79, %v2472
    %v2474 = vand.u32 %v2473, 4294901760
    %2475 = vmatpush.msra.mxu0 %v2474
    %v2476 = vand.u32 %v78, 4294901760
    %v2477 = vsub.f32 %v78, %v2476
    %v2478 = vand.u32 %v2477, 4294901760
    %2479 = vmatpush.msra.mxu0 %v2478
    %v2480 = vand.u32 %v178, 4294901760
    %2481 = vmatmul.f32.gmra.mxu0 %v2480
    %v2482 = vpop.f32.mrf.mxu0
    %v2483 = vadd.f32 %v2324, %v2482
    %v2484 = vand.u32 %v216, 4294901760
    %2485 = vmatmul.f32.gmra.mxu0 %v2484
    %v2486 = vpop.f32.mrf.mxu0
    %v2487 = vadd.f32 %v2330, %v2486
    %v2488 = vand.u32 %v181, 4294901760
    %2489 = vmatmul.f32.gmra.mxu0 %v2488
    %v2490 = vpop.f32.mrf.mxu0
    %v2491 = vadd.f32 %v2336, %v2490
    %v2492 = vand.u32 %v217, 4294901760
    %2493 = vmatmul.f32.gmra.mxu0 %v2492
    %v2494 = vpop.f32.mrf.mxu0
    %v2495 = vadd.f32 %v2342, %v2494
    %v2496 = vand.u32 %v184, 4294901760
    %2497 = vmatmul.f32.gmra.mxu0 %v2496
    %v2498 = vpop.f32.mrf.mxu0
    %v2499 = vadd.f32 %v2348, %v2498
    %v2500 = vand.u32 %v218, 4294901760
    %2501 = vmatmul.f32.gmra.mxu0 %v2500
    %v2502 = vpop.f32.mrf.mxu0
    %v2503 = vadd.f32 %v2354, %v2502
    %v2504 = vand.u32 %v187, 4294901760
    %2505 = vmatmul.f32.gmra.mxu0 %v2504
    %v2506 = vpop.f32.mrf.mxu0
    %v2507 = vadd.f32 %v2360, %v2506
    %v2508 = vand.u32 %v219, 4294901760
    %2509 = vmatmul.f32.gmra.mxu0 %v2508
    %v2510 = vpop.f32.mrf.mxu0
    %v2511 = vadd.f32 %v2366, %v2510
    %v2512 = vand.u32 %v190, 4294901760
    %2513 = vmatmul.f32.gmra.mxu0 %v2512
    %v2514 = vpop.f32.mrf.mxu0
    %v2515 = vadd.f32 %v2372, %v2514
    %v2516 = vand.u32 %v220, 4294901760
    %2517 = vmatmul.f32.gmra.mxu0 %v2516
    %v2518 = vpop.f32.mrf.mxu0
    %v2519 = vadd.f32 %v2378, %v2518
    %v2520 = vand.u32 %v193, 4294901760
    %2521 = vmatmul.f32.gmra.mxu0 %v2520
    %v2522 = vpop.f32.mrf.mxu0
    %v2523 = vadd.f32 %v2384, %v2522
    %v2524 = vand.u32 %v221, 4294901760
    %2525 = vmatmul.f32.gmra.mxu0 %v2524
    %v2526 = vpop.f32.mrf.mxu0
    %v2527 = vadd.f32 %v2390, %v2526
    %v2528 = vand.u32 %v196, 4294901760
    %2529 = vmatmul.f32.gmra.mxu0 %v2528
    %v2530 = vpop.f32.mrf.mxu0
    %v2531 = vadd.f32 %v2396, %v2530
    %v2532 = vand.u32 %v222, 4294901760
    %2533 = vmatmul.f32.gmra.mxu0 %v2532
    %v2534 = vpop.f32.mrf.mxu0
    %v2535 = vadd.f32 %v2402, %v2534
    %v2536 = vand.u32 %v199, 4294901760
    %2537 = vmatmul.f32.gmra.mxu0 %v2536
    %v2538 = vpop.f32.mrf.mxu0
    %v2539 = vadd.f32 %v2408, %v2538
    %v2540 = vand.u32 %v223, 4294901760
    %2541 = vmatmul.f32.gmra.mxu0 %v2540
    %v2542 = vpop.f32.mrf.mxu0
    %v2543 = vadd.f32 %v2414, %v2542
    %2544 = vdwg.mxu0
    %v2545 = vand.u32 %v93, 4294901760
    %2546 = vmatpush.msra.mxu0 %v2545
    %v2547 = vand.u32 %v92, 4294901760
    %2548 = vmatpush.msra.mxu0 %v2547
    %v2549 = vand.u32 %v91, 4294901760
    %2550 = vmatpush.msra.mxu0 %v2549
    %v2551 = vand.u32 %v90, 4294901760
    %2552 = vmatpush.msra.mxu0 %v2551
    %v2553 = vand.u32 %v89, 4294901760
    %2554 = vmatpush.msra.mxu0 %v2553
    %v2555 = vand.u32 %v88, 4294901760
    %2556 = vmatpush.msra.mxu0 %v2555
    %v2557 = vand.u32 %v87, 4294901760
    %2558 = vmatpush.msra.mxu0 %v2557
    %v2559 = vand.u32 %v86, 4294901760
    %2560 = vmatpush.msra.mxu0 %v2559
    %v2561 = vand.u32 %v85, 4294901760
    %2562 = vmatpush.msra.mxu0 %v2561
    %v2563 = vand.u32 %v84, 4294901760
    %2564 = vmatpush.msra.mxu0 %v2563
    %v2565 = vand.u32 %v83, 4294901760
    %2566 = vmatpush.msra.mxu0 %v2565
    %v2567 = vand.u32 %v82, 4294901760
    %2568 = vmatpush.msra.mxu0 %v2567
    %v2569 = vand.u32 %v81, 4294901760
    %2570 = vmatpush.msra.mxu0 %v2569
    %v2571 = vand.u32 %v80, 4294901760
    %2572 = vmatpush.msra.mxu0 %v2571
    %v2573 = vand.u32 %v79, 4294901760
    %2574 = vmatpush.msra.mxu0 %v2573
    %v2575 = vand.u32 %v78, 4294901760
    %2576 = vmatpush.msra.mxu0 %v2575
    %v2577 = vand.u32 %v178, 4294901760
    %2578 = vmatmul.f32.gmra.mxu0 %v2577
    %v2579 = vpop.f32.mrf.mxu0
    %v2580 = vadd.f32 %v2483, %v2579
    %v2581 = vand.u32 %v216, 4294901760
    %2582 = vmatmul.f32.gmra.mxu0 %v2581
    %v2583 = vpop.f32.mrf.mxu0
    %v2584 = vadd.f32 %v2487, %v2583
    %v2585 = vand.u32 %v181, 4294901760
    %2586 = vmatmul.f32.gmra.mxu0 %v2585
    %v2587 = vpop.f32.mrf.mxu0
    %v2588 = vadd.f32 %v2491, %v2587
    %v2589 = vand.u32 %v217, 4294901760
    %2590 = vmatmul.f32.gmra.mxu0 %v2589
    %v2591 = vpop.f32.mrf.mxu0
    %v2592 = vadd.f32 %v2495, %v2591
    %v2593 = vand.u32 %v184, 4294901760
    %2594 = vmatmul.f32.gmra.mxu0 %v2593
    %v2595 = vpop.f32.mrf.mxu0
    %v2596 = vadd.f32 %v2499, %v2595
    %v2597 = vand.u32 %v218, 4294901760
    %2598 = vmatmul.f32.gmra.mxu0 %v2597
    %v2599 = vpop.f32.mrf.mxu0
    %v2600 = vadd.f32 %v2503, %v2599
    %v2601 = vand.u32 %v187, 4294901760
    %2602 = vmatmul.f32.gmra.mxu0 %v2601
    %v2603 = vpop.f32.mrf.mxu0
    %v2604 = vadd.f32 %v2507, %v2603
    %v2605 = vand.u32 %v219, 4294901760
    %2606 = vmatmul.f32.gmra.mxu0 %v2605
    %v2607 = vpop.f32.mrf.mxu0
    %v2608 = vadd.f32 %v2511, %v2607
    %v2609 = vand.u32 %v190, 4294901760
    %2610 = vmatmul.f32.gmra.mxu0 %v2609
    %v2611 = vpop.f32.mrf.mxu0
    %v2612 = vadd.f32 %v2515, %v2611
    %v2613 = vand.u32 %v220, 4294901760
    %2614 = vmatmul.f32.gmra.mxu0 %v2613
    %v2615 = vpop.f32.mrf.mxu0
    %v2616 = vadd.f32 %v2519, %v2615
    %v2617 = vand.u32 %v193, 4294901760
    %2618 = vmatmul.f32.gmra.mxu0 %v2617
    %v2619 = vpop.f32.mrf.mxu0
    %v2620 = vadd.f32 %v2523, %v2619
    %v2621 = vand.u32 %v221, 4294901760
    %2622 = vmatmul.f32.gmra.mxu0 %v2621
    %v2623 = vpop.f32.mrf.mxu0
    %v2624 = vadd.f32 %v2527, %v2623
    %v2625 = vand.u32 %v196, 4294901760
    %2626 = vmatmul.f32.gmra.mxu0 %v2625
    %v2627 = vpop.f32.mrf.mxu0
    %v2628 = vadd.f32 %v2531, %v2627
    %v2629 = vand.u32 %v222, 4294901760
    %2630 = vmatmul.f32.gmra.mxu0 %v2629
    %v2631 = vpop.f32.mrf.mxu0
    %v2632 = vadd.f32 %v2535, %v2631
    %v2633 = vand.u32 %v199, 4294901760
    %2634 = vmatmul.f32.gmra.mxu0 %v2633
    %v2635 = vpop.f32.mrf.mxu0
    %v2636 = vadd.f32 %v2539, %v2635
    %v2637 = vand.u32 %v223, 4294901760
    %2638 = vmatmul.f32.gmra.mxu0 %v2637
    %v2639 = vpop.f32.mrf.mxu0
    %v2640 = vadd.f32 %v2543, %v2639
    %2641 = vdwg.mxu0
    %v2642 = vadd.f32 %v1774, %v2580
    %v2643 = vadd.f32 %v1778, %v2584
    %v2644 = vadd.f32 %v1782, %v2588
    %v2645 = vadd.f32 %v1786, %v2592
    %v2646 = vadd.f32 %v1790, %v2596
    %v2647 = vadd.f32 %v1794, %v2600
    %v2648 = vadd.f32 %v1798, %v2604
    %v2649 = vadd.f32 %v1802, %v2608
    %v2650 = vadd.f32 %v1806, %v2612
    %v2651 = vadd.f32 %v1810, %v2616
    %v2652 = vadd.f32 %v1814, %v2620
    %v2653 = vadd.f32 %v1818, %v2624
    %v2654 = vadd.f32 %v1822, %v2628
    %v2655 = vadd.f32 %v1826, %v2632
    %v2656 = vadd.f32 %v1830, %v2636
    %v2657 = vadd.f32 %v1834, %v2640
    %vm2658 = vcmp.gt.f32.partialorder %v2642, 0.0
    %vm2659 = vcmp.gt.f32.partialorder %v2643, 0.0
    %vm2660 = vcmp.gt.f32.partialorder %v2644, 0.0
    %vm2661 = vcmp.gt.f32.partialorder %v2645, 0.0
    %vm2662 = vcmp.gt.f32.partialorder %v2646, 0.0
    %vm2663 = vcmp.gt.f32.partialorder %v2647, 0.0
    %vm2664 = vcmp.gt.f32.partialorder %v2648, 0.0
    %vm2665 = vcmp.gt.f32.partialorder %v2649, 0.0
    %vm2666 = vcmp.gt.f32.partialorder %v2650, 0.0
    %vm2667 = vcmp.gt.f32.partialorder %v2651, 0.0
    %vm2668 = vcmp.gt.f32.partialorder %v2652, 0.0
    %vm2669 = vcmp.gt.f32.partialorder %v2653, 0.0
    %vm2670 = vcmp.gt.f32.partialorder %v2654, 0.0
    %vm2671 = vcmp.gt.f32.partialorder %v2655, 0.0
    %vm2672 = vcmp.gt.f32.partialorder %v2656, 0.0
    %vm2673 = vcmp.gt.f32.partialorder %v2657, 0.0
    %v2674 = vmul.f32 %v2642, 0.01
    %v2675 = vmul.f32 %v2643, 0.01
    %v2676 = vmul.f32 %v2644, 0.01
    %v2677 = vmul.f32 %v2645, 0.01
    %v2678 = vmul.f32 %v2646, 0.01
    %v2679 = vmul.f32 %v2647, 0.01
    %v2680 = vmul.f32 %v2648, 0.01
    %v2681 = vmul.f32 %v2649, 0.01
    %v2682 = vmul.f32 %v2650, 0.01
    %v2683 = vmul.f32 %v2651, 0.01
    %v2684 = vmul.f32 %v2652, 0.01
    %v2685 = vmul.f32 %v2653, 0.01
    %v2686 = vmul.f32 %v2654, 0.01
    %v2687 = vmul.f32 %v2655, 0.01
    %v2688 = vmul.f32 %v2656, 0.01
    %v2689 = vmul.f32 %v2657, 0.01
    %v2690 = vsel %vm2658, %v2642, %v2674
    %v2691 = vsel %vm2659, %v2643, %v2675
    %v2692 = vsel %vm2660, %v2644, %v2676
    %v2693 = vsel %vm2661, %v2645, %v2677
    %v2694 = vsel %vm2662, %v2646, %v2678
    %v2695 = vsel %vm2663, %v2647, %v2679
    %v2696 = vsel %vm2664, %v2648, %v2680
    %v2697 = vsel %vm2665, %v2649, %v2681
    %v2698 = vsel %vm2666, %v2650, %v2682
    %v2699 = vsel %vm2667, %v2651, %v2683
    %v2700 = vsel %vm2668, %v2652, %v2684
    %v2701 = vsel %vm2669, %v2653, %v2685
    %v2702 = vsel %vm2670, %v2654, %v2686
    %v2703 = vsel %vm2671, %v2655, %v2687
    %v2704 = vsel %vm2672, %v2656, %v2688
    %v2705 = vsel %vm2673, %v2657, %v2689
    %v2722 = vrot.slane %v2690, 7
    %v2723 = vrot.slane %v2691, 7
    %v2724 = vsel %vm126, %v2722, %v2723
    %v2725 = vrot.slane %v2692, 7
    %v2726 = vrot.slane %v2693, 7
    %v2727 = vsel %vm126, %v2725, %v2726
    %v2728 = vrot.slane %v2694, 7
    %v2729 = vrot.slane %v2695, 7
    %v2730 = vsel %vm126, %v2728, %v2729
    %v2731 = vrot.slane %v2696, 7
    %v2732 = vrot.slane %v2697, 7
    %v2733 = vsel %vm126, %v2731, %v2732
    %v2734 = vrot.slane %v2698, 7
    %v2735 = vrot.slane %v2699, 7
    %v2736 = vsel %vm126, %v2734, %v2735
    %v2737 = vrot.slane %v2700, 7
    %v2738 = vrot.slane %v2701, 7
    %v2739 = vsel %vm126, %v2737, %v2738
    %v2740 = vrot.slane %v2702, 7
    %v2741 = vrot.slane %v2703, 7
    %v2742 = vsel %vm126, %v2740, %v2741
    %v2743 = vrot.slane %v2704, 7
    %v2744 = vrot.slane %v2705, 7
    %v2745 = vsel %vm126, %v2743, %v2744
    %v2762 = vsel %vm126, 0.0, %v2722
    %v2763 = vsel %vm126, 0.0, %v2725
    %v2764 = vsel %vm126, 0.0, %v2728
    %v2765 = vsel %vm126, 0.0, %v2731
    %v2766 = vsel %vm126, 0.0, %v2734
    %v2767 = vsel %vm126, 0.0, %v2737
    %v2768 = vsel %vm126, 0.0, %v2740
    %v2769 = vsel %vm126, 0.0, %v2743
    %v2770 = vrot.slane %v2690, 1
    %v2771 = vrot.slane %v2691, 1
    %v2772 = vsel %vm175, %v2770, %v2771
    %v2773 = vrot.slane %v2692, 1
    %v2774 = vrot.slane %v2693, 1
    %v2775 = vsel %vm175, %v2773, %v2774
    %v2776 = vrot.slane %v2694, 1
    %v2777 = vrot.slane %v2695, 1
    %v2778 = vsel %vm175, %v2776, %v2777
    %v2779 = vrot.slane %v2696, 1
    %v2780 = vrot.slane %v2697, 1
    %v2781 = vsel %vm175, %v2779, %v2780
    %v2782 = vrot.slane %v2698, 1
    %v2783 = vrot.slane %v2699, 1
    %v2784 = vsel %vm175, %v2782, %v2783
    %v2785 = vrot.slane %v2700, 1
    %v2786 = vrot.slane %v2701, 1
    %v2787 = vsel %vm175, %v2785, %v2786
    %v2788 = vrot.slane %v2702, 1
    %v2789 = vrot.slane %v2703, 1
    %v2790 = vsel %vm175, %v2788, %v2789
    %v2791 = vrot.slane %v2704, 1
    %v2792 = vrot.slane %v2705, 1
    %v2793 = vsel %vm175, %v2791, %v2792
    %v2810 = vsel %vm175, %v2771, 0.0
    %v2811 = vsel %vm175, %v2774, 0.0
    %v2812 = vsel %vm175, %v2777, 0.0
    %v2813 = vsel %vm175, %v2780, 0.0
    %v2814 = vsel %vm175, %v2783, 0.0
    %v2815 = vsel %vm175, %v2786, 0.0
    %v2816 = vsel %vm175, %v2789, 0.0
    %v2817 = vsel %vm175, %v2792, 0.0
    %v2818 = vand.u32 %v76, 4294901760
    %2819 = vmatpush.msra.mxu0 %v2818
    %v2820 = vand.u32 %v75, 4294901760
    %2821 = vmatpush.msra.mxu0 %v2820
    %v2822 = vand.u32 %v74, 4294901760
    %2823 = vmatpush.msra.mxu0 %v2822
    %v2824 = vand.u32 %v73, 4294901760
    %2825 = vmatpush.msra.mxu0 %v2824
    %v2826 = vand.u32 %v72, 4294901760
    %2827 = vmatpush.msra.mxu0 %v2826
    %v2828 = vand.u32 %v71, 4294901760
    %2829 = vmatpush.msra.mxu0 %v2828
    %v2830 = vand.u32 %v70, 4294901760
    %2831 = vmatpush.msra.mxu0 %v2830
    %v2832 = vand.u32 %v69, 4294901760
    %2833 = vmatpush.msra.mxu0 %v2832
    %v2834 = vand.u32 %v68, 4294901760
    %2835 = vmatpush.msra.mxu0 %v2834
    %v2836 = vand.u32 %v67, 4294901760
    %2837 = vmatpush.msra.mxu0 %v2836
    %v2838 = vand.u32 %v66, 4294901760
    %2839 = vmatpush.msra.mxu0 %v2838
    %v2840 = vand.u32 %v65, 4294901760
    %2841 = vmatpush.msra.mxu0 %v2840
    %v2842 = vand.u32 %v64, 4294901760
    %2843 = vmatpush.msra.mxu0 %v2842
    %v2844 = vand.u32 %v63, 4294901760
    %2845 = vmatpush.msra.mxu0 %v2844
    %v2846 = vand.u32 %v62, 4294901760
    %2847 = vmatpush.msra.mxu0 %v2846
    %v2848 = vand.u32 %v61, 4294901760
    %2849 = vmatpush.msra.mxu0 %v2848
    %v2850 = vand.u32 %v2690, 4294901760
    %v2851 = vsub.f32 %v2690, %v2850
    %v2852 = vand.u32 %v2851, 4294901760
    %v2853 = vsub.f32 %v2851, %v2852
    %v2854 = vand.u32 %v2853, 4294901760
    %2855 = vmatmul.f32.gmra.mxu0 %v2854
    %v2856 = vpop.f32.mrf.mxu0
    %v2857 = vadd.f32 0.0, %v2856
    %v2858 = vand.u32 %v2691, 4294901760
    %v2859 = vsub.f32 %v2691, %v2858
    %v2860 = vand.u32 %v2859, 4294901760
    %v2861 = vsub.f32 %v2859, %v2860
    %v2862 = vand.u32 %v2861, 4294901760
    %2863 = vmatmul.f32.gmra.mxu0 %v2862
    %v2864 = vpop.f32.mrf.mxu0
    %v2865 = vadd.f32 0.0, %v2864
    %v2866 = vand.u32 %v2692, 4294901760
    %v2867 = vsub.f32 %v2692, %v2866
    %v2868 = vand.u32 %v2867, 4294901760
    %v2869 = vsub.f32 %v2867, %v2868
    %v2870 = vand.u32 %v2869, 4294901760
    %2871 = vmatmul.f32.gmra.mxu0 %v2870
    %v2872 = vpop.f32.mrf.mxu0
    %v2873 = vadd.f32 0.0, %v2872
    %v2874 = vand.u32 %v2693, 4294901760
    %v2875 = vsub.f32 %v2693, %v2874
    %v2876 = vand.u32 %v2875, 4294901760
    %v2877 = vsub.f32 %v2875, %v2876
    %v2878 = vand.u32 %v2877, 4294901760
    %2879 = vmatmul.f32.gmra.mxu0 %v2878
    %v2880 = vpop.f32.mrf.mxu0
    %v2881 = vadd.f32 0.0, %v2880
    %v2882 = vand.u32 %v2694, 4294901760
    %v2883 = vsub.f32 %v2694, %v2882
    %v2884 = vand.u32 %v2883, 4294901760
    %v2885 = vsub.f32 %v2883, %v2884
    %v2886 = vand.u32 %v2885, 4294901760
    %2887 = vmatmul.f32.gmra.mxu0 %v2886
    %v2888 = vpop.f32.mrf.mxu0
    %v2889 = vadd.f32 0.0, %v2888
    %v2890 = vand.u32 %v2695, 4294901760
    %v2891 = vsub.f32 %v2695, %v2890
    %v2892 = vand.u32 %v2891, 4294901760
    %v2893 = vsub.f32 %v2891, %v2892
    %v2894 = vand.u32 %v2893, 4294901760
    %2895 = vmatmul.f32.gmra.mxu0 %v2894
    %v2896 = vpop.f32.mrf.mxu0
    %v2897 = vadd.f32 0.0, %v2896
    %v2898 = vand.u32 %v2696, 4294901760
    %v2899 = vsub.f32 %v2696, %v2898
    %v2900 = vand.u32 %v2899, 4294901760
    %v2901 = vsub.f32 %v2899, %v2900
    %v2902 = vand.u32 %v2901, 4294901760
    %2903 = vmatmul.f32.gmra.mxu0 %v2902
    %v2904 = vpop.f32.mrf.mxu0
    %v2905 = vadd.f32 0.0, %v2904
    %v2906 = vand.u32 %v2697, 4294901760
    %v2907 = vsub.f32 %v2697, %v2906
    %v2908 = vand.u32 %v2907, 4294901760
    %v2909 = vsub.f32 %v2907, %v2908
    %v2910 = vand.u32 %v2909, 4294901760
    %2911 = vmatmul.f32.gmra.mxu0 %v2910
    %v2912 = vpop.f32.mrf.mxu0
    %v2913 = vadd.f32 0.0, %v2912
    %v2914 = vand.u32 %v2698, 4294901760
    %v2915 = vsub.f32 %v2698, %v2914
    %v2916 = vand.u32 %v2915, 4294901760
    %v2917 = vsub.f32 %v2915, %v2916
    %v2918 = vand.u32 %v2917, 4294901760
    %2919 = vmatmul.f32.gmra.mxu0 %v2918
    %v2920 = vpop.f32.mrf.mxu0
    %v2921 = vadd.f32 0.0, %v2920
    %v2922 = vand.u32 %v2699, 4294901760
    %v2923 = vsub.f32 %v2699, %v2922
    %v2924 = vand.u32 %v2923, 4294901760
    %v2925 = vsub.f32 %v2923, %v2924
    %v2926 = vand.u32 %v2925, 4294901760
    %2927 = vmatmul.f32.gmra.mxu0 %v2926
    %v2928 = vpop.f32.mrf.mxu0
    %v2929 = vadd.f32 0.0, %v2928
    %v2930 = vand.u32 %v2700, 4294901760
    %v2931 = vsub.f32 %v2700, %v2930
    %v2932 = vand.u32 %v2931, 4294901760
    %v2933 = vsub.f32 %v2931, %v2932
    %v2934 = vand.u32 %v2933, 4294901760
    %2935 = vmatmul.f32.gmra.mxu0 %v2934
    %v2936 = vpop.f32.mrf.mxu0
    %v2937 = vadd.f32 0.0, %v2936
    %v2938 = vand.u32 %v2701, 4294901760
    %v2939 = vsub.f32 %v2701, %v2938
    %v2940 = vand.u32 %v2939, 4294901760
    %v2941 = vsub.f32 %v2939, %v2940
    %v2942 = vand.u32 %v2941, 4294901760
    %2943 = vmatmul.f32.gmra.mxu0 %v2942
    %v2944 = vpop.f32.mrf.mxu0
    %v2945 = vadd.f32 0.0, %v2944
    %v2946 = vand.u32 %v2702, 4294901760
    %v2947 = vsub.f32 %v2702, %v2946
    %v2948 = vand.u32 %v2947, 4294901760
    %v2949 = vsub.f32 %v2947, %v2948
    %v2950 = vand.u32 %v2949, 4294901760
    %2951 = vmatmul.f32.gmra.mxu0 %v2950
    %v2952 = vpop.f32.mrf.mxu0
    %v2953 = vadd.f32 0.0, %v2952
    %v2954 = vand.u32 %v2703, 4294901760
    %v2955 = vsub.f32 %v2703, %v2954
    %v2956 = vand.u32 %v2955, 4294901760
    %v2957 = vsub.f32 %v2955, %v2956
    %v2958 = vand.u32 %v2957, 4294901760
    %2959 = vmatmul.f32.gmra.mxu0 %v2958
    %v2960 = vpop.f32.mrf.mxu0
    %v2961 = vadd.f32 0.0, %v2960
    %v2962 = vand.u32 %v2704, 4294901760
    %v2963 = vsub.f32 %v2704, %v2962
    %v2964 = vand.u32 %v2963, 4294901760
    %v2965 = vsub.f32 %v2963, %v2964
    %v2966 = vand.u32 %v2965, 4294901760
    %2967 = vmatmul.f32.gmra.mxu0 %v2966
    %v2968 = vpop.f32.mrf.mxu0
    %v2969 = vadd.f32 0.0, %v2968
    %v2970 = vand.u32 %v2705, 4294901760
    %v2971 = vsub.f32 %v2705, %v2970
    %v2972 = vand.u32 %v2971, 4294901760
    %v2973 = vsub.f32 %v2971, %v2972
    %v2974 = vand.u32 %v2973, 4294901760
    %2975 = vmatmul.f32.gmra.mxu0 %v2974
    %v2976 = vpop.f32.mrf.mxu0
    %v2977 = vadd.f32 0.0, %v2976
    %2978 = vdwg.mxu0
    %v2979 = vand.u32 %v76, 4294901760
    %v2980 = vsub.f32 %v76, %v2979
    %v2981 = vand.u32 %v2980, 4294901760
    %v2982 = vsub.f32 %v2980, %v2981
    %v2983 = vand.u32 %v2982, 4294901760
    %2984 = vmatpush.msra.mxu0 %v2983
    %v2985 = vand.u32 %v75, 4294901760
    %v2986 = vsub.f32 %v75, %v2985
    %v2987 = vand.u32 %v2986, 4294901760
    %v2988 = vsub.f32 %v2986, %v2987
    %v2989 = vand.u32 %v2988, 4294901760
    %2990 = vmatpush.msra.mxu0 %v2989
    %v2991 = vand.u32 %v74, 4294901760
    %v2992 = vsub.f32 %v74, %v2991
    %v2993 = vand.u32 %v2992, 4294901760
    %v2994 = vsub.f32 %v2992, %v2993
    %v2995 = vand.u32 %v2994, 4294901760
    %2996 = vmatpush.msra.mxu0 %v2995
    %v2997 = vand.u32 %v73, 4294901760
    %v2998 = vsub.f32 %v73, %v2997
    %v2999 = vand.u32 %v2998, 4294901760
    %v3000 = vsub.f32 %v2998, %v2999
    %v3001 = vand.u32 %v3000, 4294901760
    %3002 = vmatpush.msra.mxu0 %v3001
    %v3003 = vand.u32 %v72, 4294901760
    %v3004 = vsub.f32 %v72, %v3003
    %v3005 = vand.u32 %v3004, 4294901760
    %v3006 = vsub.f32 %v3004, %v3005
    %v3007 = vand.u32 %v3006, 4294901760
    %3008 = vmatpush.msra.mxu0 %v3007
    %v3009 = vand.u32 %v71, 4294901760
    %v3010 = vsub.f32 %v71, %v3009
    %v3011 = vand.u32 %v3010, 4294901760
    %v3012 = vsub.f32 %v3010, %v3011
    %v3013 = vand.u32 %v3012, 4294901760
    %3014 = vmatpush.msra.mxu0 %v3013
    %v3015 = vand.u32 %v70, 4294901760
    %v3016 = vsub.f32 %v70, %v3015
    %v3017 = vand.u32 %v3016, 4294901760
    %v3018 = vsub.f32 %v3016, %v3017
    %v3019 = vand.u32 %v3018, 4294901760
    %3020 = vmatpush.msra.mxu0 %v3019
    %v3021 = vand.u32 %v69, 4294901760
    %v3022 = vsub.f32 %v69, %v3021
    %v3023 = vand.u32 %v3022, 4294901760
    %v3024 = vsub.f32 %v3022, %v3023
    %v3025 = vand.u32 %v3024, 4294901760
    %3026 = vmatpush.msra.mxu0 %v3025
    %v3027 = vand.u32 %v68, 4294901760
    %v3028 = vsub.f32 %v68, %v3027
    %v3029 = vand.u32 %v3028, 4294901760
    %v3030 = vsub.f32 %v3028, %v3029
    %v3031 = vand.u32 %v3030, 4294901760
    %3032 = vmatpush.msra.mxu0 %v3031
    %v3033 = vand.u32 %v67, 4294901760
    %v3034 = vsub.f32 %v67, %v3033
    %v3035 = vand.u32 %v3034, 4294901760
    %v3036 = vsub.f32 %v3034, %v3035
    %v3037 = vand.u32 %v3036, 4294901760
    %3038 = vmatpush.msra.mxu0 %v3037
    %v3039 = vand.u32 %v66, 4294901760
    %v3040 = vsub.f32 %v66, %v3039
    %v3041 = vand.u32 %v3040, 4294901760
    %v3042 = vsub.f32 %v3040, %v3041
    %v3043 = vand.u32 %v3042, 4294901760
    %3044 = vmatpush.msra.mxu0 %v3043
    %v3045 = vand.u32 %v65, 4294901760
    %v3046 = vsub.f32 %v65, %v3045
    %v3047 = vand.u32 %v3046, 4294901760
    %v3048 = vsub.f32 %v3046, %v3047
    %v3049 = vand.u32 %v3048, 4294901760
    %3050 = vmatpush.msra.mxu0 %v3049
    %v3051 = vand.u32 %v64, 4294901760
    %v3052 = vsub.f32 %v64, %v3051
    %v3053 = vand.u32 %v3052, 4294901760
    %v3054 = vsub.f32 %v3052, %v3053
    %v3055 = vand.u32 %v3054, 4294901760
    %3056 = vmatpush.msra.mxu0 %v3055
    %v3057 = vand.u32 %v63, 4294901760
    %v3058 = vsub.f32 %v63, %v3057
    %v3059 = vand.u32 %v3058, 4294901760
    %v3060 = vsub.f32 %v3058, %v3059
    %v3061 = vand.u32 %v3060, 4294901760
    %3062 = vmatpush.msra.mxu0 %v3061
    %v3063 = vand.u32 %v62, 4294901760
    %v3064 = vsub.f32 %v62, %v3063
    %v3065 = vand.u32 %v3064, 4294901760
    %v3066 = vsub.f32 %v3064, %v3065
    %v3067 = vand.u32 %v3066, 4294901760
    %3068 = vmatpush.msra.mxu0 %v3067
    %v3069 = vand.u32 %v61, 4294901760
    %v3070 = vsub.f32 %v61, %v3069
    %v3071 = vand.u32 %v3070, 4294901760
    %v3072 = vsub.f32 %v3070, %v3071
    %v3073 = vand.u32 %v3072, 4294901760
    %3074 = vmatpush.msra.mxu0 %v3073
    %v3075 = vand.u32 %v2690, 4294901760
    %3076 = vmatmul.f32.gmra.mxu0 %v3075
    %v3077 = vpop.f32.mrf.mxu0
    %v3078 = vadd.f32 %v2857, %v3077
    %v3079 = vand.u32 %v2691, 4294901760
    %3080 = vmatmul.f32.gmra.mxu0 %v3079
    %v3081 = vpop.f32.mrf.mxu0
    %v3082 = vadd.f32 %v2865, %v3081
    %v3083 = vand.u32 %v2692, 4294901760
    %3084 = vmatmul.f32.gmra.mxu0 %v3083
    %v3085 = vpop.f32.mrf.mxu0
    %v3086 = vadd.f32 %v2873, %v3085
    %v3087 = vand.u32 %v2693, 4294901760
    %3088 = vmatmul.f32.gmra.mxu0 %v3087
    %v3089 = vpop.f32.mrf.mxu0
    %v3090 = vadd.f32 %v2881, %v3089
    %v3091 = vand.u32 %v2694, 4294901760
    %3092 = vmatmul.f32.gmra.mxu0 %v3091
    %v3093 = vpop.f32.mrf.mxu0
    %v3094 = vadd.f32 %v2889, %v3093
    %v3095 = vand.u32 %v2695, 4294901760
    %3096 = vmatmul.f32.gmra.mxu0 %v3095
    %v3097 = vpop.f32.mrf.mxu0
    %v3098 = vadd.f32 %v2897, %v3097
    %v3099 = vand.u32 %v2696, 4294901760
    %3100 = vmatmul.f32.gmra.mxu0 %v3099
    %v3101 = vpop.f32.mrf.mxu0
    %v3102 = vadd.f32 %v2905, %v3101
    %v3103 = vand.u32 %v2697, 4294901760
    %3104 = vmatmul.f32.gmra.mxu0 %v3103
    %v3105 = vpop.f32.mrf.mxu0
    %v3106 = vadd.f32 %v2913, %v3105
    %v3107 = vand.u32 %v2698, 4294901760
    %3108 = vmatmul.f32.gmra.mxu0 %v3107
    %v3109 = vpop.f32.mrf.mxu0
    %v3110 = vadd.f32 %v2921, %v3109
    %v3111 = vand.u32 %v2699, 4294901760
    %3112 = vmatmul.f32.gmra.mxu0 %v3111
    %v3113 = vpop.f32.mrf.mxu0
    %v3114 = vadd.f32 %v2929, %v3113
    %v3115 = vand.u32 %v2700, 4294901760
    %3116 = vmatmul.f32.gmra.mxu0 %v3115
    %v3117 = vpop.f32.mrf.mxu0
    %v3118 = vadd.f32 %v2937, %v3117
    %v3119 = vand.u32 %v2701, 4294901760
    %3120 = vmatmul.f32.gmra.mxu0 %v3119
    %v3121 = vpop.f32.mrf.mxu0
    %v3122 = vadd.f32 %v2945, %v3121
    %v3123 = vand.u32 %v2702, 4294901760
    %3124 = vmatmul.f32.gmra.mxu0 %v3123
    %v3125 = vpop.f32.mrf.mxu0
    %v3126 = vadd.f32 %v2953, %v3125
    %v3127 = vand.u32 %v2703, 4294901760
    %3128 = vmatmul.f32.gmra.mxu0 %v3127
    %v3129 = vpop.f32.mrf.mxu0
    %v3130 = vadd.f32 %v2961, %v3129
    %v3131 = vand.u32 %v2704, 4294901760
    %3132 = vmatmul.f32.gmra.mxu0 %v3131
    %v3133 = vpop.f32.mrf.mxu0
    %v3134 = vadd.f32 %v2969, %v3133
    %v3135 = vand.u32 %v2705, 4294901760
    %3136 = vmatmul.f32.gmra.mxu0 %v3135
    %v3137 = vpop.f32.mrf.mxu0
    %v3138 = vadd.f32 %v2977, %v3137
    %3139 = vdwg.mxu0
    %v3140 = vand.u32 %v76, 4294901760
    %v3141 = vsub.f32 %v76, %v3140
    %3142 = vmatpush.msra.mxu0 %v3141
    %v3143 = vand.u32 %v75, 4294901760
    %v3144 = vsub.f32 %v75, %v3143
    %3145 = vmatpush.msra.mxu0 %v3144
    %v3146 = vand.u32 %v74, 4294901760
    %v3147 = vsub.f32 %v74, %v3146
    %3148 = vmatpush.msra.mxu0 %v3147
    %v3149 = vand.u32 %v73, 4294901760
    %v3150 = vsub.f32 %v73, %v3149
    %3151 = vmatpush.msra.mxu0 %v3150
    %v3152 = vand.u32 %v72, 4294901760
    %v3153 = vsub.f32 %v72, %v3152
    %3154 = vmatpush.msra.mxu0 %v3153
    %v3155 = vand.u32 %v71, 4294901760
    %v3156 = vsub.f32 %v71, %v3155
    %3157 = vmatpush.msra.mxu0 %v3156
    %v3158 = vand.u32 %v70, 4294901760
    %v3159 = vsub.f32 %v70, %v3158
    %3160 = vmatpush.msra.mxu0 %v3159
    %v3161 = vand.u32 %v69, 4294901760
    %v3162 = vsub.f32 %v69, %v3161
    %3163 = vmatpush.msra.mxu0 %v3162
    %v3164 = vand.u32 %v68, 4294901760
    %v3165 = vsub.f32 %v68, %v3164
    %3166 = vmatpush.msra.mxu0 %v3165
    %v3167 = vand.u32 %v67, 4294901760
    %v3168 = vsub.f32 %v67, %v3167
    %3169 = vmatpush.msra.mxu0 %v3168
    %v3170 = vand.u32 %v66, 4294901760
    %v3171 = vsub.f32 %v66, %v3170
    %3172 = vmatpush.msra.mxu0 %v3171
    %v3173 = vand.u32 %v65, 4294901760
    %v3174 = vsub.f32 %v65, %v3173
    %3175 = vmatpush.msra.mxu0 %v3174
    %v3176 = vand.u32 %v64, 4294901760
    %v3177 = vsub.f32 %v64, %v3176
    %3178 = vmatpush.msra.mxu0 %v3177
    %v3179 = vand.u32 %v63, 4294901760
    %v3180 = vsub.f32 %v63, %v3179
    %3181 = vmatpush.msra.mxu0 %v3180
    %v3182 = vand.u32 %v62, 4294901760
    %v3183 = vsub.f32 %v62, %v3182
    %3184 = vmatpush.msra.mxu0 %v3183
    %v3185 = vand.u32 %v61, 4294901760
    %v3186 = vsub.f32 %v61, %v3185
    %3187 = vmatpush.msra.mxu0 %v3186
    %v3188 = vand.u32 %v2690, 4294901760
    %v3189 = vsub.f32 %v2690, %v3188
    %3190 = vmatmul.f32.gmra.mxu0 %v3189
    %v3191 = vpop.f32.mrf.mxu0
    %v3192 = vadd.f32 %v3078, %v3191
    %v3193 = vand.u32 %v2691, 4294901760
    %v3194 = vsub.f32 %v2691, %v3193
    %3195 = vmatmul.f32.gmra.mxu0 %v3194
    %v3196 = vpop.f32.mrf.mxu0
    %v3197 = vadd.f32 %v3082, %v3196
    %v3198 = vand.u32 %v2692, 4294901760
    %v3199 = vsub.f32 %v2692, %v3198
    %3200 = vmatmul.f32.gmra.mxu0 %v3199
    %v3201 = vpop.f32.mrf.mxu0
    %v3202 = vadd.f32 %v3086, %v3201
    %v3203 = vand.u32 %v2693, 4294901760
    %v3204 = vsub.f32 %v2693, %v3203
    %3205 = vmatmul.f32.gmra.mxu0 %v3204
    %v3206 = vpop.f32.mrf.mxu0
    %v3207 = vadd.f32 %v3090, %v3206
    %v3208 = vand.u32 %v2694, 4294901760
    %v3209 = vsub.f32 %v2694, %v3208
    %3210 = vmatmul.f32.gmra.mxu0 %v3209
    %v3211 = vpop.f32.mrf.mxu0
    %v3212 = vadd.f32 %v3094, %v3211
    %v3213 = vand.u32 %v2695, 4294901760
    %v3214 = vsub.f32 %v2695, %v3213
    %3215 = vmatmul.f32.gmra.mxu0 %v3214
    %v3216 = vpop.f32.mrf.mxu0
    %v3217 = vadd.f32 %v3098, %v3216
    %v3218 = vand.u32 %v2696, 4294901760
    %v3219 = vsub.f32 %v2696, %v3218
    %3220 = vmatmul.f32.gmra.mxu0 %v3219
    %v3221 = vpop.f32.mrf.mxu0
    %v3222 = vadd.f32 %v3102, %v3221
    %v3223 = vand.u32 %v2697, 4294901760
    %v3224 = vsub.f32 %v2697, %v3223
    %3225 = vmatmul.f32.gmra.mxu0 %v3224
    %v3226 = vpop.f32.mrf.mxu0
    %v3227 = vadd.f32 %v3106, %v3226
    %v3228 = vand.u32 %v2698, 4294901760
    %v3229 = vsub.f32 %v2698, %v3228
    %3230 = vmatmul.f32.gmra.mxu0 %v3229
    %v3231 = vpop.f32.mrf.mxu0
    %v3232 = vadd.f32 %v3110, %v3231
    %v3233 = vand.u32 %v2699, 4294901760
    %v3234 = vsub.f32 %v2699, %v3233
    %3235 = vmatmul.f32.gmra.mxu0 %v3234
    %v3236 = vpop.f32.mrf.mxu0
    %v3237 = vadd.f32 %v3114, %v3236
    %v3238 = vand.u32 %v2700, 4294901760
    %v3239 = vsub.f32 %v2700, %v3238
    %3240 = vmatmul.f32.gmra.mxu0 %v3239
    %v3241 = vpop.f32.mrf.mxu0
    %v3242 = vadd.f32 %v3118, %v3241
    %v3243 = vand.u32 %v2701, 4294901760
    %v3244 = vsub.f32 %v2701, %v3243
    %3245 = vmatmul.f32.gmra.mxu0 %v3244
    %v3246 = vpop.f32.mrf.mxu0
    %v3247 = vadd.f32 %v3122, %v3246
    %v3248 = vand.u32 %v2702, 4294901760
    %v3249 = vsub.f32 %v2702, %v3248
    %3250 = vmatmul.f32.gmra.mxu0 %v3249
    %v3251 = vpop.f32.mrf.mxu0
    %v3252 = vadd.f32 %v3126, %v3251
    %v3253 = vand.u32 %v2703, 4294901760
    %v3254 = vsub.f32 %v2703, %v3253
    %3255 = vmatmul.f32.gmra.mxu0 %v3254
    %v3256 = vpop.f32.mrf.mxu0
    %v3257 = vadd.f32 %v3130, %v3256
    %v3258 = vand.u32 %v2704, 4294901760
    %v3259 = vsub.f32 %v2704, %v3258
    %3260 = vmatmul.f32.gmra.mxu0 %v3259
    %v3261 = vpop.f32.mrf.mxu0
    %v3262 = vadd.f32 %v3134, %v3261
    %v3263 = vand.u32 %v2705, 4294901760
    %v3264 = vsub.f32 %v2705, %v3263
    %3265 = vmatmul.f32.gmra.mxu0 %v3264
    %v3266 = vpop.f32.mrf.mxu0
    %v3267 = vadd.f32 %v3138, %v3266
    %3268 = vdwg.mxu0
    %v3269 = vand.u32 %v76, 4294901760
    %3270 = vmatpush.msra.mxu0 %v3269
    %v3271 = vand.u32 %v75, 4294901760
    %3272 = vmatpush.msra.mxu0 %v3271
    %v3273 = vand.u32 %v74, 4294901760
    %3274 = vmatpush.msra.mxu0 %v3273
    %v3275 = vand.u32 %v73, 4294901760
    %3276 = vmatpush.msra.mxu0 %v3275
    %v3277 = vand.u32 %v72, 4294901760
    %3278 = vmatpush.msra.mxu0 %v3277
    %v3279 = vand.u32 %v71, 4294901760
    %3280 = vmatpush.msra.mxu0 %v3279
    %v3281 = vand.u32 %v70, 4294901760
    %3282 = vmatpush.msra.mxu0 %v3281
    %v3283 = vand.u32 %v69, 4294901760
    %3284 = vmatpush.msra.mxu0 %v3283
    %v3285 = vand.u32 %v68, 4294901760
    %3286 = vmatpush.msra.mxu0 %v3285
    %v3287 = vand.u32 %v67, 4294901760
    %3288 = vmatpush.msra.mxu0 %v3287
    %v3289 = vand.u32 %v66, 4294901760
    %3290 = vmatpush.msra.mxu0 %v3289
    %v3291 = vand.u32 %v65, 4294901760
    %3292 = vmatpush.msra.mxu0 %v3291
    %v3293 = vand.u32 %v64, 4294901760
    %3294 = vmatpush.msra.mxu0 %v3293
    %v3295 = vand.u32 %v63, 4294901760
    %3296 = vmatpush.msra.mxu0 %v3295
    %v3297 = vand.u32 %v62, 4294901760
    %3298 = vmatpush.msra.mxu0 %v3297
    %v3299 = vand.u32 %v61, 4294901760
    %3300 = vmatpush.msra.mxu0 %v3299
    %v3301 = vand.u32 %v2690, 4294901760
    %v3302 = vsub.f32 %v2690, %v3301
    %v3303 = vand.u32 %v3302, 4294901760
    %3304 = vmatmul.f32.gmra.mxu0 %v3303
    %v3305 = vpop.f32.mrf.mxu0
    %v3306 = vadd.f32 %v3192, %v3305
    %v3307 = vand.u32 %v2691, 4294901760
    %v3308 = vsub.f32 %v2691, %v3307
    %v3309 = vand.u32 %v3308, 4294901760
    %3310 = vmatmul.f32.gmra.mxu0 %v3309
    %v3311 = vpop.f32.mrf.mxu0
    %v3312 = vadd.f32 %v3197, %v3311
    %v3313 = vand.u32 %v2692, 4294901760
    %v3314 = vsub.f32 %v2692, %v3313
    %v3315 = vand.u32 %v3314, 4294901760
    %3316 = vmatmul.f32.gmra.mxu0 %v3315
    %v3317 = vpop.f32.mrf.mxu0
    %v3318 = vadd.f32 %v3202, %v3317
    %v3319 = vand.u32 %v2693, 4294901760
    %v3320 = vsub.f32 %v2693, %v3319
    %v3321 = vand.u32 %v3320, 4294901760
    %3322 = vmatmul.f32.gmra.mxu0 %v3321
    %v3323 = vpop.f32.mrf.mxu0
    %v3324 = vadd.f32 %v3207, %v3323
    %v3325 = vand.u32 %v2694, 4294901760
    %v3326 = vsub.f32 %v2694, %v3325
    %v3327 = vand.u32 %v3326, 4294901760
    %3328 = vmatmul.f32.gmra.mxu0 %v3327
    %v3329 = vpop.f32.mrf.mxu0
    %v3330 = vadd.f32 %v3212, %v3329
    %v3331 = vand.u32 %v2695, 4294901760
    %v3332 = vsub.f32 %v2695, %v3331
    %v3333 = vand.u32 %v3332, 4294901760
    %3334 = vmatmul.f32.gmra.mxu0 %v3333
    %v3335 = vpop.f32.mrf.mxu0
    %v3336 = vadd.f32 %v3217, %v3335
    %v3337 = vand.u32 %v2696, 4294901760
    %v3338 = vsub.f32 %v2696, %v3337
    %v3339 = vand.u32 %v3338, 4294901760
    %3340 = vmatmul.f32.gmra.mxu0 %v3339
    %v3341 = vpop.f32.mrf.mxu0
    %v3342 = vadd.f32 %v3222, %v3341
    %v3343 = vand.u32 %v2697, 4294901760
    %v3344 = vsub.f32 %v2697, %v3343
    %v3345 = vand.u32 %v3344, 4294901760
    %3346 = vmatmul.f32.gmra.mxu0 %v3345
    %v3347 = vpop.f32.mrf.mxu0
    %v3348 = vadd.f32 %v3227, %v3347
    %v3349 = vand.u32 %v2698, 4294901760
    %v3350 = vsub.f32 %v2698, %v3349
    %v3351 = vand.u32 %v3350, 4294901760
    %3352 = vmatmul.f32.gmra.mxu0 %v3351
    %v3353 = vpop.f32.mrf.mxu0
    %v3354 = vadd.f32 %v3232, %v3353
    %v3355 = vand.u32 %v2699, 4294901760
    %v3356 = vsub.f32 %v2699, %v3355
    %v3357 = vand.u32 %v3356, 4294901760
    %3358 = vmatmul.f32.gmra.mxu0 %v3357
    %v3359 = vpop.f32.mrf.mxu0
    %v3360 = vadd.f32 %v3237, %v3359
    %v3361 = vand.u32 %v2700, 4294901760
    %v3362 = vsub.f32 %v2700, %v3361
    %v3363 = vand.u32 %v3362, 4294901760
    %3364 = vmatmul.f32.gmra.mxu0 %v3363
    %v3365 = vpop.f32.mrf.mxu0
    %v3366 = vadd.f32 %v3242, %v3365
    %v3367 = vand.u32 %v2701, 4294901760
    %v3368 = vsub.f32 %v2701, %v3367
    %v3369 = vand.u32 %v3368, 4294901760
    %3370 = vmatmul.f32.gmra.mxu0 %v3369
    %v3371 = vpop.f32.mrf.mxu0
    %v3372 = vadd.f32 %v3247, %v3371
    %v3373 = vand.u32 %v2702, 4294901760
    %v3374 = vsub.f32 %v2702, %v3373
    %v3375 = vand.u32 %v3374, 4294901760
    %3376 = vmatmul.f32.gmra.mxu0 %v3375
    %v3377 = vpop.f32.mrf.mxu0
    %v3378 = vadd.f32 %v3252, %v3377
    %v3379 = vand.u32 %v2703, 4294901760
    %v3380 = vsub.f32 %v2703, %v3379
    %v3381 = vand.u32 %v3380, 4294901760
    %3382 = vmatmul.f32.gmra.mxu0 %v3381
    %v3383 = vpop.f32.mrf.mxu0
    %v3384 = vadd.f32 %v3257, %v3383
    %v3385 = vand.u32 %v2704, 4294901760
    %v3386 = vsub.f32 %v2704, %v3385
    %v3387 = vand.u32 %v3386, 4294901760
    %3388 = vmatmul.f32.gmra.mxu0 %v3387
    %v3389 = vpop.f32.mrf.mxu0
    %v3390 = vadd.f32 %v3262, %v3389
    %v3391 = vand.u32 %v2705, 4294901760
    %v3392 = vsub.f32 %v2705, %v3391
    %v3393 = vand.u32 %v3392, 4294901760
    %3394 = vmatmul.f32.gmra.mxu0 %v3393
    %v3395 = vpop.f32.mrf.mxu0
    %v3396 = vadd.f32 %v3267, %v3395
    %3397 = vdwg.mxu0
    %v3398 = vand.u32 %v76, 4294901760
    %v3399 = vsub.f32 %v76, %v3398
    %v3400 = vand.u32 %v3399, 4294901760
    %3401 = vmatpush.msra.mxu0 %v3400
    %v3402 = vand.u32 %v75, 4294901760
    %v3403 = vsub.f32 %v75, %v3402
    %v3404 = vand.u32 %v3403, 4294901760
    %3405 = vmatpush.msra.mxu0 %v3404
    %v3406 = vand.u32 %v74, 4294901760
    %v3407 = vsub.f32 %v74, %v3406
    %v3408 = vand.u32 %v3407, 4294901760
    %3409 = vmatpush.msra.mxu0 %v3408
    %v3410 = vand.u32 %v73, 4294901760
    %v3411 = vsub.f32 %v73, %v3410
    %v3412 = vand.u32 %v3411, 4294901760
    %3413 = vmatpush.msra.mxu0 %v3412
    %v3414 = vand.u32 %v72, 4294901760
    %v3415 = vsub.f32 %v72, %v3414
    %v3416 = vand.u32 %v3415, 4294901760
    %3417 = vmatpush.msra.mxu0 %v3416
    %v3418 = vand.u32 %v71, 4294901760
    %v3419 = vsub.f32 %v71, %v3418
    %v3420 = vand.u32 %v3419, 4294901760
    %3421 = vmatpush.msra.mxu0 %v3420
    %v3422 = vand.u32 %v70, 4294901760
    %v3423 = vsub.f32 %v70, %v3422
    %v3424 = vand.u32 %v3423, 4294901760
    %3425 = vmatpush.msra.mxu0 %v3424
    %v3426 = vand.u32 %v69, 4294901760
    %v3427 = vsub.f32 %v69, %v3426
    %v3428 = vand.u32 %v3427, 4294901760
    %3429 = vmatpush.msra.mxu0 %v3428
    %v3430 = vand.u32 %v68, 4294901760
    %v3431 = vsub.f32 %v68, %v3430
    %v3432 = vand.u32 %v3431, 4294901760
    %3433 = vmatpush.msra.mxu0 %v3432
    %v3434 = vand.u32 %v67, 4294901760
    %v3435 = vsub.f32 %v67, %v3434
    %v3436 = vand.u32 %v3435, 4294901760
    %3437 = vmatpush.msra.mxu0 %v3436
    %v3438 = vand.u32 %v66, 4294901760
    %v3439 = vsub.f32 %v66, %v3438
    %v3440 = vand.u32 %v3439, 4294901760
    %3441 = vmatpush.msra.mxu0 %v3440
    %v3442 = vand.u32 %v65, 4294901760
    %v3443 = vsub.f32 %v65, %v3442
    %v3444 = vand.u32 %v3443, 4294901760
    %3445 = vmatpush.msra.mxu0 %v3444
    %v3446 = vand.u32 %v64, 4294901760
    %v3447 = vsub.f32 %v64, %v3446
    %v3448 = vand.u32 %v3447, 4294901760
    %3449 = vmatpush.msra.mxu0 %v3448
    %v3450 = vand.u32 %v63, 4294901760
    %v3451 = vsub.f32 %v63, %v3450
    %v3452 = vand.u32 %v3451, 4294901760
    %3453 = vmatpush.msra.mxu0 %v3452
    %v3454 = vand.u32 %v62, 4294901760
    %v3455 = vsub.f32 %v62, %v3454
    %v3456 = vand.u32 %v3455, 4294901760
    %3457 = vmatpush.msra.mxu0 %v3456
    %v3458 = vand.u32 %v61, 4294901760
    %v3459 = vsub.f32 %v61, %v3458
    %v3460 = vand.u32 %v3459, 4294901760
    %3461 = vmatpush.msra.mxu0 %v3460
    %v3462 = vand.u32 %v2690, 4294901760
    %3463 = vmatmul.f32.gmra.mxu0 %v3462
    %v3464 = vpop.f32.mrf.mxu0
    %v3465 = vadd.f32 %v3306, %v3464
    %v3466 = vand.u32 %v2691, 4294901760
    %3467 = vmatmul.f32.gmra.mxu0 %v3466
    %v3468 = vpop.f32.mrf.mxu0
    %v3469 = vadd.f32 %v3312, %v3468
    %v3470 = vand.u32 %v2692, 4294901760
    %3471 = vmatmul.f32.gmra.mxu0 %v3470
    %v3472 = vpop.f32.mrf.mxu0
    %v3473 = vadd.f32 %v3318, %v3472
    %v3474 = vand.u32 %v2693, 4294901760
    %3475 = vmatmul.f32.gmra.mxu0 %v3474
    %v3476 = vpop.f32.mrf.mxu0
    %v3477 = vadd.f32 %v3324, %v3476
    %v3478 = vand.u32 %v2694, 4294901760
    %3479 = vmatmul.f32.gmra.mxu0 %v3478
    %v3480 = vpop.f32.mrf.mxu0
    %v3481 = vadd.f32 %v3330, %v3480
    %v3482 = vand.u32 %v2695, 4294901760
    %3483 = vmatmul.f32.gmra.mxu0 %v3482
    %v3484 = vpop.f32.mrf.mxu0
    %v3485 = vadd.f32 %v3336, %v3484
    %v3486 = vand.u32 %v2696, 4294901760
    %3487 = vmatmul.f32.gmra.mxu0 %v3486
    %v3488 = vpop.f32.mrf.mxu0
    %v3489 = vadd.f32 %v3342, %v3488
    %v3490 = vand.u32 %v2697, 4294901760
    %3491 = vmatmul.f32.gmra.mxu0 %v3490
    %v3492 = vpop.f32.mrf.mxu0
    %v3493 = vadd.f32 %v3348, %v3492
    %v3494 = vand.u32 %v2698, 4294901760
    %3495 = vmatmul.f32.gmra.mxu0 %v3494
    %v3496 = vpop.f32.mrf.mxu0
    %v3497 = vadd.f32 %v3354, %v3496
    %v3498 = vand.u32 %v2699, 4294901760
    %3499 = vmatmul.f32.gmra.mxu0 %v3498
    %v3500 = vpop.f32.mrf.mxu0
    %v3501 = vadd.f32 %v3360, %v3500
    %v3502 = vand.u32 %v2700, 4294901760
    %3503 = vmatmul.f32.gmra.mxu0 %v3502
    %v3504 = vpop.f32.mrf.mxu0
    %v3505 = vadd.f32 %v3366, %v3504
    %v3506 = vand.u32 %v2701, 4294901760
    %3507 = vmatmul.f32.gmra.mxu0 %v3506
    %v3508 = vpop.f32.mrf.mxu0
    %v3509 = vadd.f32 %v3372, %v3508
    %v3510 = vand.u32 %v2702, 4294901760
    %3511 = vmatmul.f32.gmra.mxu0 %v3510
    %v3512 = vpop.f32.mrf.mxu0
    %v3513 = vadd.f32 %v3378, %v3512
    %v3514 = vand.u32 %v2703, 4294901760
    %3515 = vmatmul.f32.gmra.mxu0 %v3514
    %v3516 = vpop.f32.mrf.mxu0
    %v3517 = vadd.f32 %v3384, %v3516
    %v3518 = vand.u32 %v2704, 4294901760
    %3519 = vmatmul.f32.gmra.mxu0 %v3518
    %v3520 = vpop.f32.mrf.mxu0
    %v3521 = vadd.f32 %v3390, %v3520
    %v3522 = vand.u32 %v2705, 4294901760
    %3523 = vmatmul.f32.gmra.mxu0 %v3522
    %v3524 = vpop.f32.mrf.mxu0
    %v3525 = vadd.f32 %v3396, %v3524
    %3526 = vdwg.mxu0
    %v3527 = vand.u32 %v76, 4294901760
    %3528 = vmatpush.msra.mxu0 %v3527
    %v3529 = vand.u32 %v75, 4294901760
    %3530 = vmatpush.msra.mxu0 %v3529
    %v3531 = vand.u32 %v74, 4294901760
    %3532 = vmatpush.msra.mxu0 %v3531
    %v3533 = vand.u32 %v73, 4294901760
    %3534 = vmatpush.msra.mxu0 %v3533
    %v3535 = vand.u32 %v72, 4294901760
    %3536 = vmatpush.msra.mxu0 %v3535
    %v3537 = vand.u32 %v71, 4294901760
    %3538 = vmatpush.msra.mxu0 %v3537
    %v3539 = vand.u32 %v70, 4294901760
    %3540 = vmatpush.msra.mxu0 %v3539
    %v3541 = vand.u32 %v69, 4294901760
    %3542 = vmatpush.msra.mxu0 %v3541
    %v3543 = vand.u32 %v68, 4294901760
    %3544 = vmatpush.msra.mxu0 %v3543
    %v3545 = vand.u32 %v67, 4294901760
    %3546 = vmatpush.msra.mxu0 %v3545
    %v3547 = vand.u32 %v66, 4294901760
    %3548 = vmatpush.msra.mxu0 %v3547
    %v3549 = vand.u32 %v65, 4294901760
    %3550 = vmatpush.msra.mxu0 %v3549
    %v3551 = vand.u32 %v64, 4294901760
    %3552 = vmatpush.msra.mxu0 %v3551
    %v3553 = vand.u32 %v63, 4294901760
    %3554 = vmatpush.msra.mxu0 %v3553
    %v3555 = vand.u32 %v62, 4294901760
    %3556 = vmatpush.msra.mxu0 %v3555
    %v3557 = vand.u32 %v61, 4294901760
    %3558 = vmatpush.msra.mxu0 %v3557
    %v3559 = vand.u32 %v2690, 4294901760
    %3560 = vmatmul.f32.gmra.mxu0 %v3559
    %v3561 = vpop.f32.mrf.mxu0
    %v3562 = vadd.f32 %v3465, %v3561
    %v3563 = vand.u32 %v2691, 4294901760
    %3564 = vmatmul.f32.gmra.mxu0 %v3563
    %v3565 = vpop.f32.mrf.mxu0
    %v3566 = vadd.f32 %v3469, %v3565
    %v3567 = vand.u32 %v2692, 4294901760
    %3568 = vmatmul.f32.gmra.mxu0 %v3567
    %v3569 = vpop.f32.mrf.mxu0
    %v3570 = vadd.f32 %v3473, %v3569
    %v3571 = vand.u32 %v2693, 4294901760
    %3572 = vmatmul.f32.gmra.mxu0 %v3571
    %v3573 = vpop.f32.mrf.mxu0
    %v3574 = vadd.f32 %v3477, %v3573
    %v3575 = vand.u32 %v2694, 4294901760
    %3576 = vmatmul.f32.gmra.mxu0 %v3575
    %v3577 = vpop.f32.mrf.mxu0
    %v3578 = vadd.f32 %v3481, %v3577
    %v3579 = vand.u32 %v2695, 4294901760
    %3580 = vmatmul.f32.gmra.mxu0 %v3579
    %v3581 = vpop.f32.mrf.mxu0
    %v3582 = vadd.f32 %v3485, %v3581
    %v3583 = vand.u32 %v2696, 4294901760
    %3584 = vmatmul.f32.gmra.mxu0 %v3583
    %v3585 = vpop.f32.mrf.mxu0
    %v3586 = vadd.f32 %v3489, %v3585
    %v3587 = vand.u32 %v2697, 4294901760
    %3588 = vmatmul.f32.gmra.mxu0 %v3587
    %v3589 = vpop.f32.mrf.mxu0
    %v3590 = vadd.f32 %v3493, %v3589
    %v3591 = vand.u32 %v2698, 4294901760
    %3592 = vmatmul.f32.gmra.mxu0 %v3591
    %v3593 = vpop.f32.mrf.mxu0
    %v3594 = vadd.f32 %v3497, %v3593
    %v3595 = vand.u32 %v2699, 4294901760
    %3596 = vmatmul.f32.gmra.mxu0 %v3595
    %v3597 = vpop.f32.mrf.mxu0
    %v3598 = vadd.f32 %v3501, %v3597
    %v3599 = vand.u32 %v2700, 4294901760
    %3600 = vmatmul.f32.gmra.mxu0 %v3599
    %v3601 = vpop.f32.mrf.mxu0
    %v3602 = vadd.f32 %v3505, %v3601
    %v3603 = vand.u32 %v2701, 4294901760
    %3604 = vmatmul.f32.gmra.mxu0 %v3603
    %v3605 = vpop.f32.mrf.mxu0
    %v3606 = vadd.f32 %v3509, %v3605
    %v3607 = vand.u32 %v2702, 4294901760
    %3608 = vmatmul.f32.gmra.mxu0 %v3607
    %v3609 = vpop.f32.mrf.mxu0
    %v3610 = vadd.f32 %v3513, %v3609
    %v3611 = vand.u32 %v2703, 4294901760
    %3612 = vmatmul.f32.gmra.mxu0 %v3611
    %v3613 = vpop.f32.mrf.mxu0
    %v3614 = vadd.f32 %v3517, %v3613
    %v3615 = vand.u32 %v2704, 4294901760
    %3616 = vmatmul.f32.gmra.mxu0 %v3615
    %v3617 = vpop.f32.mrf.mxu0
    %v3618 = vadd.f32 %v3521, %v3617
    %v3619 = vand.u32 %v2705, 4294901760
    %3620 = vmatmul.f32.gmra.mxu0 %v3619
    %v3621 = vpop.f32.mrf.mxu0
    %v3622 = vadd.f32 %v3525, %v3621
    %3623 = vdwg.mxu0
    %v3624 = vand.u32 %v59, 4294901760
    %3625 = vmatpush.msra.mxu0 %v3624
    %v3626 = vand.u32 %v58, 4294901760
    %3627 = vmatpush.msra.mxu0 %v3626
    %v3628 = vand.u32 %v57, 4294901760
    %3629 = vmatpush.msra.mxu0 %v3628
    %v3630 = vand.u32 %v56, 4294901760
    %3631 = vmatpush.msra.mxu0 %v3630
    %v3632 = vand.u32 %v55, 4294901760
    %3633 = vmatpush.msra.mxu0 %v3632
    %v3634 = vand.u32 %v54, 4294901760
    %3635 = vmatpush.msra.mxu0 %v3634
    %v3636 = vand.u32 %v53, 4294901760
    %3637 = vmatpush.msra.mxu0 %v3636
    %v3638 = vand.u32 %v52, 4294901760
    %3639 = vmatpush.msra.mxu0 %v3638
    %v3640 = vand.u32 %v51, 4294901760
    %3641 = vmatpush.msra.mxu0 %v3640
    %v3642 = vand.u32 %v50, 4294901760
    %3643 = vmatpush.msra.mxu0 %v3642
    %v3644 = vand.u32 %v49, 4294901760
    %3645 = vmatpush.msra.mxu0 %v3644
    %v3646 = vand.u32 %v48, 4294901760
    %3647 = vmatpush.msra.mxu0 %v3646
    %v3648 = vand.u32 %v47, 4294901760
    %3649 = vmatpush.msra.mxu0 %v3648
    %v3650 = vand.u32 %v46, 4294901760
    %3651 = vmatpush.msra.mxu0 %v3650
    %v3652 = vand.u32 %v45, 4294901760
    %3653 = vmatpush.msra.mxu0 %v3652
    %v3654 = vand.u32 %v44, 4294901760
    %3655 = vmatpush.msra.mxu0 %v3654
    %v3656 = vand.u32 %v2762, 4294901760
    %v3657 = vsub.f32 %v2762, %v3656
    %v3658 = vand.u32 %v3657, 4294901760
    %v3659 = vsub.f32 %v3657, %v3658
    %v3660 = vand.u32 %v3659, 4294901760
    %3661 = vmatmul.f32.gmra.mxu0 %v3660
    %v3662 = vpop.f32.mrf.mxu0
    %v3663 = vadd.f32 %v3562, %v3662
    %v3664 = vand.u32 %v2724, 4294901760
    %v3665 = vsub.f32 %v2724, %v3664
    %v3666 = vand.u32 %v3665, 4294901760
    %v3667 = vsub.f32 %v3665, %v3666
    %v3668 = vand.u32 %v3667, 4294901760
    %3669 = vmatmul.f32.gmra.mxu0 %v3668
    %v3670 = vpop.f32.mrf.mxu0
    %v3671 = vadd.f32 %v3566, %v3670
    %v3672 = vand.u32 %v2763, 4294901760
    %v3673 = vsub.f32 %v2763, %v3672
    %v3674 = vand.u32 %v3673, 4294901760
    %v3675 = vsub.f32 %v3673, %v3674
    %v3676 = vand.u32 %v3675, 4294901760
    %3677 = vmatmul.f32.gmra.mxu0 %v3676
    %v3678 = vpop.f32.mrf.mxu0
    %v3679 = vadd.f32 %v3570, %v3678
    %v3680 = vand.u32 %v2727, 4294901760
    %v3681 = vsub.f32 %v2727, %v3680
    %v3682 = vand.u32 %v3681, 4294901760
    %v3683 = vsub.f32 %v3681, %v3682
    %v3684 = vand.u32 %v3683, 4294901760
    %3685 = vmatmul.f32.gmra.mxu0 %v3684
    %v3686 = vpop.f32.mrf.mxu0
    %v3687 = vadd.f32 %v3574, %v3686
    %v3688 = vand.u32 %v2764, 4294901760
    %v3689 = vsub.f32 %v2764, %v3688
    %v3690 = vand.u32 %v3689, 4294901760
    %v3691 = vsub.f32 %v3689, %v3690
    %v3692 = vand.u32 %v3691, 4294901760
    %3693 = vmatmul.f32.gmra.mxu0 %v3692
    %v3694 = vpop.f32.mrf.mxu0
    %v3695 = vadd.f32 %v3578, %v3694
    %v3696 = vand.u32 %v2730, 4294901760
    %v3697 = vsub.f32 %v2730, %v3696
    %v3698 = vand.u32 %v3697, 4294901760
    %v3699 = vsub.f32 %v3697, %v3698
    %v3700 = vand.u32 %v3699, 4294901760
    %3701 = vmatmul.f32.gmra.mxu0 %v3700
    %v3702 = vpop.f32.mrf.mxu0
    %v3703 = vadd.f32 %v3582, %v3702
    %v3704 = vand.u32 %v2765, 4294901760
    %v3705 = vsub.f32 %v2765, %v3704
    %v3706 = vand.u32 %v3705, 4294901760
    %v3707 = vsub.f32 %v3705, %v3706
    %v3708 = vand.u32 %v3707, 4294901760
    %3709 = vmatmul.f32.gmra.mxu0 %v3708
    %v3710 = vpop.f32.mrf.mxu0
    %v3711 = vadd.f32 %v3586, %v3710
    %v3712 = vand.u32 %v2733, 4294901760
    %v3713 = vsub.f32 %v2733, %v3712
    %v3714 = vand.u32 %v3713, 4294901760
    %v3715 = vsub.f32 %v3713, %v3714
    %v3716 = vand.u32 %v3715, 4294901760
    %3717 = vmatmul.f32.gmra.mxu0 %v3716
    %v3718 = vpop.f32.mrf.mxu0
    %v3719 = vadd.f32 %v3590, %v3718
    %v3720 = vand.u32 %v2766, 4294901760
    %v3721 = vsub.f32 %v2766, %v3720
    %v3722 = vand.u32 %v3721, 4294901760
    %v3723 = vsub.f32 %v3721, %v3722
    %v3724 = vand.u32 %v3723, 4294901760
    %3725 = vmatmul.f32.gmra.mxu0 %v3724
    %v3726 = vpop.f32.mrf.mxu0
    %v3727 = vadd.f32 %v3594, %v3726
    %v3728 = vand.u32 %v2736, 4294901760
    %v3729 = vsub.f32 %v2736, %v3728
    %v3730 = vand.u32 %v3729, 4294901760
    %v3731 = vsub.f32 %v3729, %v3730
    %v3732 = vand.u32 %v3731, 4294901760
    %3733 = vmatmul.f32.gmra.mxu0 %v3732
    %v3734 = vpop.f32.mrf.mxu0
    %v3735 = vadd.f32 %v3598, %v3734
    %v3736 = vand.u32 %v2767, 4294901760
    %v3737 = vsub.f32 %v2767, %v3736
    %v3738 = vand.u32 %v3737, 4294901760
    %v3739 = vsub.f32 %v3737, %v3738
    %v3740 = vand.u32 %v3739, 4294901760
    %3741 = vmatmul.f32.gmra.mxu0 %v3740
    %v3742 = vpop.f32.mrf.mxu0
    %v3743 = vadd.f32 %v3602, %v3742
    %v3744 = vand.u32 %v2739, 4294901760
    %v3745 = vsub.f32 %v2739, %v3744
    %v3746 = vand.u32 %v3745, 4294901760
    %v3747 = vsub.f32 %v3745, %v3746
    %v3748 = vand.u32 %v3747, 4294901760
    %3749 = vmatmul.f32.gmra.mxu0 %v3748
    %v3750 = vpop.f32.mrf.mxu0
    %v3751 = vadd.f32 %v3606, %v3750
    %v3752 = vand.u32 %v2768, 4294901760
    %v3753 = vsub.f32 %v2768, %v3752
    %v3754 = vand.u32 %v3753, 4294901760
    %v3755 = vsub.f32 %v3753, %v3754
    %v3756 = vand.u32 %v3755, 4294901760
    %3757 = vmatmul.f32.gmra.mxu0 %v3756
    %v3758 = vpop.f32.mrf.mxu0
    %v3759 = vadd.f32 %v3610, %v3758
    %v3760 = vand.u32 %v2742, 4294901760
    %v3761 = vsub.f32 %v2742, %v3760
    %v3762 = vand.u32 %v3761, 4294901760
    %v3763 = vsub.f32 %v3761, %v3762
    %v3764 = vand.u32 %v3763, 4294901760
    %3765 = vmatmul.f32.gmra.mxu0 %v3764
    %v3766 = vpop.f32.mrf.mxu0
    %v3767 = vadd.f32 %v3614, %v3766
    %v3768 = vand.u32 %v2769, 4294901760
    %v3769 = vsub.f32 %v2769, %v3768
    %v3770 = vand.u32 %v3769, 4294901760
    %v3771 = vsub.f32 %v3769, %v3770
    %v3772 = vand.u32 %v3771, 4294901760
    %3773 = vmatmul.f32.gmra.mxu0 %v3772
    %v3774 = vpop.f32.mrf.mxu0
    %v3775 = vadd.f32 %v3618, %v3774
    %v3776 = vand.u32 %v2745, 4294901760
    %v3777 = vsub.f32 %v2745, %v3776
    %v3778 = vand.u32 %v3777, 4294901760
    %v3779 = vsub.f32 %v3777, %v3778
    %v3780 = vand.u32 %v3779, 4294901760
    %3781 = vmatmul.f32.gmra.mxu0 %v3780
    %v3782 = vpop.f32.mrf.mxu0
    %v3783 = vadd.f32 %v3622, %v3782
    %3784 = vdwg.mxu0
    %v3785 = vand.u32 %v59, 4294901760
    %v3786 = vsub.f32 %v59, %v3785
    %v3787 = vand.u32 %v3786, 4294901760
    %v3788 = vsub.f32 %v3786, %v3787
    %v3789 = vand.u32 %v3788, 4294901760
    %3790 = vmatpush.msra.mxu0 %v3789
    %v3791 = vand.u32 %v58, 4294901760
    %v3792 = vsub.f32 %v58, %v3791
    %v3793 = vand.u32 %v3792, 4294901760
    %v3794 = vsub.f32 %v3792, %v3793
    %v3795 = vand.u32 %v3794, 4294901760
    %3796 = vmatpush.msra.mxu0 %v3795
    %v3797 = vand.u32 %v57, 4294901760
    %v3798 = vsub.f32 %v57, %v3797
    %v3799 = vand.u32 %v3798, 4294901760
    %v3800 = vsub.f32 %v3798, %v3799
    %v3801 = vand.u32 %v3800, 4294901760
    %3802 = vmatpush.msra.mxu0 %v3801
    %v3803 = vand.u32 %v56, 4294901760
    %v3804 = vsub.f32 %v56, %v3803
    %v3805 = vand.u32 %v3804, 4294901760
    %v3806 = vsub.f32 %v3804, %v3805
    %v3807 = vand.u32 %v3806, 4294901760
    %3808 = vmatpush.msra.mxu0 %v3807
    %v3809 = vand.u32 %v55, 4294901760
    %v3810 = vsub.f32 %v55, %v3809
    %v3811 = vand.u32 %v3810, 4294901760
    %v3812 = vsub.f32 %v3810, %v3811
    %v3813 = vand.u32 %v3812, 4294901760
    %3814 = vmatpush.msra.mxu0 %v3813
    %v3815 = vand.u32 %v54, 4294901760
    %v3816 = vsub.f32 %v54, %v3815
    %v3817 = vand.u32 %v3816, 4294901760
    %v3818 = vsub.f32 %v3816, %v3817
    %v3819 = vand.u32 %v3818, 4294901760
    %3820 = vmatpush.msra.mxu0 %v3819
    %v3821 = vand.u32 %v53, 4294901760
    %v3822 = vsub.f32 %v53, %v3821
    %v3823 = vand.u32 %v3822, 4294901760
    %v3824 = vsub.f32 %v3822, %v3823
    %v3825 = vand.u32 %v3824, 4294901760
    %3826 = vmatpush.msra.mxu0 %v3825
    %v3827 = vand.u32 %v52, 4294901760
    %v3828 = vsub.f32 %v52, %v3827
    %v3829 = vand.u32 %v3828, 4294901760
    %v3830 = vsub.f32 %v3828, %v3829
    %v3831 = vand.u32 %v3830, 4294901760
    %3832 = vmatpush.msra.mxu0 %v3831
    %v3833 = vand.u32 %v51, 4294901760
    %v3834 = vsub.f32 %v51, %v3833
    %v3835 = vand.u32 %v3834, 4294901760
    %v3836 = vsub.f32 %v3834, %v3835
    %v3837 = vand.u32 %v3836, 4294901760
    %3838 = vmatpush.msra.mxu0 %v3837
    %v3839 = vand.u32 %v50, 4294901760
    %v3840 = vsub.f32 %v50, %v3839
    %v3841 = vand.u32 %v3840, 4294901760
    %v3842 = vsub.f32 %v3840, %v3841
    %v3843 = vand.u32 %v3842, 4294901760
    %3844 = vmatpush.msra.mxu0 %v3843
    %v3845 = vand.u32 %v49, 4294901760
    %v3846 = vsub.f32 %v49, %v3845
    %v3847 = vand.u32 %v3846, 4294901760
    %v3848 = vsub.f32 %v3846, %v3847
    %v3849 = vand.u32 %v3848, 4294901760
    %3850 = vmatpush.msra.mxu0 %v3849
    %v3851 = vand.u32 %v48, 4294901760
    %v3852 = vsub.f32 %v48, %v3851
    %v3853 = vand.u32 %v3852, 4294901760
    %v3854 = vsub.f32 %v3852, %v3853
    %v3855 = vand.u32 %v3854, 4294901760
    %3856 = vmatpush.msra.mxu0 %v3855
    %v3857 = vand.u32 %v47, 4294901760
    %v3858 = vsub.f32 %v47, %v3857
    %v3859 = vand.u32 %v3858, 4294901760
    %v3860 = vsub.f32 %v3858, %v3859
    %v3861 = vand.u32 %v3860, 4294901760
    %3862 = vmatpush.msra.mxu0 %v3861
    %v3863 = vand.u32 %v46, 4294901760
    %v3864 = vsub.f32 %v46, %v3863
    %v3865 = vand.u32 %v3864, 4294901760
    %v3866 = vsub.f32 %v3864, %v3865
    %v3867 = vand.u32 %v3866, 4294901760
    %3868 = vmatpush.msra.mxu0 %v3867
    %v3869 = vand.u32 %v45, 4294901760
    %v3870 = vsub.f32 %v45, %v3869
    %v3871 = vand.u32 %v3870, 4294901760
    %v3872 = vsub.f32 %v3870, %v3871
    %v3873 = vand.u32 %v3872, 4294901760
    %3874 = vmatpush.msra.mxu0 %v3873
    %v3875 = vand.u32 %v44, 4294901760
    %v3876 = vsub.f32 %v44, %v3875
    %v3877 = vand.u32 %v3876, 4294901760
    %v3878 = vsub.f32 %v3876, %v3877
    %v3879 = vand.u32 %v3878, 4294901760
    %3880 = vmatpush.msra.mxu0 %v3879
    %v3881 = vand.u32 %v2762, 4294901760
    %3882 = vmatmul.f32.gmra.mxu0 %v3881
    %v3883 = vpop.f32.mrf.mxu0
    %v3884 = vadd.f32 %v3663, %v3883
    %v3885 = vand.u32 %v2724, 4294901760
    %3886 = vmatmul.f32.gmra.mxu0 %v3885
    %v3887 = vpop.f32.mrf.mxu0
    %v3888 = vadd.f32 %v3671, %v3887
    %v3889 = vand.u32 %v2763, 4294901760
    %3890 = vmatmul.f32.gmra.mxu0 %v3889
    %v3891 = vpop.f32.mrf.mxu0
    %v3892 = vadd.f32 %v3679, %v3891
    %v3893 = vand.u32 %v2727, 4294901760
    %3894 = vmatmul.f32.gmra.mxu0 %v3893
    %v3895 = vpop.f32.mrf.mxu0
    %v3896 = vadd.f32 %v3687, %v3895
    %v3897 = vand.u32 %v2764, 4294901760
    %3898 = vmatmul.f32.gmra.mxu0 %v3897
    %v3899 = vpop.f32.mrf.mxu0
    %v3900 = vadd.f32 %v3695, %v3899
    %v3901 = vand.u32 %v2730, 4294901760
    %3902 = vmatmul.f32.gmra.mxu0 %v3901
    %v3903 = vpop.f32.mrf.mxu0
    %v3904 = vadd.f32 %v3703, %v3903
    %v3905 = vand.u32 %v2765, 4294901760
    %3906 = vmatmul.f32.gmra.mxu0 %v3905
    %v3907 = vpop.f32.mrf.mxu0
    %v3908 = vadd.f32 %v3711, %v3907
    %v3909 = vand.u32 %v2733, 4294901760
    %3910 = vmatmul.f32.gmra.mxu0 %v3909
    %v3911 = vpop.f32.mrf.mxu0
    %v3912 = vadd.f32 %v3719, %v3911
    %v3913 = vand.u32 %v2766, 4294901760
    %3914 = vmatmul.f32.gmra.mxu0 %v3913
    %v3915 = vpop.f32.mrf.mxu0
    %v3916 = vadd.f32 %v3727, %v3915
    %v3917 = vand.u32 %v2736, 4294901760
    %3918 = vmatmul.f32.gmra.mxu0 %v3917
    %v3919 = vpop.f32.mrf.mxu0
    %v3920 = vadd.f32 %v3735, %v3919
    %v3921 = vand.u32 %v2767, 4294901760
    %3922 = vmatmul.f32.gmra.mxu0 %v3921
    %v3923 = vpop.f32.mrf.mxu0
    %v3924 = vadd.f32 %v3743, %v3923
    %v3925 = vand.u32 %v2739, 4294901760
    %3926 = vmatmul.f32.gmra.mxu0 %v3925
    %v3927 = vpop.f32.mrf.mxu0
    %v3928 = vadd.f32 %v3751, %v3927
    %v3929 = vand.u32 %v2768, 4294901760
    %3930 = vmatmul.f32.gmra.mxu0 %v3929
    %v3931 = vpop.f32.mrf.mxu0
    %v3932 = vadd.f32 %v3759, %v3931
    %v3933 = vand.u32 %v2742, 4294901760
    %3934 = vmatmul.f32.gmra.mxu0 %v3933
    %v3935 = vpop.f32.mrf.mxu0
    %v3936 = vadd.f32 %v3767, %v3935
    %v3937 = vand.u32 %v2769, 4294901760
    %3938 = vmatmul.f32.gmra.mxu0 %v3937
    %v3939 = vpop.f32.mrf.mxu0
    %v3940 = vadd.f32 %v3775, %v3939
    %v3941 = vand.u32 %v2745, 4294901760
    %3942 = vmatmul.f32.gmra.mxu0 %v3941
    %v3943 = vpop.f32.mrf.mxu0
    %v3944 = vadd.f32 %v3783, %v3943
    %3945 = vdwg.mxu0
    %v3946 = vand.u32 %v59, 4294901760
    %v3947 = vsub.f32 %v59, %v3946
    %3948 = vmatpush.msra.mxu0 %v3947
    %v3949 = vand.u32 %v58, 4294901760
    %v3950 = vsub.f32 %v58, %v3949
    %3951 = vmatpush.msra.mxu0 %v3950
    %v3952 = vand.u32 %v57, 4294901760
    %v3953 = vsub.f32 %v57, %v3952
    %3954 = vmatpush.msra.mxu0 %v3953
    %v3955 = vand.u32 %v56, 4294901760
    %v3956 = vsub.f32 %v56, %v3955
    %3957 = vmatpush.msra.mxu0 %v3956
    %v3958 = vand.u32 %v55, 4294901760
    %v3959 = vsub.f32 %v55, %v3958
    %3960 = vmatpush.msra.mxu0 %v3959
    %v3961 = vand.u32 %v54, 4294901760
    %v3962 = vsub.f32 %v54, %v3961
    %3963 = vmatpush.msra.mxu0 %v3962
    %v3964 = vand.u32 %v53, 4294901760
    %v3965 = vsub.f32 %v53, %v3964
    %3966 = vmatpush.msra.mxu0 %v3965
    %v3967 = vand.u32 %v52, 4294901760
    %v3968 = vsub.f32 %v52, %v3967
    %3969 = vmatpush.msra.mxu0 %v3968
    %v3970 = vand.u32 %v51, 4294901760
    %v3971 = vsub.f32 %v51, %v3970
    %3972 = vmatpush.msra.mxu0 %v3971
    %v3973 = vand.u32 %v50, 4294901760
    %v3974 = vsub.f32 %v50, %v3973
    %3975 = vmatpush.msra.mxu0 %v3974
    %v3976 = vand.u32 %v49, 4294901760
    %v3977 = vsub.f32 %v49, %v3976
    %3978 = vmatpush.msra.mxu0 %v3977
    %v3979 = vand.u32 %v48, 4294901760
    %v3980 = vsub.f32 %v48, %v3979
    %3981 = vmatpush.msra.mxu0 %v3980
    %v3982 = vand.u32 %v47, 4294901760
    %v3983 = vsub.f32 %v47, %v3982
    %3984 = vmatpush.msra.mxu0 %v3983
    %v3985 = vand.u32 %v46, 4294901760
    %v3986 = vsub.f32 %v46, %v3985
    %3987 = vmatpush.msra.mxu0 %v3986
    %v3988 = vand.u32 %v45, 4294901760
    %v3989 = vsub.f32 %v45, %v3988
    %3990 = vmatpush.msra.mxu0 %v3989
    %v3991 = vand.u32 %v44, 4294901760
    %v3992 = vsub.f32 %v44, %v3991
    %3993 = vmatpush.msra.mxu0 %v3992
    %v3994 = vand.u32 %v2762, 4294901760
    %v3995 = vsub.f32 %v2762, %v3994
    %3996 = vmatmul.f32.gmra.mxu0 %v3995
    %v3997 = vpop.f32.mrf.mxu0
    %v3998 = vadd.f32 %v3884, %v3997
    %v3999 = vand.u32 %v2724, 4294901760
    %v4000 = vsub.f32 %v2724, %v3999
    %4001 = vmatmul.f32.gmra.mxu0 %v4000
    %v4002 = vpop.f32.mrf.mxu0
    %v4003 = vadd.f32 %v3888, %v4002
    %v4004 = vand.u32 %v2763, 4294901760
    %v4005 = vsub.f32 %v2763, %v4004
    %4006 = vmatmul.f32.gmra.mxu0 %v4005
    %v4007 = vpop.f32.mrf.mxu0
    %v4008 = vadd.f32 %v3892, %v4007
    %v4009 = vand.u32 %v2727, 4294901760
    %v4010 = vsub.f32 %v2727, %v4009
    %4011 = vmatmul.f32.gmra.mxu0 %v4010
    %v4012 = vpop.f32.mrf.mxu0
    %v4013 = vadd.f32 %v3896, %v4012
    %v4014 = vand.u32 %v2764, 4294901760
    %v4015 = vsub.f32 %v2764, %v4014
    %4016 = vmatmul.f32.gmra.mxu0 %v4015
    %v4017 = vpop.f32.mrf.mxu0
    %v4018 = vadd.f32 %v3900, %v4017
    %v4019 = vand.u32 %v2730, 4294901760
    %v4020 = vsub.f32 %v2730, %v4019
    %4021 = vmatmul.f32.gmra.mxu0 %v4020
    %v4022 = vpop.f32.mrf.mxu0
    %v4023 = vadd.f32 %v3904, %v4022
    %v4024 = vand.u32 %v2765, 4294901760
    %v4025 = vsub.f32 %v2765, %v4024
    %4026 = vmatmul.f32.gmra.mxu0 %v4025
    %v4027 = vpop.f32.mrf.mxu0
    %v4028 = vadd.f32 %v3908, %v4027
    %v4029 = vand.u32 %v2733, 4294901760
    %v4030 = vsub.f32 %v2733, %v4029
    %4031 = vmatmul.f32.gmra.mxu0 %v4030
    %v4032 = vpop.f32.mrf.mxu0
    %v4033 = vadd.f32 %v3912, %v4032
    %v4034 = vand.u32 %v2766, 4294901760
    %v4035 = vsub.f32 %v2766, %v4034
    %4036 = vmatmul.f32.gmra.mxu0 %v4035
    %v4037 = vpop.f32.mrf.mxu0
    %v4038 = vadd.f32 %v3916, %v4037
    %v4039 = vand.u32 %v2736, 4294901760
    %v4040 = vsub.f32 %v2736, %v4039
    %4041 = vmatmul.f32.gmra.mxu0 %v4040
    %v4042 = vpop.f32.mrf.mxu0
    %v4043 = vadd.f32 %v3920, %v4042
    %v4044 = vand.u32 %v2767, 4294901760
    %v4045 = vsub.f32 %v2767, %v4044
    %4046 = vmatmul.f32.gmra.mxu0 %v4045
    %v4047 = vpop.f32.mrf.mxu0
    %v4048 = vadd.f32 %v3924, %v4047
    %v4049 = vand.u32 %v2739, 4294901760
    %v4050 = vsub.f32 %v2739, %v4049
    %4051 = vmatmul.f32.gmra.mxu0 %v4050
    %v4052 = vpop.f32.mrf.mxu0
    %v4053 = vadd.f32 %v3928, %v4052
    %v4054 = vand.u32 %v2768, 4294901760
    %v4055 = vsub.f32 %v2768, %v4054
    %4056 = vmatmul.f32.gmra.mxu0 %v4055
    %v4057 = vpop.f32.mrf.mxu0
    %v4058 = vadd.f32 %v3932, %v4057
    %v4059 = vand.u32 %v2742, 4294901760
    %v4060 = vsub.f32 %v2742, %v4059
    %4061 = vmatmul.f32.gmra.mxu0 %v4060
    %v4062 = vpop.f32.mrf.mxu0
    %v4063 = vadd.f32 %v3936, %v4062
    %v4064 = vand.u32 %v2769, 4294901760
    %v4065 = vsub.f32 %v2769, %v4064
    %4066 = vmatmul.f32.gmra.mxu0 %v4065
    %v4067 = vpop.f32.mrf.mxu0
    %v4068 = vadd.f32 %v3940, %v4067
    %v4069 = vand.u32 %v2745, 4294901760
    %v4070 = vsub.f32 %v2745, %v4069
    %4071 = vmatmul.f32.gmra.mxu0 %v4070
    %v4072 = vpop.f32.mrf.mxu0
    %v4073 = vadd.f32 %v3944, %v4072
    %4074 = vdwg.mxu0
    %v4075 = vand.u32 %v59, 4294901760
    %4076 = vmatpush.msra.mxu0 %v4075
    %v4077 = vand.u32 %v58, 4294901760
    %4078 = vmatpush.msra.mxu0 %v4077
    %v4079 = vand.u32 %v57, 4294901760
    %4080 = vmatpush.msra.mxu0 %v4079
    %v4081 = vand.u32 %v56, 4294901760
    %4082 = vmatpush.msra.mxu0 %v4081
    %v4083 = vand.u32 %v55, 4294901760
    %4084 = vmatpush.msra.mxu0 %v4083
    %v4085 = vand.u32 %v54, 4294901760
    %4086 = vmatpush.msra.mxu0 %v4085
    %v4087 = vand.u32 %v53, 4294901760
    %4088 = vmatpush.msra.mxu0 %v4087
    %v4089 = vand.u32 %v52, 4294901760
    %4090 = vmatpush.msra.mxu0 %v4089
    %v4091 = vand.u32 %v51, 4294901760
    %4092 = vmatpush.msra.mxu0 %v4091
    %v4093 = vand.u32 %v50, 4294901760
    %4094 = vmatpush.msra.mxu0 %v4093
    %v4095 = vand.u32 %v49, 4294901760
    %4096 = vmatpush.msra.mxu0 %v4095
    %v4097 = vand.u32 %v48, 4294901760
    %4098 = vmatpush.msra.mxu0 %v4097
    %v4099 = vand.u32 %v47, 4294901760
    %4100 = vmatpush.msra.mxu0 %v4099
    %v4101 = vand.u32 %v46, 4294901760
    %4102 = vmatpush.msra.mxu0 %v4101
    %v4103 = vand.u32 %v45, 4294901760
    %4104 = vmatpush.msra.mxu0 %v4103
    %v4105 = vand.u32 %v44, 4294901760
    %4106 = vmatpush.msra.mxu0 %v4105
    %v4107 = vand.u32 %v2762, 4294901760
    %v4108 = vsub.f32 %v2762, %v4107
    %v4109 = vand.u32 %v4108, 4294901760
    %4110 = vmatmul.f32.gmra.mxu0 %v4109
    %v4111 = vpop.f32.mrf.mxu0
    %v4112 = vadd.f32 %v3998, %v4111
    %v4113 = vand.u32 %v2724, 4294901760
    %v4114 = vsub.f32 %v2724, %v4113
    %v4115 = vand.u32 %v4114, 4294901760
    %4116 = vmatmul.f32.gmra.mxu0 %v4115
    %v4117 = vpop.f32.mrf.mxu0
    %v4118 = vadd.f32 %v4003, %v4117
    %v4119 = vand.u32 %v2763, 4294901760
    %v4120 = vsub.f32 %v2763, %v4119
    %v4121 = vand.u32 %v4120, 4294901760
    %4122 = vmatmul.f32.gmra.mxu0 %v4121
    %v4123 = vpop.f32.mrf.mxu0
    %v4124 = vadd.f32 %v4008, %v4123
    %v4125 = vand.u32 %v2727, 4294901760
    %v4126 = vsub.f32 %v2727, %v4125
    %v4127 = vand.u32 %v4126, 4294901760
    %4128 = vmatmul.f32.gmra.mxu0 %v4127
    %v4129 = vpop.f32.mrf.mxu0
    %v4130 = vadd.f32 %v4013, %v4129
    %v4131 = vand.u32 %v2764, 4294901760
    %v4132 = vsub.f32 %v2764, %v4131
    %v4133 = vand.u32 %v4132, 4294901760
    %4134 = vmatmul.f32.gmra.mxu0 %v4133
    %v4135 = vpop.f32.mrf.mxu0
    %v4136 = vadd.f32 %v4018, %v4135
    %v4137 = vand.u32 %v2730, 4294901760
    %v4138 = vsub.f32 %v2730, %v4137
    %v4139 = vand.u32 %v4138, 4294901760
    %4140 = vmatmul.f32.gmra.mxu0 %v4139
    %v4141 = vpop.f32.mrf.mxu0
    %v4142 = vadd.f32 %v4023, %v4141
    %v4143 = vand.u32 %v2765, 4294901760
    %v4144 = vsub.f32 %v2765, %v4143
    %v4145 = vand.u32 %v4144, 4294901760
    %4146 = vmatmul.f32.gmra.mxu0 %v4145
    %v4147 = vpop.f32.mrf.mxu0
    %v4148 = vadd.f32 %v4028, %v4147
    %v4149 = vand.u32 %v2733, 4294901760
    %v4150 = vsub.f32 %v2733, %v4149
    %v4151 = vand.u32 %v4150, 4294901760
    %4152 = vmatmul.f32.gmra.mxu0 %v4151
    %v4153 = vpop.f32.mrf.mxu0
    %v4154 = vadd.f32 %v4033, %v4153
    %v4155 = vand.u32 %v2766, 4294901760
    %v4156 = vsub.f32 %v2766, %v4155
    %v4157 = vand.u32 %v4156, 4294901760
    %4158 = vmatmul.f32.gmra.mxu0 %v4157
    %v4159 = vpop.f32.mrf.mxu0
    %v4160 = vadd.f32 %v4038, %v4159
    %v4161 = vand.u32 %v2736, 4294901760
    %v4162 = vsub.f32 %v2736, %v4161
    %v4163 = vand.u32 %v4162, 4294901760
    %4164 = vmatmul.f32.gmra.mxu0 %v4163
    %v4165 = vpop.f32.mrf.mxu0
    %v4166 = vadd.f32 %v4043, %v4165
    %v4167 = vand.u32 %v2767, 4294901760
    %v4168 = vsub.f32 %v2767, %v4167
    %v4169 = vand.u32 %v4168, 4294901760
    %4170 = vmatmul.f32.gmra.mxu0 %v4169
    %v4171 = vpop.f32.mrf.mxu0
    %v4172 = vadd.f32 %v4048, %v4171
    %v4173 = vand.u32 %v2739, 4294901760
    %v4174 = vsub.f32 %v2739, %v4173
    %v4175 = vand.u32 %v4174, 4294901760
    %4176 = vmatmul.f32.gmra.mxu0 %v4175
    %v4177 = vpop.f32.mrf.mxu0
    %v4178 = vadd.f32 %v4053, %v4177
    %v4179 = vand.u32 %v2768, 4294901760
    %v4180 = vsub.f32 %v2768, %v4179
    %v4181 = vand.u32 %v4180, 4294901760
    %4182 = vmatmul.f32.gmra.mxu0 %v4181
    %v4183 = vpop.f32.mrf.mxu0
    %v4184 = vadd.f32 %v4058, %v4183
    %v4185 = vand.u32 %v2742, 4294901760
    %v4186 = vsub.f32 %v2742, %v4185
    %v4187 = vand.u32 %v4186, 4294901760
    %4188 = vmatmul.f32.gmra.mxu0 %v4187
    %v4189 = vpop.f32.mrf.mxu0
    %v4190 = vadd.f32 %v4063, %v4189
    %v4191 = vand.u32 %v2769, 4294901760
    %v4192 = vsub.f32 %v2769, %v4191
    %v4193 = vand.u32 %v4192, 4294901760
    %4194 = vmatmul.f32.gmra.mxu0 %v4193
    %v4195 = vpop.f32.mrf.mxu0
    %v4196 = vadd.f32 %v4068, %v4195
    %v4197 = vand.u32 %v2745, 4294901760
    %v4198 = vsub.f32 %v2745, %v4197
    %v4199 = vand.u32 %v4198, 4294901760
    %4200 = vmatmul.f32.gmra.mxu0 %v4199
    %v4201 = vpop.f32.mrf.mxu0
    %v4202 = vadd.f32 %v4073, %v4201
    %4203 = vdwg.mxu0
    %v4204 = vand.u32 %v59, 4294901760
    %v4205 = vsub.f32 %v59, %v4204
    %v4206 = vand.u32 %v4205, 4294901760
    %4207 = vmatpush.msra.mxu0 %v4206
    %v4208 = vand.u32 %v58, 4294901760
    %v4209 = vsub.f32 %v58, %v4208
    %v4210 = vand.u32 %v4209, 4294901760
    %4211 = vmatpush.msra.mxu0 %v4210
    %v4212 = vand.u32 %v57, 4294901760
    %v4213 = vsub.f32 %v57, %v4212
    %v4214 = vand.u32 %v4213, 4294901760
    %4215 = vmatpush.msra.mxu0 %v4214
    %v4216 = vand.u32 %v56, 4294901760
    %v4217 = vsub.f32 %v56, %v4216
    %v4218 = vand.u32 %v4217, 4294901760
    %4219 = vmatpush.msra.mxu0 %v4218
    %v4220 = vand.u32 %v55, 4294901760
    %v4221 = vsub.f32 %v55, %v4220
    %v4222 = vand.u32 %v4221, 4294901760
    %4223 = vmatpush.msra.mxu0 %v4222
    %v4224 = vand.u32 %v54, 4294901760
    %v4225 = vsub.f32 %v54, %v4224
    %v4226 = vand.u32 %v4225, 4294901760
    %4227 = vmatpush.msra.mxu0 %v4226
    %v4228 = vand.u32 %v53, 4294901760
    %v4229 = vsub.f32 %v53, %v4228
    %v4230 = vand.u32 %v4229, 4294901760
    %4231 = vmatpush.msra.mxu0 %v4230
    %v4232 = vand.u32 %v52, 4294901760
    %v4233 = vsub.f32 %v52, %v4232
    %v4234 = vand.u32 %v4233, 4294901760
    %4235 = vmatpush.msra.mxu0 %v4234
    %v4236 = vand.u32 %v51, 4294901760
    %v4237 = vsub.f32 %v51, %v4236
    %v4238 = vand.u32 %v4237, 4294901760
    %4239 = vmatpush.msra.mxu0 %v4238
    %v4240 = vand.u32 %v50, 4294901760
    %v4241 = vsub.f32 %v50, %v4240
    %v4242 = vand.u32 %v4241, 4294901760
    %4243 = vmatpush.msra.mxu0 %v4242
    %v4244 = vand.u32 %v49, 4294901760
    %v4245 = vsub.f32 %v49, %v4244
    %v4246 = vand.u32 %v4245, 4294901760
    %4247 = vmatpush.msra.mxu0 %v4246
    %v4248 = vand.u32 %v48, 4294901760
    %v4249 = vsub.f32 %v48, %v4248
    %v4250 = vand.u32 %v4249, 4294901760
    %4251 = vmatpush.msra.mxu0 %v4250
    %v4252 = vand.u32 %v47, 4294901760
    %v4253 = vsub.f32 %v47, %v4252
    %v4254 = vand.u32 %v4253, 4294901760
    %4255 = vmatpush.msra.mxu0 %v4254
    %v4256 = vand.u32 %v46, 4294901760
    %v4257 = vsub.f32 %v46, %v4256
    %v4258 = vand.u32 %v4257, 4294901760
    %4259 = vmatpush.msra.mxu0 %v4258
    %v4260 = vand.u32 %v45, 4294901760
    %v4261 = vsub.f32 %v45, %v4260
    %v4262 = vand.u32 %v4261, 4294901760
    %4263 = vmatpush.msra.mxu0 %v4262
    %v4264 = vand.u32 %v44, 4294901760
    %v4265 = vsub.f32 %v44, %v4264
    %v4266 = vand.u32 %v4265, 4294901760
    %4267 = vmatpush.msra.mxu0 %v4266
    %v4268 = vand.u32 %v2762, 4294901760
    %4269 = vmatmul.f32.gmra.mxu0 %v4268
    %v4270 = vpop.f32.mrf.mxu0
    %v4271 = vadd.f32 %v4112, %v4270
    %v4272 = vand.u32 %v2724, 4294901760
    %4273 = vmatmul.f32.gmra.mxu0 %v4272
    %v4274 = vpop.f32.mrf.mxu0
    %v4275 = vadd.f32 %v4118, %v4274
    %v4276 = vand.u32 %v2763, 4294901760
    %4277 = vmatmul.f32.gmra.mxu0 %v4276
    %v4278 = vpop.f32.mrf.mxu0
    %v4279 = vadd.f32 %v4124, %v4278
    %v4280 = vand.u32 %v2727, 4294901760
    %4281 = vmatmul.f32.gmra.mxu0 %v4280
    %v4282 = vpop.f32.mrf.mxu0
    %v4283 = vadd.f32 %v4130, %v4282
    %v4284 = vand.u32 %v2764, 4294901760
    %4285 = vmatmul.f32.gmra.mxu0 %v4284
    %v4286 = vpop.f32.mrf.mxu0
    %v4287 = vadd.f32 %v4136, %v4286
    %v4288 = vand.u32 %v2730, 4294901760
    %4289 = vmatmul.f32.gmra.mxu0 %v4288
    %v4290 = vpop.f32.mrf.mxu0
    %v4291 = vadd.f32 %v4142, %v4290
    %v4292 = vand.u32 %v2765, 4294901760
    %4293 = vmatmul.f32.gmra.mxu0 %v4292
    %v4294 = vpop.f32.mrf.mxu0
    %v4295 = vadd.f32 %v4148, %v4294
    %v4296 = vand.u32 %v2733, 4294901760
    %4297 = vmatmul.f32.gmra.mxu0 %v4296
    %v4298 = vpop.f32.mrf.mxu0
    %v4299 = vadd.f32 %v4154, %v4298
    %v4300 = vand.u32 %v2766, 4294901760
    %4301 = vmatmul.f32.gmra.mxu0 %v4300
    %v4302 = vpop.f32.mrf.mxu0
    %v4303 = vadd.f32 %v4160, %v4302
    %v4304 = vand.u32 %v2736, 4294901760
    %4305 = vmatmul.f32.gmra.mxu0 %v4304
    %v4306 = vpop.f32.mrf.mxu0
    %v4307 = vadd.f32 %v4166, %v4306
    %v4308 = vand.u32 %v2767, 4294901760
    %4309 = vmatmul.f32.gmra.mxu0 %v4308
    %v4310 = vpop.f32.mrf.mxu0
    %v4311 = vadd.f32 %v4172, %v4310
    %v4312 = vand.u32 %v2739, 4294901760
    %4313 = vmatmul.f32.gmra.mxu0 %v4312
    %v4314 = vpop.f32.mrf.mxu0
    %v4315 = vadd.f32 %v4178, %v4314
    %v4316 = vand.u32 %v2768, 4294901760
    %4317 = vmatmul.f32.gmra.mxu0 %v4316
    %v4318 = vpop.f32.mrf.mxu0
    %v4319 = vadd.f32 %v4184, %v4318
    %v4320 = vand.u32 %v2742, 4294901760
    %4321 = vmatmul.f32.gmra.mxu0 %v4320
    %v4322 = vpop.f32.mrf.mxu0
    %v4323 = vadd.f32 %v4190, %v4322
    %v4324 = vand.u32 %v2769, 4294901760
    %4325 = vmatmul.f32.gmra.mxu0 %v4324
    %v4326 = vpop.f32.mrf.mxu0
    %v4327 = vadd.f32 %v4196, %v4326
    %v4328 = vand.u32 %v2745, 4294901760
    %4329 = vmatmul.f32.gmra.mxu0 %v4328
    %v4330 = vpop.f32.mrf.mxu0
    %v4331 = vadd.f32 %v4202, %v4330
    %4332 = vdwg.mxu0
    %v4333 = vand.u32 %v59, 4294901760
    %4334 = vmatpush.msra.mxu0 %v4333
    %v4335 = vand.u32 %v58, 4294901760
    %4336 = vmatpush.msra.mxu0 %v4335
    %v4337 = vand.u32 %v57, 4294901760
    %4338 = vmatpush.msra.mxu0 %v4337
    %v4339 = vand.u32 %v56, 4294901760
    %4340 = vmatpush.msra.mxu0 %v4339
    %v4341 = vand.u32 %v55, 4294901760
    %4342 = vmatpush.msra.mxu0 %v4341
    %v4343 = vand.u32 %v54, 4294901760
    %4344 = vmatpush.msra.mxu0 %v4343
    %v4345 = vand.u32 %v53, 4294901760
    %4346 = vmatpush.msra.mxu0 %v4345
    %v4347 = vand.u32 %v52, 4294901760
    %4348 = vmatpush.msra.mxu0 %v4347
    %v4349 = vand.u32 %v51, 4294901760
    %4350 = vmatpush.msra.mxu0 %v4349
    %v4351 = vand.u32 %v50, 4294901760
    %4352 = vmatpush.msra.mxu0 %v4351
    %v4353 = vand.u32 %v49, 4294901760
    %4354 = vmatpush.msra.mxu0 %v4353
    %v4355 = vand.u32 %v48, 4294901760
    %4356 = vmatpush.msra.mxu0 %v4355
    %v4357 = vand.u32 %v47, 4294901760
    %4358 = vmatpush.msra.mxu0 %v4357
    %v4359 = vand.u32 %v46, 4294901760
    %4360 = vmatpush.msra.mxu0 %v4359
    %v4361 = vand.u32 %v45, 4294901760
    %4362 = vmatpush.msra.mxu0 %v4361
    %v4363 = vand.u32 %v44, 4294901760
    %4364 = vmatpush.msra.mxu0 %v4363
    %v4365 = vand.u32 %v2762, 4294901760
    %4366 = vmatmul.f32.gmra.mxu0 %v4365
    %v4367 = vpop.f32.mrf.mxu0
    %v4368 = vadd.f32 %v4271, %v4367
    %v4369 = vand.u32 %v2724, 4294901760
    %4370 = vmatmul.f32.gmra.mxu0 %v4369
    %v4371 = vpop.f32.mrf.mxu0
    %v4372 = vadd.f32 %v4275, %v4371
    %v4373 = vand.u32 %v2763, 4294901760
    %4374 = vmatmul.f32.gmra.mxu0 %v4373
    %v4375 = vpop.f32.mrf.mxu0
    %v4376 = vadd.f32 %v4279, %v4375
    %v4377 = vand.u32 %v2727, 4294901760
    %4378 = vmatmul.f32.gmra.mxu0 %v4377
    %v4379 = vpop.f32.mrf.mxu0
    %v4380 = vadd.f32 %v4283, %v4379
    %v4381 = vand.u32 %v2764, 4294901760
    %4382 = vmatmul.f32.gmra.mxu0 %v4381
    %v4383 = vpop.f32.mrf.mxu0
    %v4384 = vadd.f32 %v4287, %v4383
    %v4385 = vand.u32 %v2730, 4294901760
    %4386 = vmatmul.f32.gmra.mxu0 %v4385
    %v4387 = vpop.f32.mrf.mxu0
    %v4388 = vadd.f32 %v4291, %v4387
    %v4389 = vand.u32 %v2765, 4294901760
    %4390 = vmatmul.f32.gmra.mxu0 %v4389
    %v4391 = vpop.f32.mrf.mxu0
    %v4392 = vadd.f32 %v4295, %v4391
    %v4393 = vand.u32 %v2733, 4294901760
    %4394 = vmatmul.f32.gmra.mxu0 %v4393
    %v4395 = vpop.f32.mrf.mxu0
    %v4396 = vadd.f32 %v4299, %v4395
    %v4397 = vand.u32 %v2766, 4294901760
    %4398 = vmatmul.f32.gmra.mxu0 %v4397
    %v4399 = vpop.f32.mrf.mxu0
    %v4400 = vadd.f32 %v4303, %v4399
    %v4401 = vand.u32 %v2736, 4294901760
    %4402 = vmatmul.f32.gmra.mxu0 %v4401
    %v4403 = vpop.f32.mrf.mxu0
    %v4404 = vadd.f32 %v4307, %v4403
    %v4405 = vand.u32 %v2767, 4294901760
    %4406 = vmatmul.f32.gmra.mxu0 %v4405
    %v4407 = vpop.f32.mrf.mxu0
    %v4408 = vadd.f32 %v4311, %v4407
    %v4409 = vand.u32 %v2739, 4294901760
    %4410 = vmatmul.f32.gmra.mxu0 %v4409
    %v4411 = vpop.f32.mrf.mxu0
    %v4412 = vadd.f32 %v4315, %v4411
    %v4413 = vand.u32 %v2768, 4294901760
    %4414 = vmatmul.f32.gmra.mxu0 %v4413
    %v4415 = vpop.f32.mrf.mxu0
    %v4416 = vadd.f32 %v4319, %v4415
    %v4417 = vand.u32 %v2742, 4294901760
    %4418 = vmatmul.f32.gmra.mxu0 %v4417
    %v4419 = vpop.f32.mrf.mxu0
    %v4420 = vadd.f32 %v4323, %v4419
    %v4421 = vand.u32 %v2769, 4294901760
    %4422 = vmatmul.f32.gmra.mxu0 %v4421
    %v4423 = vpop.f32.mrf.mxu0
    %v4424 = vadd.f32 %v4327, %v4423
    %v4425 = vand.u32 %v2745, 4294901760
    %4426 = vmatmul.f32.gmra.mxu0 %v4425
    %v4427 = vpop.f32.mrf.mxu0
    %v4428 = vadd.f32 %v4331, %v4427
    %4429 = vdwg.mxu0
    %v4430 = vand.u32 %v93, 4294901760
    %4431 = vmatpush.msra.mxu0 %v4430
    %v4432 = vand.u32 %v92, 4294901760
    %4433 = vmatpush.msra.mxu0 %v4432
    %v4434 = vand.u32 %v91, 4294901760
    %4435 = vmatpush.msra.mxu0 %v4434
    %v4436 = vand.u32 %v90, 4294901760
    %4437 = vmatpush.msra.mxu0 %v4436
    %v4438 = vand.u32 %v89, 4294901760
    %4439 = vmatpush.msra.mxu0 %v4438
    %v4440 = vand.u32 %v88, 4294901760
    %4441 = vmatpush.msra.mxu0 %v4440
    %v4442 = vand.u32 %v87, 4294901760
    %4443 = vmatpush.msra.mxu0 %v4442
    %v4444 = vand.u32 %v86, 4294901760
    %4445 = vmatpush.msra.mxu0 %v4444
    %v4446 = vand.u32 %v85, 4294901760
    %4447 = vmatpush.msra.mxu0 %v4446
    %v4448 = vand.u32 %v84, 4294901760
    %4449 = vmatpush.msra.mxu0 %v4448
    %v4450 = vand.u32 %v83, 4294901760
    %4451 = vmatpush.msra.mxu0 %v4450
    %v4452 = vand.u32 %v82, 4294901760
    %4453 = vmatpush.msra.mxu0 %v4452
    %v4454 = vand.u32 %v81, 4294901760
    %4455 = vmatpush.msra.mxu0 %v4454
    %v4456 = vand.u32 %v80, 4294901760
    %4457 = vmatpush.msra.mxu0 %v4456
    %v4458 = vand.u32 %v79, 4294901760
    %4459 = vmatpush.msra.mxu0 %v4458
    %v4460 = vand.u32 %v78, 4294901760
    %4461 = vmatpush.msra.mxu0 %v4460
    %v4462 = vand.u32 %v2772, 4294901760
    %v4463 = vsub.f32 %v2772, %v4462
    %v4464 = vand.u32 %v4463, 4294901760
    %v4465 = vsub.f32 %v4463, %v4464
    %v4466 = vand.u32 %v4465, 4294901760
    %4467 = vmatmul.f32.gmra.mxu0 %v4466
    %v4468 = vpop.f32.mrf.mxu0
    %v4469 = vadd.f32 0.0, %v4468
    %v4470 = vand.u32 %v2810, 4294901760
    %v4471 = vsub.f32 %v2810, %v4470
    %v4472 = vand.u32 %v4471, 4294901760
    %v4473 = vsub.f32 %v4471, %v4472
    %v4474 = vand.u32 %v4473, 4294901760
    %4475 = vmatmul.f32.gmra.mxu0 %v4474
    %v4476 = vpop.f32.mrf.mxu0
    %v4477 = vadd.f32 0.0, %v4476
    %v4478 = vand.u32 %v2775, 4294901760
    %v4479 = vsub.f32 %v2775, %v4478
    %v4480 = vand.u32 %v4479, 4294901760
    %v4481 = vsub.f32 %v4479, %v4480
    %v4482 = vand.u32 %v4481, 4294901760
    %4483 = vmatmul.f32.gmra.mxu0 %v4482
    %v4484 = vpop.f32.mrf.mxu0
    %v4485 = vadd.f32 0.0, %v4484
    %v4486 = vand.u32 %v2811, 4294901760
    %v4487 = vsub.f32 %v2811, %v4486
    %v4488 = vand.u32 %v4487, 4294901760
    %v4489 = vsub.f32 %v4487, %v4488
    %v4490 = vand.u32 %v4489, 4294901760
    %4491 = vmatmul.f32.gmra.mxu0 %v4490
    %v4492 = vpop.f32.mrf.mxu0
    %v4493 = vadd.f32 0.0, %v4492
    %v4494 = vand.u32 %v2778, 4294901760
    %v4495 = vsub.f32 %v2778, %v4494
    %v4496 = vand.u32 %v4495, 4294901760
    %v4497 = vsub.f32 %v4495, %v4496
    %v4498 = vand.u32 %v4497, 4294901760
    %4499 = vmatmul.f32.gmra.mxu0 %v4498
    %v4500 = vpop.f32.mrf.mxu0
    %v4501 = vadd.f32 0.0, %v4500
    %v4502 = vand.u32 %v2812, 4294901760
    %v4503 = vsub.f32 %v2812, %v4502
    %v4504 = vand.u32 %v4503, 4294901760
    %v4505 = vsub.f32 %v4503, %v4504
    %v4506 = vand.u32 %v4505, 4294901760
    %4507 = vmatmul.f32.gmra.mxu0 %v4506
    %v4508 = vpop.f32.mrf.mxu0
    %v4509 = vadd.f32 0.0, %v4508
    %v4510 = vand.u32 %v2781, 4294901760
    %v4511 = vsub.f32 %v2781, %v4510
    %v4512 = vand.u32 %v4511, 4294901760
    %v4513 = vsub.f32 %v4511, %v4512
    %v4514 = vand.u32 %v4513, 4294901760
    %4515 = vmatmul.f32.gmra.mxu0 %v4514
    %v4516 = vpop.f32.mrf.mxu0
    %v4517 = vadd.f32 0.0, %v4516
    %v4518 = vand.u32 %v2813, 4294901760
    %v4519 = vsub.f32 %v2813, %v4518
    %v4520 = vand.u32 %v4519, 4294901760
    %v4521 = vsub.f32 %v4519, %v4520
    %v4522 = vand.u32 %v4521, 4294901760
    %4523 = vmatmul.f32.gmra.mxu0 %v4522
    %v4524 = vpop.f32.mrf.mxu0
    %v4525 = vadd.f32 0.0, %v4524
    %v4526 = vand.u32 %v2784, 4294901760
    %v4527 = vsub.f32 %v2784, %v4526
    %v4528 = vand.u32 %v4527, 4294901760
    %v4529 = vsub.f32 %v4527, %v4528
    %v4530 = vand.u32 %v4529, 4294901760
    %4531 = vmatmul.f32.gmra.mxu0 %v4530
    %v4532 = vpop.f32.mrf.mxu0
    %v4533 = vadd.f32 0.0, %v4532
    %v4534 = vand.u32 %v2814, 4294901760
    %v4535 = vsub.f32 %v2814, %v4534
    %v4536 = vand.u32 %v4535, 4294901760
    %v4537 = vsub.f32 %v4535, %v4536
    %v4538 = vand.u32 %v4537, 4294901760
    %4539 = vmatmul.f32.gmra.mxu0 %v4538
    %v4540 = vpop.f32.mrf.mxu0
    %v4541 = vadd.f32 0.0, %v4540
    %v4542 = vand.u32 %v2787, 4294901760
    %v4543 = vsub.f32 %v2787, %v4542
    %v4544 = vand.u32 %v4543, 4294901760
    %v4545 = vsub.f32 %v4543, %v4544
    %v4546 = vand.u32 %v4545, 4294901760
    %4547 = vmatmul.f32.gmra.mxu0 %v4546
    %v4548 = vpop.f32.mrf.mxu0
    %v4549 = vadd.f32 0.0, %v4548
    %v4550 = vand.u32 %v2815, 4294901760
    %v4551 = vsub.f32 %v2815, %v4550
    %v4552 = vand.u32 %v4551, 4294901760
    %v4553 = vsub.f32 %v4551, %v4552
    %v4554 = vand.u32 %v4553, 4294901760
    %4555 = vmatmul.f32.gmra.mxu0 %v4554
    %v4556 = vpop.f32.mrf.mxu0
    %v4557 = vadd.f32 0.0, %v4556
    %v4558 = vand.u32 %v2790, 4294901760
    %v4559 = vsub.f32 %v2790, %v4558
    %v4560 = vand.u32 %v4559, 4294901760
    %v4561 = vsub.f32 %v4559, %v4560
    %v4562 = vand.u32 %v4561, 4294901760
    %4563 = vmatmul.f32.gmra.mxu0 %v4562
    %v4564 = vpop.f32.mrf.mxu0
    %v4565 = vadd.f32 0.0, %v4564
    %v4566 = vand.u32 %v2816, 4294901760
    %v4567 = vsub.f32 %v2816, %v4566
    %v4568 = vand.u32 %v4567, 4294901760
    %v4569 = vsub.f32 %v4567, %v4568
    %v4570 = vand.u32 %v4569, 4294901760
    %4571 = vmatmul.f32.gmra.mxu0 %v4570
    %v4572 = vpop.f32.mrf.mxu0
    %v4573 = vadd.f32 0.0, %v4572
    %v4574 = vand.u32 %v2793, 4294901760
    %v4575 = vsub.f32 %v2793, %v4574
    %v4576 = vand.u32 %v4575, 4294901760
    %v4577 = vsub.f32 %v4575, %v4576
    %v4578 = vand.u32 %v4577, 4294901760
    %4579 = vmatmul.f32.gmra.mxu0 %v4578
    %v4580 = vpop.f32.mrf.mxu0
    %v4581 = vadd.f32 0.0, %v4580
    %v4582 = vand.u32 %v2817, 4294901760
    %v4583 = vsub.f32 %v2817, %v4582
    %v4584 = vand.u32 %v4583, 4294901760
    %v4585 = vsub.f32 %v4583, %v4584
    %v4586 = vand.u32 %v4585, 4294901760
    %4587 = vmatmul.f32.gmra.mxu0 %v4586
    %v4588 = vpop.f32.mrf.mxu0
    %v4589 = vadd.f32 0.0, %v4588
    %4590 = vdwg.mxu0
    %v4591 = vand.u32 %v93, 4294901760
    %v4592 = vsub.f32 %v93, %v4591
    %v4593 = vand.u32 %v4592, 4294901760
    %v4594 = vsub.f32 %v4592, %v4593
    %v4595 = vand.u32 %v4594, 4294901760
    %4596 = vmatpush.msra.mxu0 %v4595
    %v4597 = vand.u32 %v92, 4294901760
    %v4598 = vsub.f32 %v92, %v4597
    %v4599 = vand.u32 %v4598, 4294901760
    %v4600 = vsub.f32 %v4598, %v4599
    %v4601 = vand.u32 %v4600, 4294901760
    %4602 = vmatpush.msra.mxu0 %v4601
    %v4603 = vand.u32 %v91, 4294901760
    %v4604 = vsub.f32 %v91, %v4603
    %v4605 = vand.u32 %v4604, 4294901760
    %v4606 = vsub.f32 %v4604, %v4605
    %v4607 = vand.u32 %v4606, 4294901760
    %4608 = vmatpush.msra.mxu0 %v4607
    %v4609 = vand.u32 %v90, 4294901760
    %v4610 = vsub.f32 %v90, %v4609
    %v4611 = vand.u32 %v4610, 4294901760
    %v4612 = vsub.f32 %v4610, %v4611
    %v4613 = vand.u32 %v4612, 4294901760
    %4614 = vmatpush.msra.mxu0 %v4613
    %v4615 = vand.u32 %v89, 4294901760
    %v4616 = vsub.f32 %v89, %v4615
    %v4617 = vand.u32 %v4616, 4294901760
    %v4618 = vsub.f32 %v4616, %v4617
    %v4619 = vand.u32 %v4618, 4294901760
    %4620 = vmatpush.msra.mxu0 %v4619
    %v4621 = vand.u32 %v88, 4294901760
    %v4622 = vsub.f32 %v88, %v4621
    %v4623 = vand.u32 %v4622, 4294901760
    %v4624 = vsub.f32 %v4622, %v4623
    %v4625 = vand.u32 %v4624, 4294901760
    %4626 = vmatpush.msra.mxu0 %v4625
    %v4627 = vand.u32 %v87, 4294901760
    %v4628 = vsub.f32 %v87, %v4627
    %v4629 = vand.u32 %v4628, 4294901760
    %v4630 = vsub.f32 %v4628, %v4629
    %v4631 = vand.u32 %v4630, 4294901760
    %4632 = vmatpush.msra.mxu0 %v4631
    %v4633 = vand.u32 %v86, 4294901760
    %v4634 = vsub.f32 %v86, %v4633
    %v4635 = vand.u32 %v4634, 4294901760
    %v4636 = vsub.f32 %v4634, %v4635
    %v4637 = vand.u32 %v4636, 4294901760
    %4638 = vmatpush.msra.mxu0 %v4637
    %v4639 = vand.u32 %v85, 4294901760
    %v4640 = vsub.f32 %v85, %v4639
    %v4641 = vand.u32 %v4640, 4294901760
    %v4642 = vsub.f32 %v4640, %v4641
    %v4643 = vand.u32 %v4642, 4294901760
    %4644 = vmatpush.msra.mxu0 %v4643
    %v4645 = vand.u32 %v84, 4294901760
    %v4646 = vsub.f32 %v84, %v4645
    %v4647 = vand.u32 %v4646, 4294901760
    %v4648 = vsub.f32 %v4646, %v4647
    %v4649 = vand.u32 %v4648, 4294901760
    %4650 = vmatpush.msra.mxu0 %v4649
    %v4651 = vand.u32 %v83, 4294901760
    %v4652 = vsub.f32 %v83, %v4651
    %v4653 = vand.u32 %v4652, 4294901760
    %v4654 = vsub.f32 %v4652, %v4653
    %v4655 = vand.u32 %v4654, 4294901760
    %4656 = vmatpush.msra.mxu0 %v4655
    %v4657 = vand.u32 %v82, 4294901760
    %v4658 = vsub.f32 %v82, %v4657
    %v4659 = vand.u32 %v4658, 4294901760
    %v4660 = vsub.f32 %v4658, %v4659
    %v4661 = vand.u32 %v4660, 4294901760
    %4662 = vmatpush.msra.mxu0 %v4661
    %v4663 = vand.u32 %v81, 4294901760
    %v4664 = vsub.f32 %v81, %v4663
    %v4665 = vand.u32 %v4664, 4294901760
    %v4666 = vsub.f32 %v4664, %v4665
    %v4667 = vand.u32 %v4666, 4294901760
    %4668 = vmatpush.msra.mxu0 %v4667
    %v4669 = vand.u32 %v80, 4294901760
    %v4670 = vsub.f32 %v80, %v4669
    %v4671 = vand.u32 %v4670, 4294901760
    %v4672 = vsub.f32 %v4670, %v4671
    %v4673 = vand.u32 %v4672, 4294901760
    %4674 = vmatpush.msra.mxu0 %v4673
    %v4675 = vand.u32 %v79, 4294901760
    %v4676 = vsub.f32 %v79, %v4675
    %v4677 = vand.u32 %v4676, 4294901760
    %v4678 = vsub.f32 %v4676, %v4677
    %v4679 = vand.u32 %v4678, 4294901760
    %4680 = vmatpush.msra.mxu0 %v4679
    %v4681 = vand.u32 %v78, 4294901760
    %v4682 = vsub.f32 %v78, %v4681
    %v4683 = vand.u32 %v4682, 4294901760
    %v4684 = vsub.f32 %v4682, %v4683
    %v4685 = vand.u32 %v4684, 4294901760
    %4686 = vmatpush.msra.mxu0 %v4685
    %v4687 = vand.u32 %v2772, 4294901760
    %4688 = vmatmul.f32.gmra.mxu0 %v4687
    %v4689 = vpop.f32.mrf.mxu0
    %v4690 = vadd.f32 %v4469, %v4689
    %v4691 = vand.u32 %v2810, 4294901760
    %4692 = vmatmul.f32.gmra.mxu0 %v4691
    %v4693 = vpop.f32.mrf.mxu0
    %v4694 = vadd.f32 %v4477, %v4693
    %v4695 = vand.u32 %v2775, 4294901760
    %4696 = vmatmul.f32.gmra.mxu0 %v4695
    %v4697 = vpop.f32.mrf.mxu0
    %v4698 = vadd.f32 %v4485, %v4697
    %v4699 = vand.u32 %v2811, 4294901760
    %4700 = vmatmul.f32.gmra.mxu0 %v4699
    %v4701 = vpop.f32.mrf.mxu0
    %v4702 = vadd.f32 %v4493, %v4701
    %v4703 = vand.u32 %v2778, 4294901760
    %4704 = vmatmul.f32.gmra.mxu0 %v4703
    %v4705 = vpop.f32.mrf.mxu0
    %v4706 = vadd.f32 %v4501, %v4705
    %v4707 = vand.u32 %v2812, 4294901760
    %4708 = vmatmul.f32.gmra.mxu0 %v4707
    %v4709 = vpop.f32.mrf.mxu0
    %v4710 = vadd.f32 %v4509, %v4709
    %v4711 = vand.u32 %v2781, 4294901760
    %4712 = vmatmul.f32.gmra.mxu0 %v4711
    %v4713 = vpop.f32.mrf.mxu0
    %v4714 = vadd.f32 %v4517, %v4713
    %v4715 = vand.u32 %v2813, 4294901760
    %4716 = vmatmul.f32.gmra.mxu0 %v4715
    %v4717 = vpop.f32.mrf.mxu0
    %v4718 = vadd.f32 %v4525, %v4717
    %v4719 = vand.u32 %v2784, 4294901760
    %4720 = vmatmul.f32.gmra.mxu0 %v4719
    %v4721 = vpop.f32.mrf.mxu0
    %v4722 = vadd.f32 %v4533, %v4721
    %v4723 = vand.u32 %v2814, 4294901760
    %4724 = vmatmul.f32.gmra.mxu0 %v4723
    %v4725 = vpop.f32.mrf.mxu0
    %v4726 = vadd.f32 %v4541, %v4725
    %v4727 = vand.u32 %v2787, 4294901760
    %4728 = vmatmul.f32.gmra.mxu0 %v4727
    %v4729 = vpop.f32.mrf.mxu0
    %v4730 = vadd.f32 %v4549, %v4729
    %v4731 = vand.u32 %v2815, 4294901760
    %4732 = vmatmul.f32.gmra.mxu0 %v4731
    %v4733 = vpop.f32.mrf.mxu0
    %v4734 = vadd.f32 %v4557, %v4733
    %v4735 = vand.u32 %v2790, 4294901760
    %4736 = vmatmul.f32.gmra.mxu0 %v4735
    %v4737 = vpop.f32.mrf.mxu0
    %v4738 = vadd.f32 %v4565, %v4737
    %v4739 = vand.u32 %v2816, 4294901760
    %4740 = vmatmul.f32.gmra.mxu0 %v4739
    %v4741 = vpop.f32.mrf.mxu0
    %v4742 = vadd.f32 %v4573, %v4741
    %v4743 = vand.u32 %v2793, 4294901760
    %4744 = vmatmul.f32.gmra.mxu0 %v4743
    %v4745 = vpop.f32.mrf.mxu0
    %v4746 = vadd.f32 %v4581, %v4745
    %v4747 = vand.u32 %v2817, 4294901760
    %4748 = vmatmul.f32.gmra.mxu0 %v4747
    %v4749 = vpop.f32.mrf.mxu0
    %v4750 = vadd.f32 %v4589, %v4749
    %4751 = vdwg.mxu0
    %v4752 = vand.u32 %v93, 4294901760
    %v4753 = vsub.f32 %v93, %v4752
    %4754 = vmatpush.msra.mxu0 %v4753
    %v4755 = vand.u32 %v92, 4294901760
    %v4756 = vsub.f32 %v92, %v4755
    %4757 = vmatpush.msra.mxu0 %v4756
    %v4758 = vand.u32 %v91, 4294901760
    %v4759 = vsub.f32 %v91, %v4758
    %4760 = vmatpush.msra.mxu0 %v4759
    %v4761 = vand.u32 %v90, 4294901760
    %v4762 = vsub.f32 %v90, %v4761
    %4763 = vmatpush.msra.mxu0 %v4762
    %v4764 = vand.u32 %v89, 4294901760
    %v4765 = vsub.f32 %v89, %v4764
    %4766 = vmatpush.msra.mxu0 %v4765
    %v4767 = vand.u32 %v88, 4294901760
    %v4768 = vsub.f32 %v88, %v4767
    %4769 = vmatpush.msra.mxu0 %v4768
    %v4770 = vand.u32 %v87, 4294901760
    %v4771 = vsub.f32 %v87, %v4770
    %4772 = vmatpush.msra.mxu0 %v4771
    %v4773 = vand.u32 %v86, 4294901760
    %v4774 = vsub.f32 %v86, %v4773
    %4775 = vmatpush.msra.mxu0 %v4774
    %v4776 = vand.u32 %v85, 4294901760
    %v4777 = vsub.f32 %v85, %v4776
    %4778 = vmatpush.msra.mxu0 %v4777
    %v4779 = vand.u32 %v84, 4294901760
    %v4780 = vsub.f32 %v84, %v4779
    %4781 = vmatpush.msra.mxu0 %v4780
    %v4782 = vand.u32 %v83, 4294901760
    %v4783 = vsub.f32 %v83, %v4782
    %4784 = vmatpush.msra.mxu0 %v4783
    %v4785 = vand.u32 %v82, 4294901760
    %v4786 = vsub.f32 %v82, %v4785
    %4787 = vmatpush.msra.mxu0 %v4786
    %v4788 = vand.u32 %v81, 4294901760
    %v4789 = vsub.f32 %v81, %v4788
    %4790 = vmatpush.msra.mxu0 %v4789
    %v4791 = vand.u32 %v80, 4294901760
    %v4792 = vsub.f32 %v80, %v4791
    %4793 = vmatpush.msra.mxu0 %v4792
    %v4794 = vand.u32 %v79, 4294901760
    %v4795 = vsub.f32 %v79, %v4794
    %4796 = vmatpush.msra.mxu0 %v4795
    %v4797 = vand.u32 %v78, 4294901760
    %v4798 = vsub.f32 %v78, %v4797
    %4799 = vmatpush.msra.mxu0 %v4798
    %v4800 = vand.u32 %v2772, 4294901760
    %v4801 = vsub.f32 %v2772, %v4800
    %4802 = vmatmul.f32.gmra.mxu0 %v4801
    %v4803 = vpop.f32.mrf.mxu0
    %v4804 = vadd.f32 %v4690, %v4803
    %v4805 = vand.u32 %v2810, 4294901760
    %v4806 = vsub.f32 %v2810, %v4805
    %4807 = vmatmul.f32.gmra.mxu0 %v4806
    %v4808 = vpop.f32.mrf.mxu0
    %v4809 = vadd.f32 %v4694, %v4808
    %v4810 = vand.u32 %v2775, 4294901760
    %v4811 = vsub.f32 %v2775, %v4810
    %4812 = vmatmul.f32.gmra.mxu0 %v4811
    %v4813 = vpop.f32.mrf.mxu0
    %v4814 = vadd.f32 %v4698, %v4813
    %v4815 = vand.u32 %v2811, 4294901760
    %v4816 = vsub.f32 %v2811, %v4815
    %4817 = vmatmul.f32.gmra.mxu0 %v4816
    %v4818 = vpop.f32.mrf.mxu0
    %v4819 = vadd.f32 %v4702, %v4818
    %v4820 = vand.u32 %v2778, 4294901760
    %v4821 = vsub.f32 %v2778, %v4820
    %4822 = vmatmul.f32.gmra.mxu0 %v4821
    %v4823 = vpop.f32.mrf.mxu0
    %v4824 = vadd.f32 %v4706, %v4823
    %v4825 = vand.u32 %v2812, 4294901760
    %v4826 = vsub.f32 %v2812, %v4825
    %4827 = vmatmul.f32.gmra.mxu0 %v4826
    %v4828 = vpop.f32.mrf.mxu0
    %v4829 = vadd.f32 %v4710, %v4828
    %v4830 = vand.u32 %v2781, 4294901760
    %v4831 = vsub.f32 %v2781, %v4830
    %4832 = vmatmul.f32.gmra.mxu0 %v4831
    %v4833 = vpop.f32.mrf.mxu0
    %v4834 = vadd.f32 %v4714, %v4833
    %v4835 = vand.u32 %v2813, 4294901760
    %v4836 = vsub.f32 %v2813, %v4835
    %4837 = vmatmul.f32.gmra.mxu0 %v4836
    %v4838 = vpop.f32.mrf.mxu0
    %v4839 = vadd.f32 %v4718, %v4838
    %v4840 = vand.u32 %v2784, 4294901760
    %v4841 = vsub.f32 %v2784, %v4840
    %4842 = vmatmul.f32.gmra.mxu0 %v4841
    %v4843 = vpop.f32.mrf.mxu0
    %v4844 = vadd.f32 %v4722, %v4843
    %v4845 = vand.u32 %v2814, 4294901760
    %v4846 = vsub.f32 %v2814, %v4845
    %4847 = vmatmul.f32.gmra.mxu0 %v4846
    %v4848 = vpop.f32.mrf.mxu0
    %v4849 = vadd.f32 %v4726, %v4848
    %v4850 = vand.u32 %v2787, 4294901760
    %v4851 = vsub.f32 %v2787, %v4850
    %4852 = vmatmul.f32.gmra.mxu0 %v4851
    %v4853 = vpop.f32.mrf.mxu0
    %v4854 = vadd.f32 %v4730, %v4853
    %v4855 = vand.u32 %v2815, 4294901760
    %v4856 = vsub.f32 %v2815, %v4855
    %4857 = vmatmul.f32.gmra.mxu0 %v4856
    %v4858 = vpop.f32.mrf.mxu0
    %v4859 = vadd.f32 %v4734, %v4858
    %v4860 = vand.u32 %v2790, 4294901760
    %v4861 = vsub.f32 %v2790, %v4860
    %4862 = vmatmul.f32.gmra.mxu0 %v4861
    %v4863 = vpop.f32.mrf.mxu0
    %v4864 = vadd.f32 %v4738, %v4863
    %v4865 = vand.u32 %v2816, 4294901760
    %v4866 = vsub.f32 %v2816, %v4865
    %4867 = vmatmul.f32.gmra.mxu0 %v4866
    %v4868 = vpop.f32.mrf.mxu0
    %v4869 = vadd.f32 %v4742, %v4868
    %v4870 = vand.u32 %v2793, 4294901760
    %v4871 = vsub.f32 %v2793, %v4870
    %4872 = vmatmul.f32.gmra.mxu0 %v4871
    %v4873 = vpop.f32.mrf.mxu0
    %v4874 = vadd.f32 %v4746, %v4873
    %v4875 = vand.u32 %v2817, 4294901760
    %v4876 = vsub.f32 %v2817, %v4875
    %4877 = vmatmul.f32.gmra.mxu0 %v4876
    %v4878 = vpop.f32.mrf.mxu0
    %v4879 = vadd.f32 %v4750, %v4878
    %4880 = vdwg.mxu0
    %v4881 = vand.u32 %v93, 4294901760
    %4882 = vmatpush.msra.mxu0 %v4881
    %v4883 = vand.u32 %v92, 4294901760
    %4884 = vmatpush.msra.mxu0 %v4883
    %v4885 = vand.u32 %v91, 4294901760
    %4886 = vmatpush.msra.mxu0 %v4885
    %v4887 = vand.u32 %v90, 4294901760
    %4888 = vmatpush.msra.mxu0 %v4887
    %v4889 = vand.u32 %v89, 4294901760
    %4890 = vmatpush.msra.mxu0 %v4889
    %v4891 = vand.u32 %v88, 4294901760
    %4892 = vmatpush.msra.mxu0 %v4891
    %v4893 = vand.u32 %v87, 4294901760
    %4894 = vmatpush.msra.mxu0 %v4893
    %v4895 = vand.u32 %v86, 4294901760
    %4896 = vmatpush.msra.mxu0 %v4895
    %v4897 = vand.u32 %v85, 4294901760
    %4898 = vmatpush.msra.mxu0 %v4897
    %v4899 = vand.u32 %v84, 4294901760
    %4900 = vmatpush.msra.mxu0 %v4899
    %v4901 = vand.u32 %v83, 4294901760
    %4902 = vmatpush.msra.mxu0 %v4901
    %v4903 = vand.u32 %v82, 4294901760
    %4904 = vmatpush.msra.mxu0 %v4903
    %v4905 = vand.u32 %v81, 4294901760
    %4906 = vmatpush.msra.mxu0 %v4905
    %v4907 = vand.u32 %v80, 4294901760
    %4908 = vmatpush.msra.mxu0 %v4907
    %v4909 = vand.u32 %v79, 4294901760
    %4910 = vmatpush.msra.mxu0 %v4909
    %v4911 = vand.u32 %v78, 4294901760
    %4912 = vmatpush.msra.mxu0 %v4911
    %v4913 = vand.u32 %v2772, 4294901760
    %v4914 = vsub.f32 %v2772, %v4913
    %v4915 = vand.u32 %v4914, 4294901760
    %4916 = vmatmul.f32.gmra.mxu0 %v4915
    %v4917 = vpop.f32.mrf.mxu0
    %v4918 = vadd.f32 %v4804, %v4917
    %v4919 = vand.u32 %v2810, 4294901760
    %v4920 = vsub.f32 %v2810, %v4919
    %v4921 = vand.u32 %v4920, 4294901760
    %4922 = vmatmul.f32.gmra.mxu0 %v4921
    %v4923 = vpop.f32.mrf.mxu0
    %v4924 = vadd.f32 %v4809, %v4923
    %v4925 = vand.u32 %v2775, 4294901760
    %v4926 = vsub.f32 %v2775, %v4925
    %v4927 = vand.u32 %v4926, 4294901760
    %4928 = vmatmul.f32.gmra.mxu0 %v4927
    %v4929 = vpop.f32.mrf.mxu0
    %v4930 = vadd.f32 %v4814, %v4929
    %v4931 = vand.u32 %v2811, 4294901760
    %v4932 = vsub.f32 %v2811, %v4931
    %v4933 = vand.u32 %v4932, 4294901760
    %4934 = vmatmul.f32.gmra.mxu0 %v4933
    %v4935 = vpop.f32.mrf.mxu0
    %v4936 = vadd.f32 %v4819, %v4935
    %v4937 = vand.u32 %v2778, 4294901760
    %v4938 = vsub.f32 %v2778, %v4937
    %v4939 = vand.u32 %v4938, 4294901760
    %4940 = vmatmul.f32.gmra.mxu0 %v4939
    %v4941 = vpop.f32.mrf.mxu0
    %v4942 = vadd.f32 %v4824, %v4941
    %v4943 = vand.u32 %v2812, 4294901760
    %v4944 = vsub.f32 %v2812, %v4943
    %v4945 = vand.u32 %v4944, 4294901760
    %4946 = vmatmul.f32.gmra.mxu0 %v4945
    %v4947 = vpop.f32.mrf.mxu0
    %v4948 = vadd.f32 %v4829, %v4947
    %v4949 = vand.u32 %v2781, 4294901760
    %v4950 = vsub.f32 %v2781, %v4949
    %v4951 = vand.u32 %v4950, 4294901760
    %4952 = vmatmul.f32.gmra.mxu0 %v4951
    %v4953 = vpop.f32.mrf.mxu0
    %v4954 = vadd.f32 %v4834, %v4953
    %v4955 = vand.u32 %v2813, 4294901760
    %v4956 = vsub.f32 %v2813, %v4955
    %v4957 = vand.u32 %v4956, 4294901760
    %4958 = vmatmul.f32.gmra.mxu0 %v4957
    %v4959 = vpop.f32.mrf.mxu0
    %v4960 = vadd.f32 %v4839, %v4959
    %v4961 = vand.u32 %v2784, 4294901760
    %v4962 = vsub.f32 %v2784, %v4961
    %v4963 = vand.u32 %v4962, 4294901760
    %4964 = vmatmul.f32.gmra.mxu0 %v4963
    %v4965 = vpop.f32.mrf.mxu0
    %v4966 = vadd.f32 %v4844, %v4965
    %v4967 = vand.u32 %v2814, 4294901760
    %v4968 = vsub.f32 %v2814, %v4967
    %v4969 = vand.u32 %v4968, 4294901760
    %4970 = vmatmul.f32.gmra.mxu0 %v4969
    %v4971 = vpop.f32.mrf.mxu0
    %v4972 = vadd.f32 %v4849, %v4971
    %v4973 = vand.u32 %v2787, 4294901760
    %v4974 = vsub.f32 %v2787, %v4973
    %v4975 = vand.u32 %v4974, 4294901760
    %4976 = vmatmul.f32.gmra.mxu0 %v4975
    %v4977 = vpop.f32.mrf.mxu0
    %v4978 = vadd.f32 %v4854, %v4977
    %v4979 = vand.u32 %v2815, 4294901760
    %v4980 = vsub.f32 %v2815, %v4979
    %v4981 = vand.u32 %v4980, 4294901760
    %4982 = vmatmul.f32.gmra.mxu0 %v4981
    %v4983 = vpop.f32.mrf.mxu0
    %v4984 = vadd.f32 %v4859, %v4983
    %v4985 = vand.u32 %v2790, 4294901760
    %v4986 = vsub.f32 %v2790, %v4985
    %v4987 = vand.u32 %v4986, 4294901760
    %4988 = vmatmul.f32.gmra.mxu0 %v4987
    %v4989 = vpop.f32.mrf.mxu0
    %v4990 = vadd.f32 %v4864, %v4989
    %v4991 = vand.u32 %v2816, 4294901760
    %v4992 = vsub.f32 %v2816, %v4991
    %v4993 = vand.u32 %v4992, 4294901760
    %4994 = vmatmul.f32.gmra.mxu0 %v4993
    %v4995 = vpop.f32.mrf.mxu0
    %v4996 = vadd.f32 %v4869, %v4995
    %v4997 = vand.u32 %v2793, 4294901760
    %v4998 = vsub.f32 %v2793, %v4997
    %v4999 = vand.u32 %v4998, 4294901760
    %5000 = vmatmul.f32.gmra.mxu0 %v4999
    %v5001 = vpop.f32.mrf.mxu0
    %v5002 = vadd.f32 %v4874, %v5001
    %v5003 = vand.u32 %v2817, 4294901760
    %v5004 = vsub.f32 %v2817, %v5003
    %v5005 = vand.u32 %v5004, 4294901760
    %5006 = vmatmul.f32.gmra.mxu0 %v5005
    %v5007 = vpop.f32.mrf.mxu0
    %v5008 = vadd.f32 %v4879, %v5007
    %5009 = vdwg.mxu0
    %v5010 = vand.u32 %v93, 4294901760
    %v5011 = vsub.f32 %v93, %v5010
    %v5012 = vand.u32 %v5011, 4294901760
    %5013 = vmatpush.msra.mxu0 %v5012
    %v5014 = vand.u32 %v92, 4294901760
    %v5015 = vsub.f32 %v92, %v5014
    %v5016 = vand.u32 %v5015, 4294901760
    %5017 = vmatpush.msra.mxu0 %v5016
    %v5018 = vand.u32 %v91, 4294901760
    %v5019 = vsub.f32 %v91, %v5018
    %v5020 = vand.u32 %v5019, 4294901760
    %5021 = vmatpush.msra.mxu0 %v5020
    %v5022 = vand.u32 %v90, 4294901760
    %v5023 = vsub.f32 %v90, %v5022
    %v5024 = vand.u32 %v5023, 4294901760
    %5025 = vmatpush.msra.mxu0 %v5024
    %v5026 = vand.u32 %v89, 4294901760
    %v5027 = vsub.f32 %v89, %v5026
    %v5028 = vand.u32 %v5027, 4294901760
    %5029 = vmatpush.msra.mxu0 %v5028
    %v5030 = vand.u32 %v88, 4294901760
    %v5031 = vsub.f32 %v88, %v5030
    %v5032 = vand.u32 %v5031, 4294901760
    %5033 = vmatpush.msra.mxu0 %v5032
    %v5034 = vand.u32 %v87, 4294901760
    %v5035 = vsub.f32 %v87, %v5034
    %v5036 = vand.u32 %v5035, 4294901760
    %5037 = vmatpush.msra.mxu0 %v5036
    %v5038 = vand.u32 %v86, 4294901760
    %v5039 = vsub.f32 %v86, %v5038
    %v5040 = vand.u32 %v5039, 4294901760
    %5041 = vmatpush.msra.mxu0 %v5040
    %v5042 = vand.u32 %v85, 4294901760
    %v5043 = vsub.f32 %v85, %v5042
    %v5044 = vand.u32 %v5043, 4294901760
    %5045 = vmatpush.msra.mxu0 %v5044
    %v5046 = vand.u32 %v84, 4294901760
    %v5047 = vsub.f32 %v84, %v5046
    %v5048 = vand.u32 %v5047, 4294901760
    %5049 = vmatpush.msra.mxu0 %v5048
    %v5050 = vand.u32 %v83, 4294901760
    %v5051 = vsub.f32 %v83, %v5050
    %v5052 = vand.u32 %v5051, 4294901760
    %5053 = vmatpush.msra.mxu0 %v5052
    %v5054 = vand.u32 %v82, 4294901760
    %v5055 = vsub.f32 %v82, %v5054
    %v5056 = vand.u32 %v5055, 4294901760
    %5057 = vmatpush.msra.mxu0 %v5056
    %v5058 = vand.u32 %v81, 4294901760
    %v5059 = vsub.f32 %v81, %v5058
    %v5060 = vand.u32 %v5059, 4294901760
    %5061 = vmatpush.msra.mxu0 %v5060
    %v5062 = vand.u32 %v80, 4294901760
    %v5063 = vsub.f32 %v80, %v5062
    %v5064 = vand.u32 %v5063, 4294901760
    %5065 = vmatpush.msra.mxu0 %v5064
    %v5066 = vand.u32 %v79, 4294901760
    %v5067 = vsub.f32 %v79, %v5066
    %v5068 = vand.u32 %v5067, 4294901760
    %5069 = vmatpush.msra.mxu0 %v5068
    %v5070 = vand.u32 %v78, 4294901760
    %v5071 = vsub.f32 %v78, %v5070
    %v5072 = vand.u32 %v5071, 4294901760
    %5073 = vmatpush.msra.mxu0 %v5072
    %v5074 = vand.u32 %v2772, 4294901760
    %5075 = vmatmul.f32.gmra.mxu0 %v5074
    %v5076 = vpop.f32.mrf.mxu0
    %v5077 = vadd.f32 %v4918, %v5076
    %v5078 = vand.u32 %v2810, 4294901760
    %5079 = vmatmul.f32.gmra.mxu0 %v5078
    %v5080 = vpop.f32.mrf.mxu0
    %v5081 = vadd.f32 %v4924, %v5080
    %v5082 = vand.u32 %v2775, 4294901760
    %5083 = vmatmul.f32.gmra.mxu0 %v5082
    %v5084 = vpop.f32.mrf.mxu0
    %v5085 = vadd.f32 %v4930, %v5084
    %v5086 = vand.u32 %v2811, 4294901760
    %5087 = vmatmul.f32.gmra.mxu0 %v5086
    %v5088 = vpop.f32.mrf.mxu0
    %v5089 = vadd.f32 %v4936, %v5088
    %v5090 = vand.u32 %v2778, 4294901760
    %5091 = vmatmul.f32.gmra.mxu0 %v5090
    %v5092 = vpop.f32.mrf.mxu0
    %v5093 = vadd.f32 %v4942, %v5092
    %v5094 = vand.u32 %v2812, 4294901760
    %5095 = vmatmul.f32.gmra.mxu0 %v5094
    %v5096 = vpop.f32.mrf.mxu0
    %v5097 = vadd.f32 %v4948, %v5096
    %v5098 = vand.u32 %v2781, 4294901760
    %5099 = vmatmul.f32.gmra.mxu0 %v5098
    %v5100 = vpop.f32.mrf.mxu0
    %v5101 = vadd.f32 %v4954, %v5100
    %v5102 = vand.u32 %v2813, 4294901760
    %5103 = vmatmul.f32.gmra.mxu0 %v5102
    %v5104 = vpop.f32.mrf.mxu0
    %v5105 = vadd.f32 %v4960, %v5104
    %v5106 = vand.u32 %v2784, 4294901760
    %5107 = vmatmul.f32.gmra.mxu0 %v5106
    %v5108 = vpop.f32.mrf.mxu0
    %v5109 = vadd.f32 %v4966, %v5108
    %v5110 = vand.u32 %v2814, 4294901760
    %5111 = vmatmul.f32.gmra.mxu0 %v5110
    %v5112 = vpop.f32.mrf.mxu0
    %v5113 = vadd.f32 %v4972, %v5112
    %v5114 = vand.u32 %v2787, 4294901760
    %5115 = vmatmul.f32.gmra.mxu0 %v5114
    %v5116 = vpop.f32.mrf.mxu0
    %v5117 = vadd.f32 %v4978, %v5116
    %v5118 = vand.u32 %v2815, 4294901760
    %5119 = vmatmul.f32.gmra.mxu0 %v5118
    %v5120 = vpop.f32.mrf.mxu0
    %v5121 = vadd.f32 %v4984, %v5120
    %v5122 = vand.u32 %v2790, 4294901760
    %5123 = vmatmul.f32.gmra.mxu0 %v5122
    %v5124 = vpop.f32.mrf.mxu0
    %v5125 = vadd.f32 %v4990, %v5124
    %v5126 = vand.u32 %v2816, 4294901760
    %5127 = vmatmul.f32.gmra.mxu0 %v5126
    %v5128 = vpop.f32.mrf.mxu0
    %v5129 = vadd.f32 %v4996, %v5128
    %v5130 = vand.u32 %v2793, 4294901760
    %5131 = vmatmul.f32.gmra.mxu0 %v5130
    %v5132 = vpop.f32.mrf.mxu0
    %v5133 = vadd.f32 %v5002, %v5132
    %v5134 = vand.u32 %v2817, 4294901760
    %5135 = vmatmul.f32.gmra.mxu0 %v5134
    %v5136 = vpop.f32.mrf.mxu0
    %v5137 = vadd.f32 %v5008, %v5136
    %5138 = vdwg.mxu0
    %v5139 = vand.u32 %v93, 4294901760
    %5140 = vmatpush.msra.mxu0 %v5139
    %v5141 = vand.u32 %v92, 4294901760
    %5142 = vmatpush.msra.mxu0 %v5141
    %v5143 = vand.u32 %v91, 4294901760
    %5144 = vmatpush.msra.mxu0 %v5143
    %v5145 = vand.u32 %v90, 4294901760
    %5146 = vmatpush.msra.mxu0 %v5145
    %v5147 = vand.u32 %v89, 4294901760
    %5148 = vmatpush.msra.mxu0 %v5147
    %v5149 = vand.u32 %v88, 4294901760
    %5150 = vmatpush.msra.mxu0 %v5149
    %v5151 = vand.u32 %v87, 4294901760
    %5152 = vmatpush.msra.mxu0 %v5151
    %v5153 = vand.u32 %v86, 4294901760
    %5154 = vmatpush.msra.mxu0 %v5153
    %v5155 = vand.u32 %v85, 4294901760
    %5156 = vmatpush.msra.mxu0 %v5155
    %v5157 = vand.u32 %v84, 4294901760
    %5158 = vmatpush.msra.mxu0 %v5157
    %v5159 = vand.u32 %v83, 4294901760
    %5160 = vmatpush.msra.mxu0 %v5159
    %v5161 = vand.u32 %v82, 4294901760
    %5162 = vmatpush.msra.mxu0 %v5161
    %v5163 = vand.u32 %v81, 4294901760
    %5164 = vmatpush.msra.mxu0 %v5163
    %v5165 = vand.u32 %v80, 4294901760
    %5166 = vmatpush.msra.mxu0 %v5165
    %v5167 = vand.u32 %v79, 4294901760
    %5168 = vmatpush.msra.mxu0 %v5167
    %v5169 = vand.u32 %v78, 4294901760
    %5170 = vmatpush.msra.mxu0 %v5169
    %v5171 = vand.u32 %v2772, 4294901760
    %5172 = vmatmul.f32.gmra.mxu0 %v5171
    %v5173 = vpop.f32.mrf.mxu0
    %v5174 = vadd.f32 %v5077, %v5173
    %v5175 = vand.u32 %v2810, 4294901760
    %5176 = vmatmul.f32.gmra.mxu0 %v5175
    %v5177 = vpop.f32.mrf.mxu0
    %v5178 = vadd.f32 %v5081, %v5177
    %v5179 = vand.u32 %v2775, 4294901760
    %5180 = vmatmul.f32.gmra.mxu0 %v5179
    %v5181 = vpop.f32.mrf.mxu0
    %v5182 = vadd.f32 %v5085, %v5181
    %v5183 = vand.u32 %v2811, 4294901760
    %5184 = vmatmul.f32.gmra.mxu0 %v5183
    %v5185 = vpop.f32.mrf.mxu0
    %v5186 = vadd.f32 %v5089, %v5185
    %v5187 = vand.u32 %v2778, 4294901760
    %5188 = vmatmul.f32.gmra.mxu0 %v5187
    %v5189 = vpop.f32.mrf.mxu0
    %v5190 = vadd.f32 %v5093, %v5189
    %v5191 = vand.u32 %v2812, 4294901760
    %5192 = vmatmul.f32.gmra.mxu0 %v5191
    %v5193 = vpop.f32.mrf.mxu0
    %v5194 = vadd.f32 %v5097, %v5193
    %v5195 = vand.u32 %v2781, 4294901760
    %5196 = vmatmul.f32.gmra.mxu0 %v5195
    %v5197 = vpop.f32.mrf.mxu0
    %v5198 = vadd.f32 %v5101, %v5197
    %v5199 = vand.u32 %v2813, 4294901760
    %5200 = vmatmul.f32.gmra.mxu0 %v5199
    %v5201 = vpop.f32.mrf.mxu0
    %v5202 = vadd.f32 %v5105, %v5201
    %v5203 = vand.u32 %v2784, 4294901760
    %5204 = vmatmul.f32.gmra.mxu0 %v5203
    %v5205 = vpop.f32.mrf.mxu0
    %v5206 = vadd.f32 %v5109, %v5205
    %v5207 = vand.u32 %v2814, 4294901760
    %5208 = vmatmul.f32.gmra.mxu0 %v5207
    %v5209 = vpop.f32.mrf.mxu0
    %v5210 = vadd.f32 %v5113, %v5209
    %v5211 = vand.u32 %v2787, 4294901760
    %5212 = vmatmul.f32.gmra.mxu0 %v5211
    %v5213 = vpop.f32.mrf.mxu0
    %v5214 = vadd.f32 %v5117, %v5213
    %v5215 = vand.u32 %v2815, 4294901760
    %5216 = vmatmul.f32.gmra.mxu0 %v5215
    %v5217 = vpop.f32.mrf.mxu0
    %v5218 = vadd.f32 %v5121, %v5217
    %v5219 = vand.u32 %v2790, 4294901760
    %5220 = vmatmul.f32.gmra.mxu0 %v5219
    %v5221 = vpop.f32.mrf.mxu0
    %v5222 = vadd.f32 %v5125, %v5221
    %v5223 = vand.u32 %v2816, 4294901760
    %5224 = vmatmul.f32.gmra.mxu0 %v5223
    %v5225 = vpop.f32.mrf.mxu0
    %v5226 = vadd.f32 %v5129, %v5225
    %v5227 = vand.u32 %v2793, 4294901760
    %5228 = vmatmul.f32.gmra.mxu0 %v5227
    %v5229 = vpop.f32.mrf.mxu0
    %v5230 = vadd.f32 %v5133, %v5229
    %v5231 = vand.u32 %v2817, 4294901760
    %5232 = vmatmul.f32.gmra.mxu0 %v5231
    %v5233 = vpop.f32.mrf.mxu0
    %v5234 = vadd.f32 %v5137, %v5233
    %5235 = vdwg.mxu0
    %v5236 = vadd.f32 %v4368, %v5174
    %v5237 = vadd.f32 %v4372, %v5178
    %v5238 = vadd.f32 %v4376, %v5182
    %v5239 = vadd.f32 %v4380, %v5186
    %v5240 = vadd.f32 %v4384, %v5190
    %v5241 = vadd.f32 %v4388, %v5194
    %v5242 = vadd.f32 %v4392, %v5198
    %v5243 = vadd.f32 %v4396, %v5202
    %v5244 = vadd.f32 %v4400, %v5206
    %v5245 = vadd.f32 %v4404, %v5210
    %v5246 = vadd.f32 %v4408, %v5214
    %v5247 = vadd.f32 %v4412, %v5218
    %v5248 = vadd.f32 %v4416, %v5222
    %v5249 = vadd.f32 %v4420, %v5226
    %v5250 = vadd.f32 %v4424, %v5230
    %v5251 = vadd.f32 %v4428, %v5234
    %vm5252 = vcmp.gt.f32.partialorder %v5236, 0.0
    %vm5253 = vcmp.gt.f32.partialorder %v5237, 0.0
    %vm5254 = vcmp.gt.f32.partialorder %v5238, 0.0
    %vm5255 = vcmp.gt.f32.partialorder %v5239, 0.0
    %vm5256 = vcmp.gt.f32.partialorder %v5240, 0.0
    %vm5257 = vcmp.gt.f32.partialorder %v5241, 0.0
    %vm5258 = vcmp.gt.f32.partialorder %v5242, 0.0
    %vm5259 = vcmp.gt.f32.partialorder %v5243, 0.0
    %vm5260 = vcmp.gt.f32.partialorder %v5244, 0.0
    %vm5261 = vcmp.gt.f32.partialorder %v5245, 0.0
    %vm5262 = vcmp.gt.f32.partialorder %v5246, 0.0
    %vm5263 = vcmp.gt.f32.partialorder %v5247, 0.0
    %vm5264 = vcmp.gt.f32.partialorder %v5248, 0.0
    %vm5265 = vcmp.gt.f32.partialorder %v5249, 0.0
    %vm5266 = vcmp.gt.f32.partialorder %v5250, 0.0
    %vm5267 = vcmp.gt.f32.partialorder %v5251, 0.0
    %v5268 = vmul.f32 %v5236, 0.01
    %v5269 = vmul.f32 %v5237, 0.01
    %v5270 = vmul.f32 %v5238, 0.01
    %v5271 = vmul.f32 %v5239, 0.01
    %v5272 = vmul.f32 %v5240, 0.01
    %v5273 = vmul.f32 %v5241, 0.01
    %v5274 = vmul.f32 %v5242, 0.01
    %v5275 = vmul.f32 %v5243, 0.01
    %v5276 = vmul.f32 %v5244, 0.01
    %v5277 = vmul.f32 %v5245, 0.01
    %v5278 = vmul.f32 %v5246, 0.01
    %v5279 = vmul.f32 %v5247, 0.01
    %v5280 = vmul.f32 %v5248, 0.01
    %v5281 = vmul.f32 %v5249, 0.01
    %v5282 = vmul.f32 %v5250, 0.01
    %v5283 = vmul.f32 %v5251, 0.01
    %v5284 = vsel %vm5252, %v5236, %v5268
    %v5285 = vsel %vm5253, %v5237, %v5269
    %v5286 = vsel %vm5254, %v5238, %v5270
    %v5287 = vsel %vm5255, %v5239, %v5271
    %v5288 = vsel %vm5256, %v5240, %v5272
    %v5289 = vsel %vm5257, %v5241, %v5273
    %v5290 = vsel %vm5258, %v5242, %v5274
    %v5291 = vsel %vm5259, %v5243, %v5275
    %v5292 = vsel %vm5260, %v5244, %v5276
    %v5293 = vsel %vm5261, %v5245, %v5277
    %v5294 = vsel %vm5262, %v5246, %v5278
    %v5295 = vsel %vm5263, %v5247, %v5279
    %v5296 = vsel %vm5264, %v5248, %v5280
    %v5297 = vsel %vm5265, %v5249, %v5281
    %v5298 = vsel %vm5266, %v5250, %v5282
    %v5299 = vsel %vm5267, %v5251, %v5283
    %5300 = vst [vmem:[#allocation7] sm:$0xff] %v5284
    %5301 = vst [vmem:[#allocation7 + $0x8] sm:$0xff] %v5285
    %5302 = vst [vmem:[#allocation7 + $0x10] sm:$0xff] %v5286
    %5303 = vst [vmem:[#allocation7 + $0x18] sm:$0xff] %v5287
    %5304 = vst [vmem:[#allocation7 + $0x20] sm:$0xff] %v5288
    %5305 = vst [vmem:[#allocation7 + $0x28] sm:$0xff] %v5289
    %5306 = vst [vmem:[#allocation7 + $0x30] sm:$0xff] %v5290
    %5307 = vst [vmem:[#allocation7 + $0x38] sm:$0xff] %v5291
    %5308 = vst [vmem:[#allocation7 + $0x40] sm:$0xff] %v5292
    %5309 = vst [vmem:[#allocation7 + $0x48] sm:$0xff] %v5293
    %5310 = vst [vmem:[#allocation7 + $0x50] sm:$0xff] %v5294
    %5311 = vst [vmem:[#allocation7 + $0x58] sm:$0xff] %v5295
    %5312 = vst [vmem:[#allocation7 + $0x60] sm:$0xff] %v5296
    %5313 = vst [vmem:[#allocation7 + $0x68] sm:$0xff] %v5297
    %5314 = vst [vmem:[#allocation7 + $0x70] sm:$0xff] %v5298
    %5315 = vst [vmem:[#allocation7 + $0x78] sm:$0xff] %v5299
    // Predicated region
    $region18: #{tpu_custom_call.1} parent=1 // pred_check
      _
    $region19: #{tpu_custom_call.1} parent=1 // pred_check_branch
      %5317 = sbr.rel (0) target = $region21
    $region20: #{tpu_custom_call.1} parent=1 // pred_region
      %5319 = vsyncadd [#allocation4], 0
      %s5320 = sshll.u32 [#allocation7], 4
      %s5321 = int_to_ptr.vmem [resolvable:$true] %s5320
      %s5322 = sshll.u32 %s2, 4
      %s5323 = int_to_ptr.hbm [resolvable:$true] %s5322
      %5328 = dma.vmem_to_hbm [thread:$0]  %s5321, 2048, %s5323, [#allocation4], 128, 128, 8
    $region21: #{tpu_custom_call.1} parent=1 // pred_fallthru
      _
    // Predicated region
    $region22: #{tpu_custom_call.1} parent=1 // pred_check
      _
    $region23: #{tpu_custom_call.1} parent=1 // pred_check_branch
      %5330 = sbr.rel (0) target = $region25
    $region24: #{tpu_custom_call.1} parent=1 // pred_region
      %5332 = dma.done [#allocation4], 2048
    $region25: #{tpu_custom_call.1} parent=1 // pred_fallthru
      _
    %5333 = vsyncpa [#allocation3], 1
    %5334 = vsyncpa [#allocation6], 1
    %5335 = vsyncpa [#allocation4], 1

</llo_original>
